<compile_context>
chip_gen: v7x
topology: tpu7x:2x2x1
jax: 0.10.0
libtpu: 0.0.40
codegen_flags: <defaults>
</compile_context>

<pallas_src>
from functools import partial

import jax
import jax.numpy as jnp
from jax.experimental import pallas as pl
from jax.experimental.pallas import tpu as pltpu  # noqa: F401  (TPU backend assumed)

# ----------------------------- model config ---------------------------------
VOCAB = 100
HIDDEN = 32           # config.bert_hidden_size
NUM_LAYERS = 2
NUM_HEADS = 4
HEAD_DIM = HIDDEN // NUM_HEADS
INTERMEDIATE = 64
MAX_POS = 16
TYPE_VOCAB = 2

PITCH_N = 5           # config.pitch_n_labels
SPEED_N = 5           # config.speed_n_labels
ENERGY_N = 5          # config.energy_n_labels
EMOTION_N = 8         # config.emotion_n_labels
STYLE_DIM = 12        # config.style_dim (style projection output unused -> dropped)

HEAD_SPLITS = (PITCH_N, SPEED_N, ENERGY_N, EMOTION_N)
N_HEAD_OUT = sum(HEAD_SPLITS)   # 23

BATCH = 2
SEQ = 8
LN_EPS = 1e-12

# ----------------------------- packed-parameter layout -----------------------
# Weight slab: one DMA for all per-layer matrices; each starts on a 128-lane boundary.
SLAB_K = 64                        # rows = max K over {wqkv, wo, w1, w2} = INTERMEDIATE
SLAB_N = 512
QKV_OFF, WO_OFF, W1_OFF, W2_OFF = 0, 128, 256, 384

# Vector slab: one DMA for every vector / small matrix / embedding table (~92 KB f32).
VSLAB_LANES = 128
ROW_EMB_LN_G = 0
ROW_EMB_LN_B = 1
ROW_POOLER_B = 2
ROW_HEADS_B = 3
ROW_LAYER = 8                      # 8 rows / layer: bqkv, bo, ln1_g, ln1_b, b1, b2, ln2_g, ln2_b
ROW_POS = ROW_LAYER + 8 * NUM_LAYERS            # 24
ROW_TYPE = ROW_POS + MAX_POS                    # 40
ROW_PW = 48                        # 32 rows: lanes[0:32]=pooler_w, lanes[32:55]=heads_w
ROW_WORD = ROW_PW + HIDDEN                      # 80
VOCAB_PAD = 104                    # VOCAB rounded up to a sublane multiple
VSLAB_ROWS = ROW_WORD + VOCAB_PAD               # 184


# ----------------------------- fused Pallas kernel ---------------------------
def _fused_style_encoder_kernel(tok_ref, amask_ref, wslab_ref, vslab_ref, out_ref,
                                *, batch, seq):
    H, Dh, I = HIDDEN, HEAD_DIM, INTERMEDIATE
    n_tok = batch * seq

    def layernorm(z, g, b):
        # Single pass: E[z] and E[z^2] together; var = E[z^2] - mean^2 (clamped).
        mu = jnp.mean(z, axis=-1, keepdims=True)
        m2 = jnp.mean(z * z, axis=-1, keepdims=True)
        var = jnp.maximum(m2 - mu * mu, 0.0)
        return (z - mu) * jax.lax.rsqrt(var + LN_EPS) * g + b

    def vrow(r, width):
        return vslab_ref[r:r + 1, 0:width]          # (1, width) bias / LN vector

    # ---- embeddings (in-kernel; word lookup as an exact one-hot matmul) ------------
    tok = tok_ref[...]                               # (B*S, 2) int32: [word id, type id]
    ids = tok[:, 0:1]
    tids = tok[:, 1:2]

    word_tab = vslab_ref[ROW_WORD:ROW_WORD + VOCAB_PAD, 0:H]           # (104, 32)
    onehot = (jax.lax.broadcasted_iota(jnp.int32, (n_tok, VOCAB_PAD), 1) == ids
              ).astype(jnp.float32)                  # exact 0/1 -> exact row gather
    x = jnp.dot(onehot, word_tab, preferred_element_type=jnp.float32)  # (B*S, H)

    pos = vslab_ref[ROW_POS:ROW_POS + seq, 0:H]                        # (S, H)
    x = x + jnp.concatenate([pos] * batch, axis=0)

    t0 = vslab_ref[ROW_TYPE:ROW_TYPE + 1, 0:H]                         # TYPE_VOCAB == 2
    t1 = vslab_ref[ROW_TYPE + 1:ROW_TYPE + 2, 0:H]
    x = x + jnp.where(tids == 0, t0, t1)

    x = layernorm(x, vrow(ROW_EMB_LN_G, H), vrow(ROW_EMB_LN_B, H))

    # ---- additive attention mask, built in-kernel, broadcast hoisted out of loops ---
    amask = amask_ref[...].astype(jnp.float32)       # (B, S)
    mask_b = ((1.0 - amask) * -1e9)[:, None, :]      # (B, 1, S)

    # ---- transformer layers (unrolled; all weights resident in VMEM) ---------------
    for l in range(NUM_LAYERS):
        base = ROW_LAYER + 8 * l
        wqkv = wslab_ref[l, 0:H, QKV_OFF:QKV_OFF + 3 * H]   # Q columns pre-scaled
        wo = wslab_ref[l, 0:H, WO_OFF:WO_OFF + H]
        w1 = wslab_ref[l, 0:H, W1_OFF:W1_OFF + I]
        w2 = wslab_ref[l, 0:I, W2_OFF:W2_OFF + H]

        qkv = jnp.dot(x, wqkv, preferred_element_type=jnp.float32) + vrow(base + 0, 3 * H)

        # NOTE (review item "one batched attention einsum"): kept as an unrolled 4-head
        # loop. The fully batched (B,NH,S,D) form requires a 4-D leading<->sublane
        # transpose / multi-batch-dim dot_general that Mosaic does not reliably lower at
        # these tiny shapes, and the kernel is launch/DMA bound, not MXU bound.
        head_outs = []
        for h in range(NUM_HEADS):
            q = qkv[:, h * Dh:(h + 1) * Dh].reshape(batch, seq, Dh)
            k = qkv[:, H + h * Dh:H + (h + 1) * Dh].reshape(batch, seq, Dh)
            v = qkv[:, 2 * H + h * Dh:2 * H + (h + 1) * Dh].reshape(batch, seq, Dh)

            s = jnp.einsum('bqd,bkd->bqk', q, k,
                           preferred_element_type=jnp.float32)   # 1/sqrt(Dh) folded in wqkv
            s = s + mask_b
            s = s - jnp.max(s, axis=-1, keepdims=True)
            p = jnp.exp(s)
            p = p * pl.reciprocal(jnp.sum(p, axis=-1, keepdims=True), approx=True)
            o = jnp.einsum('bqk,bkd->bqd', p, v, preferred_element_type=jnp.float32)
            head_outs.append(o.reshape(n_tok, Dh))
        ctx = jnp.concatenate(head_outs, axis=-1)                 # (B*S, H)

        attn = jnp.dot(ctx, wo, preferred_element_type=jnp.float32) + vrow(base + 1, H)
        x = layernorm(x + attn, vrow(base + 2, H), vrow(base + 3, H))

        ff = jnp.dot(x, w1, preferred_element_type=jnp.float32) + vrow(base + 4, I)
        # TODO(synk): HF BERT uses exact erf-GELU; tanh approx kept for Mosaic-safe lowering.
        ff = jax.nn.gelu(ff)
        ff = jnp.dot(ff, w2, preferred_element_type=jnp.float32) + vrow(base + 5, H)
        x = layernorm(x + ff, vrow(base + 6, H), vrow(base + 7, H))

    # ---- pooler (dense + tanh on [CLS]) + fused classification heads ----------------
    cls = x.reshape(batch, seq, H)[:, 0, :]                       # (B, H), no concat
    pooler_w = vslab_ref[ROW_PW:ROW_PW + H, 0:H]
    heads_w = vslab_ref[ROW_PW:ROW_PW + H, H:H + N_HEAD_OUT]
    pooled = jnp.tanh(jnp.dot(cls, pooler_w, preferred_element_type=jnp.float32)
                      + vrow(ROW_POOLER_B, H))
    heads = (jnp.dot(pooled, heads_w, preferred_element_type=jnp.float32)
             + vrow(ROW_HEADS_B, N_HEAD_OUT))                     # dropout = identity (eval)

    # single lane-packed output: [pooled | pitch | speed | energy | emotion]
    out_ref[...] = jnp.concatenate([pooled, heads], axis=-1)


def _full_spec(shape):
    nd = len(shape)
    return pl.BlockSpec(shape, lambda: (0,) * nd)


# ----------------------------- parameter init / packing ----------------------
def _normal(key, shape, scale=0.02):
    return scale * jax.random.normal(key, shape, dtype=jnp.float32)


def init_params(key):
    """Random-init the logical weights, then pack them into the two DMA slabs."""
    keys = iter(jax.random.split(key, 64))

    def nxt():
        return next(keys)

    q_scale = 1.0 / float(HEAD_DIM) ** 0.5

    wslab = jnp.zeros((NUM_LAYERS, SLAB_K, SLAB_N), jnp.float32)
    vslab = jnp.zeros((VSLAB_ROWS, VSLAB_LANES), jnp.float32)   # all biases/betas stay 0

    # LayerNorm gammas = 1
    vslab = vslab.at[ROW_EMB_LN_G, :HIDDEN].set(1.0)

    for l in range(NUM_LAYERS):
        wq = _normal(nxt(), (HIDDEN, HIDDEN)) * q_scale          # attention scale folded in
        wk = _normal(nxt(), (HIDDEN, HIDDEN))
        wv = _normal(nxt(), (HIDDEN, HIDDEN))
        wo = _normal(nxt(), (HIDDEN, HIDDEN))
        w1 = _normal(nxt(), (HIDDEN, INTERMEDIATE))
        w2 = _normal(nxt(), (INTERMEDIATE, HIDDEN))
        wslab = wslab.at[l, :HIDDEN, QKV_OFF:QKV_OFF + 3 * HIDDEN].set(
            jnp.concatenate([wq, wk, wv], axis=1))
        wslab = wslab.at[l, :HIDDEN, WO_OFF:WO_OFF + HIDDEN].set(wo)
        wslab = wslab.at[l, :HIDDEN, W1_OFF:W1_OFF + INTERMEDIATE].set(w1)
        wslab = wslab.at[l, :INTERMEDIATE, W2_OFF:W2_OFF + HIDDEN].set(w2)

        base = ROW_LAYER + 8 * l
        vslab = vslab.at[base + 2, :HIDDEN].set(1.0)             # ln1 gamma
        vslab = vslab.at[base + 6, :HIDDEN].set(1.0)             # ln2 gamma
        # bqkv(+0), bo(+1), ln1_b(+3), b1(+4), b2(+5), ln2_b(+7) remain zero

    # embedding tables
    vslab = vslab.at[ROW_WORD:ROW_WORD + VOCAB, :HIDDEN].set(_normal(nxt(), (VOCAB, HIDDEN)))
    vslab = vslab.at[ROW_POS:ROW_POS + MAX_POS, :HIDDEN].set(_normal(nxt(), (MAX_POS, HIDDEN)))
    vslab = vslab.at[ROW_TYPE:ROW_TYPE + TYPE_VOCAB, :HIDDEN].set(
        _normal(nxt(), (TYPE_VOCAB, HIDDEN)))

    # pooler + fused classification heads [pitch | speed | energy | emotion]
    vslab = vslab.at[ROW_PW:ROW_PW + HIDDEN, :HIDDEN].set(_normal(nxt(), (HIDDEN, HIDDEN)))
    vslab = vslab.at[ROW_PW:ROW_PW + HIDDEN, HIDDEN:HIDDEN + N_HEAD_OUT].set(
        jnp.concatenate([_normal(nxt(), (HIDDEN, n)) for n in HEAD_SPLITS], axis=1))

    return {"wslab": wslab, "vslab": vslab}


# ----------------------------- forward pass -----------------------------------
def style_encoder_forward(params, input_ids, token_type_ids, attention_mask):
    B, S = input_ids.shape

    # Token ids as a (B*S, 2) column slab (reshapes are free metadata ops in XLA).
    # Embedding lookup, mask construction and the whole encoder run inside the kernel.
    tok = jnp.concatenate(
        [input_ids.reshape(B * S, 1), token_type_ids.reshape(B * S, 1)],
        axis=1).astype(jnp.int32)
    amask = attention_mask.astype(jnp.int32)

    kernel = partial(_fused_style_encoder_kernel, batch=B, seq=S)
    inputs = (tok, amask, params["wslab"], params["vslab"])
    out = pl.pallas_call(
        kernel,
        out_shape=jax.ShapeDtypeStruct((B, HIDDEN + N_HEAD_OUT), jnp.float32),
        in_specs=[_full_spec(a.shape) for a in inputs],
        out_specs=_full_spec((B, HIDDEN + N_HEAD_OUT)),
    )(*inputs)

    outs = {"pooled_output": out[:, :HIDDEN]}
    offset = HIDDEN
    for name, n in zip(("pitch_outputs", "speed_outputs",
                        "energy_outputs", "emotion_outputs"), HEAD_SPLITS):
        outs[name] = out[:, offset:offset + n]
        offset += n
    # NOTE: pred_style_embed (style_embed_proj) is computed but never returned by the
    # PyTorch forward — dropped explicitly instead of relying on DCE.
    return outs


# ----------------------------- main -------------------------------------------
if __name__ == "__main__":
    key = jax.random.PRNGKey(0)
    pkey, ikey, tkey = jax.random.split(key, 3)

    params = init_params(pkey)

    input_ids = jax.random.randint(ikey, (BATCH, SEQ), 0, VOCAB, dtype=jnp.int32)
    token_type_ids = jax.random.randint(tkey, (BATCH, SEQ), 0, TYPE_VOCAB, dtype=jnp.int32)
    attention_mask = jnp.ones((BATCH, SEQ), dtype=jnp.int32)

    res = jax.jit(style_encoder_forward)(params, input_ids, token_type_ids, attention_mask)
    jax.block_until_ready(res)

    assert res["pooled_output"].shape == (BATCH, HIDDEN)
    assert res["pitch_outputs"].shape == (BATCH, PITCH_N)
    assert res["speed_outputs"].shape == (BATCH, SPEED_N)
    assert res["energy_outputs"].shape == (BATCH, ENERGY_N)
    assert res["emotion_outputs"].shape == (BATCH, EMOTION_N)
    assert all(bool(jnp.all(jnp.isfinite(v))) for v in res.values())

    print("KERNEL_OK")
</pallas_src>

<mosaic_0001>
module attributes {stable_mosaic.version = 11 : i64} {
  func.func @_fused_style_encoder_kernel(%arg0: memref<16x2xi32, #tpu.memory_space<vmem>>, %arg1: memref<2x8xi32, #tpu.memory_space<vmem>>, %arg2: memref<2x64x512xf32, #tpu.memory_space<vmem>>, %arg3: memref<184x128xf32, #tpu.memory_space<vmem>>, %arg4: memref<2x55xf32, #tpu.memory_space<vmem>>) attributes {dimension_semantics = [], scalar_prefetch = 0 : i64, scratch_operands = 0 : i64, tpu.core_type = #tpu.core_type<tc>} {
    %c0 = arith.constant 0 : index
    %c0_0 = arith.constant 0 : index
    %0 = vector.load %arg0[%c0, %c0_0] : memref<16x2xi32, #tpu.memory_space<vmem>>, vector<16x2xi32>
    %1 = vector.extract_strided_slice %0 {offsets = [0, 0], sizes = [16, 1], strides = [1, 1]} : vector<16x2xi32> to vector<16x1xi32>
    %2 = vector.extract_strided_slice %0 {offsets = [0, 1], sizes = [16, 1], strides = [1, 1]} : vector<16x2xi32> to vector<16x1xi32>
    %c80 = arith.constant 80 : index
    %c0_1 = arith.constant 0 : index
    %3 = vector.load %arg3[%c80, %c0_1] : memref<184x128xf32, #tpu.memory_space<vmem>>, vector<104x32xf32>
    %4 = tpu.iota {dimensions = array<i32: 1>} : vector<16x104xi32>
    %5 = vector.broadcast %1 : vector<16x1xi32> to vector<16x104xi32>
    %6 = arith.cmpi eq, %4, %5 : vector<16x104xi32>
    %7 = arith.extui %6 : vector<16x104xi1> to vector<16x104xi32>
    %8 = arith.sitofp %7 : vector<16x104xi32> to vector<16x104xf32>
    %cst = arith.constant dense<0.000000e+00> : vector<16x32xf32>
    %9 = tpu.matmul %8, %3, %cst {dimension_numbers = #tpu.dot_dimension_numbers<[1], [0], [0], [1], [0, 0, 1, 1], [], []>} : vector<16x104xf32>, vector<104x32xf32>, vector<16x32xf32> -> vector<16x32xf32>
    %c24 = arith.constant 24 : index
    %c0_2 = arith.constant 0 : index
    %10 = vector.load %arg3[%c24, %c0_2] : memref<184x128xf32, #tpu.memory_space<vmem>>, vector<8x32xf32>
    %11 = tpu.concatenate %10, %10 in 0 : vector<8x32xf32>, vector<8x32xf32> -> vector<16x32xf32>
    %12 = arith.addf %9, %11 : vector<16x32xf32>
    %c40 = arith.constant 40 : index
    %c0_3 = arith.constant 0 : index
    %13 = vector.load %arg3[%c40, %c0_3] : memref<184x128xf32, #tpu.memory_space<vmem>>, vector<1x32xf32>
    %c41 = arith.constant 41 : index
    %c0_4 = arith.constant 0 : index
    %14 = vector.load %arg3[%c41, %c0_4] : memref<184x128xf32, #tpu.memory_space<vmem>>, vector<1x32xf32>
    %c0_i32 = arith.constant 0 : i32
    %15 = vector.broadcast %c0_i32 : i32 to vector<16x1xi32>
    %16 = arith.cmpi eq, %2, %15 : vector<16x1xi32>
    %17 = vector.shape_cast %16 : vector<16x1xi1> to vector<16x1xi1>
    %18 = vector.broadcast %17 : vector<16x1xi1> to vector<16x32xi1>
    %19 = vector.shape_cast %13 : vector<1x32xf32> to vector<1x32xf32>
    %20 = vector.broadcast %19 : vector<1x32xf32> to vector<16x32xf32>
    %21 = vector.shape_cast %14 : vector<1x32xf32> to vector<1x32xf32>
    %22 = vector.broadcast %21 : vector<1x32xf32> to vector<16x32xf32>
    %23 = arith.select %18, %20, %22 : vector<16x32xi1>, vector<16x32xf32>
    %24 = arith.addf %12, %23 : vector<16x32xf32>
    %c0_5 = arith.constant 0 : index
    %c0_6 = arith.constant 0 : index
    %25 = vector.load %arg3[%c0_5, %c0_6] : memref<184x128xf32, #tpu.memory_space<vmem>>, vector<1x32xf32>
    %c1 = arith.constant 1 : index
    %c0_7 = arith.constant 0 : index
    %26 = vector.load %arg3[%c1, %c0_7] : memref<184x128xf32, #tpu.memory_space<vmem>>, vector<1x32xf32>
    %cst_8 = arith.constant dense<0.000000e+00> : vector<16xf32>
    %27 = vector.multi_reduction <add>, %24, %cst_8 [1] : vector<16x32xf32> to vector<16xf32>
    %28 = vector.shape_cast %27 : vector<16xf32> to vector<16x1xf32>
    %cst_9 = arith.constant 3.200000e+01 : f32
    %29 = vector.broadcast %cst_9 : f32 to vector<16x1xf32>
    %30 = arith.divf %28, %29 : vector<16x1xf32>
    %31 = arith.mulf %24, %24 : vector<16x32xf32>
    %cst_10 = arith.constant dense<0.000000e+00> : vector<16xf32>
    %32 = vector.multi_reduction <add>, %31, %cst_10 [1] : vector<16x32xf32> to vector<16xf32>
    %33 = vector.shape_cast %32 : vector<16xf32> to vector<16x1xf32>
    %cst_11 = arith.constant 3.200000e+01 : f32
    %34 = vector.broadcast %cst_11 : f32 to vector<16x1xf32>
    %35 = arith.divf %33, %34 : vector<16x1xf32>
    %36 = arith.mulf %30, %30 : vector<16x1xf32>
    %37 = arith.subf %35, %36 : vector<16x1xf32>
    %cst_12 = arith.constant 0.000000e+00 : f32
    %38 = vector.broadcast %cst_12 : f32 to vector<16x1xf32>
    %39 = arith.maximumf %37, %38 : vector<16x1xf32>
    %40 = vector.broadcast %30 : vector<16x1xf32> to vector<16x32xf32>
    %41 = arith.subf %24, %40 : vector<16x32xf32>
    %cst_13 = arith.constant 9.99999996E-13 : f32
    %42 = vector.broadcast %cst_13 : f32 to vector<16x1xf32>
    %43 = arith.addf %39, %42 : vector<16x1xf32>
    %44 = math.rsqrt %43 : vector<16x1xf32>
    %45 = vector.broadcast %44 : vector<16x1xf32> to vector<16x32xf32>
    %46 = arith.mulf %41, %45 : vector<16x32xf32>
    %47 = vector.broadcast %25 : vector<1x32xf32> to vector<16x32xf32>
    %48 = arith.mulf %46, %47 : vector<16x32xf32>
    %49 = vector.broadcast %26 : vector<1x32xf32> to vector<16x32xf32>
    %50 = arith.addf %48, %49 : vector<16x32xf32>
    %c0_14 = arith.constant 0 : index
    %c0_15 = arith.constant 0 : index
    %51 = vector.load %arg1[%c0_14, %c0_15] : memref<2x8xi32, #tpu.memory_space<vmem>>, vector<2x8xi32>
    %52 = arith.sitofp %51 : vector<2x8xi32> to vector<2x8xf32>
    %cst_16 = arith.constant 1.000000e+00 : f32
    %53 = vector.broadcast %cst_16 : f32 to vector<2x8xf32>
    %54 = arith.subf %53, %52 : vector<2x8xf32>
    %cst_17 = arith.constant -1.000000e+09 : f32
    %55 = vector.broadcast %cst_17 : f32 to vector<2x8xf32>
    %56 = arith.mulf %54, %55 : vector<2x8xf32>
    %57 = vector.shape_cast %56 : vector<2x8xf32> to vector<2x1x8xf32>
    %c0_18 = arith.constant 0 : index
    %c0_19 = arith.constant 0 : index
    %c0_20 = arith.constant 0 : index
    %58 = vector.load %arg2[%c0_18, %c0_19, %c0_20] : memref<2x64x512xf32, #tpu.memory_space<vmem>>, vector<1x32x96xf32>
    %59 = vector.shape_cast %58 : vector<1x32x96xf32> to vector<32x96xf32>
    %c0_21 = arith.constant 0 : index
    %c0_22 = arith.constant 0 : index
    %c128 = arith.constant 128 : index
    %60 = vector.load %arg2[%c0_21, %c0_22, %c128] : memref<2x64x512xf32, #tpu.memory_space<vmem>>, vector<1x32x32xf32>
    %61 = vector.shape_cast %60 : vector<1x32x32xf32> to vector<32x32xf32>
    %c0_23 = arith.constant 0 : index
    %c0_24 = arith.constant 0 : index
    %c256 = arith.constant 256 : index
    %62 = vector.load %arg2[%c0_23, %c0_24, %c256] : memref<2x64x512xf32, #tpu.memory_space<vmem>>, vector<1x32x64xf32>
    %63 = vector.shape_cast %62 : vector<1x32x64xf32> to vector<32x64xf32>
    %c0_25 = arith.constant 0 : index
    %c0_26 = arith.constant 0 : index
    %c384 = arith.constant 384 : index
    %64 = vector.load %arg2[%c0_25, %c0_26, %c384] : memref<2x64x512xf32, #tpu.memory_space<vmem>>, vector<1x64x32xf32>
    %65 = vector.shape_cast %64 : vector<1x64x32xf32> to vector<64x32xf32>
    %cst_27 = arith.constant dense<0.000000e+00> : vector<16x96xf32>
    %66 = tpu.matmul %50, %59, %cst_27 {dimension_numbers = #tpu.dot_dimension_numbers<[1], [0], [0], [1], [0, 0, 1, 1], [], []>} : vector<16x32xf32>, vector<32x96xf32>, vector<16x96xf32> -> vector<16x96xf32>
    %c8 = arith.constant 8 : index
    %c0_28 = arith.constant 0 : index
    %67 = vector.load %arg3[%c8, %c0_28] : memref<184x128xf32, #tpu.memory_space<vmem>>, vector<1x96xf32>
    %68 = vector.broadcast %67 : vector<1x96xf32> to vector<16x96xf32>
    %69 = arith.addf %66, %68 : vector<16x96xf32>
    %70 = vector.extract_strided_slice %69 {offsets = [0, 0], sizes = [16, 8], strides = [1, 1]} : vector<16x96xf32> to vector<16x8xf32>
    %71 = vector.shape_cast %70 : vector<16x8xf32> to vector<2x8x8xf32>
    %72 = vector.extract_strided_slice %69 {offsets = [0, 32], sizes = [16, 8], strides = [1, 1]} : vector<16x96xf32> to vector<16x8xf32>
    %73 = vector.shape_cast %72 : vector<16x8xf32> to vector<2x8x8xf32>
    %74 = vector.extract_strided_slice %69 {offsets = [0, 64], sizes = [16, 8], strides = [1, 1]} : vector<16x96xf32> to vector<16x8xf32>
    %75 = vector.shape_cast %74 : vector<16x8xf32> to vector<2x8x8xf32>
    "tpu.trace_start"() <{level = 10 : i32, message = "bqd,bkd->bqk"}> : () -> ()
    %cst_29 = arith.constant dense<0.000000e+00> : vector<2x8x8xf32>
    %76 = tpu.matmul %71, %73, %cst_29 {dimension_numbers = #tpu.dot_dimension_numbers<[2], [2], [1], [1], [0, 0, 0, 1, 1, 1], [0], [0]>} : vector<2x8x8xf32>, vector<2x8x8xf32>, vector<2x8x8xf32> -> vector<2x8x8xf32>
    "tpu.trace_stop"() : () -> ()
    %77 = vector.broadcast %57 : vector<2x1x8xf32> to vector<2x8x8xf32>
    %78 = arith.addf %76, %77 : vector<2x8x8xf32>
    %cst_30 = arith.constant dense<0xFF800000> : vector<2x8xf32>
    %79 = vector.multi_reduction <maximumf>, %78, %cst_30 [2] : vector<2x8x8xf32> to vector<2x8xf32>
    %80 = vector.shape_cast %79 : vector<2x8xf32> to vector<2x8x1xf32>
    %81 = vector.broadcast %80 : vector<2x8x1xf32> to vector<2x8x8xf32>
    %82 = arith.subf %78, %81 : vector<2x8x8xf32>
    %83 = math.exp %82 : vector<2x8x8xf32>
    %cst_31 = arith.constant dense<0.000000e+00> : vector<2x8xf32>
    %84 = vector.multi_reduction <add>, %83, %cst_31 [2] : vector<2x8x8xf32> to vector<2x8xf32>
    %85 = vector.shape_cast %84 : vector<2x8xf32> to vector<2x8x1xf32>
    %86 = tpu.reciprocal %85 {approx = true} : vector<2x8x1xf32> -> vector<2x8x1xf32>
    %87 = vector.broadcast %86 : vector<2x8x1xf32> to vector<2x8x8xf32>
    %88 = arith.mulf %83, %87 : vector<2x8x8xf32>
    "tpu.trace_start"() <{level = 10 : i32, message = "bqk,bkd->bqd"}> : () -> ()
    %cst_32 = arith.constant dense<0.000000e+00> : vector<2x8x8xf32>
    %89 = tpu.matmul %88, %75, %cst_32 {dimension_numbers = #tpu.dot_dimension_numbers<[2], [1], [1], [2], [0, 0, 0, 1, 1, 2], [0], [0]>} : vector<2x8x8xf32>, vector<2x8x8xf32>, vector<2x8x8xf32> -> vector<2x8x8xf32>
    "tpu.trace_stop"() : () -> ()
    %90 = vector.shape_cast %89 : vector<2x8x8xf32> to vector<16x8xf32>
    %91 = vector.extract_strided_slice %69 {offsets = [0, 8], sizes = [16, 8], strides = [1, 1]} : vector<16x96xf32> to vector<16x8xf32>
    %92 = vector.shape_cast %91 : vector<16x8xf32> to vector<2x8x8xf32>
    %93 = vector.extract_strided_slice %69 {offsets = [0, 40], sizes = [16, 8], strides = [1, 1]} : vector<16x96xf32> to vector<16x8xf32>
    %94 = vector.shape_cast %93 : vector<16x8xf32> to vector<2x8x8xf32>
    %95 = vector.extract_strided_slice %69 {offsets = [0, 72], sizes = [16, 8], strides = [1, 1]} : vector<16x96xf32> to vector<16x8xf32>
    %96 = vector.shape_cast %95 : vector<16x8xf32> to vector<2x8x8xf32>
    "tpu.trace_start"() <{level = 10 : i32, message = "bqd,bkd->bqk"}> : () -> ()
    %cst_33 = arith.constant dense<0.000000e+00> : vector<2x8x8xf32>
    %97 = tpu.matmul %92, %94, %cst_33 {dimension_numbers = #tpu.dot_dimension_numbers<[2], [2], [1], [1], [0, 0, 0, 1, 1, 1], [0], [0]>} : vector<2x8x8xf32>, vector<2x8x8xf32>, vector<2x8x8xf32> -> vector<2x8x8xf32>
    "tpu.trace_stop"() : () -> ()
    %98 = vector.broadcast %57 : vector<2x1x8xf32> to vector<2x8x8xf32>
    %99 = arith.addf %97, %98 : vector<2x8x8xf32>
    %cst_34 = arith.constant dense<0xFF800000> : vector<2x8xf32>
    %100 = vector.multi_reduction <maximumf>, %99, %cst_34 [2] : vector<2x8x8xf32> to vector<2x8xf32>
    %101 = vector.shape_cast %100 : vector<2x8xf32> to vector<2x8x1xf32>
    %102 = vector.broadcast %101 : vector<2x8x1xf32> to vector<2x8x8xf32>
    %103 = arith.subf %99, %102 : vector<2x8x8xf32>
    %104 = math.exp %103 : vector<2x8x8xf32>
    %cst_35 = arith.constant dense<0.000000e+00> : vector<2x8xf32>
    %105 = vector.multi_reduction <add>, %104, %cst_35 [2] : vector<2x8x8xf32> to vector<2x8xf32>
    %106 = vector.shape_cast %105 : vector<2x8xf32> to vector<2x8x1xf32>
    %107 = tpu.reciprocal %106 {approx = true} : vector<2x8x1xf32> -> vector<2x8x1xf32>
    %108 = vector.broadcast %107 : vector<2x8x1xf32> to vector<2x8x8xf32>
    %109 = arith.mulf %104, %108 : vector<2x8x8xf32>
    "tpu.trace_start"() <{level = 10 : i32, message = "bqk,bkd->bqd"}> : () -> ()
    %cst_36 = arith.constant dense<0.000000e+00> : vector<2x8x8xf32>
    %110 = tpu.matmul %109, %96, %cst_36 {dimension_numbers = #tpu.dot_dimension_numbers<[2], [1], [1], [2], [0, 0, 0, 1, 1, 2], [0], [0]>} : vector<2x8x8xf32>, vector<2x8x8xf32>, vector<2x8x8xf32> -> vector<2x8x8xf32>
    "tpu.trace_stop"() : () -> ()
    %111 = vector.shape_cast %110 : vector<2x8x8xf32> to vector<16x8xf32>
    %112 = vector.extract_strided_slice %69 {offsets = [0, 16], sizes = [16, 8], strides = [1, 1]} : vector<16x96xf32> to vector<16x8xf32>
    %113 = vector.shape_cast %112 : vector<16x8xf32> to vector<2x8x8xf32>
    %114 = vector.extract_strided_slice %69 {offsets = [0, 48], sizes = [16, 8], strides = [1, 1]} : vector<16x96xf32> to vector<16x8xf32>
    %115 = vector.shape_cast %114 : vector<16x8xf32> to vector<2x8x8xf32>
    %116 = vector.extract_strided_slice %69 {offsets = [0, 80], sizes = [16, 8], strides = [1, 1]} : vector<16x96xf32> to vector<16x8xf32>
    %117 = vector.shape_cast %116 : vector<16x8xf32> to vector<2x8x8xf32>
    "tpu.trace_start"() <{level = 10 : i32, message = "bqd,bkd->bqk"}> : () -> ()
    %cst_37 = arith.constant dense<0.000000e+00> : vector<2x8x8xf32>
    %118 = tpu.matmul %113, %115, %cst_37 {dimension_numbers = #tpu.dot_dimension_numbers<[2], [2], [1], [1], [0, 0, 0, 1, 1, 1], [0], [0]>} : vector<2x8x8xf32>, vector<2x8x8xf32>, vector<2x8x8xf32> -> vector<2x8x8xf32>
    "tpu.trace_stop"() : () -> ()
    %119 = vector.broadcast %57 : vector<2x1x8xf32> to vector<2x8x8xf32>
    %120 = arith.addf %118, %119 : vector<2x8x8xf32>
    %cst_38 = arith.constant dense<0xFF800000> : vector<2x8xf32>
    %121 = vector.multi_reduction <maximumf>, %120, %cst_38 [2] : vector<2x8x8xf32> to vector<2x8xf32>
    %122 = vector.shape_cast %121 : vector<2x8xf32> to vector<2x8x1xf32>
    %123 = vector.broadcast %122 : vector<2x8x1xf32> to vector<2x8x8xf32>
    %124 = arith.subf %120, %123 : vector<2x8x8xf32>
    %125 = math.exp %124 : vector<2x8x8xf32>
    %cst_39 = arith.constant dense<0.000000e+00> : vector<2x8xf32>
    %126 = vector.multi_reduction <add>, %125, %cst_39 [2] : vector<2x8x8xf32> to vector<2x8xf32>
    %127 = vector.shape_cast %126 : vector<2x8xf32> to vector<2x8x1xf32>
    %128 = tpu.reciprocal %127 {approx = true} : vector<2x8x1xf32> -> vector<2x8x1xf32>
    %129 = vector.broadcast %128 : vector<2x8x1xf32> to vector<2x8x8xf32>
    %130 = arith.mulf %125, %129 : vector<2x8x8xf32>
    "tpu.trace_start"() <{level = 10 : i32, message = "bqk,bkd->bqd"}> : () -> ()
    %cst_40 = arith.constant dense<0.000000e+00> : vector<2x8x8xf32>
    %131 = tpu.matmul %130, %117, %cst_40 {dimension_numbers = #tpu.dot_dimension_numbers<[2], [1], [1], [2], [0, 0, 0, 1, 1, 2], [0], [0]>} : vector<2x8x8xf32>, vector<2x8x8xf32>, vector<2x8x8xf32> -> vector<2x8x8xf32>
    "tpu.trace_stop"() : () -> ()
    %132 = vector.shape_cast %131 : vector<2x8x8xf32> to vector<16x8xf32>
    %133 = vector.extract_strided_slice %69 {offsets = [0, 24], sizes = [16, 8], strides = [1, 1]} : vector<16x96xf32> to vector<16x8xf32>
    %134 = vector.shape_cast %133 : vector<16x8xf32> to vector<2x8x8xf32>
    %135 = vector.extract_strided_slice %69 {offsets = [0, 56], sizes = [16, 8], strides = [1, 1]} : vector<16x96xf32> to vector<16x8xf32>
    %136 = vector.shape_cast %135 : vector<16x8xf32> to vector<2x8x8xf32>
    %137 = vector.extract_strided_slice %69 {offsets = [0, 88], sizes = [16, 8], strides = [1, 1]} : vector<16x96xf32> to vector<16x8xf32>
    %138 = vector.shape_cast %137 : vector<16x8xf32> to vector<2x8x8xf32>
    "tpu.trace_start"() <{level = 10 : i32, message = "bqd,bkd->bqk"}> : () -> ()
    %cst_41 = arith.constant dense<0.000000e+00> : vector<2x8x8xf32>
    %139 = tpu.matmul %134, %136, %cst_41 {dimension_numbers = #tpu.dot_dimension_numbers<[2], [2], [1], [1], [0, 0, 0, 1, 1, 1], [0], [0]>} : vector<2x8x8xf32>, vector<2x8x8xf32>, vector<2x8x8xf32> -> vector<2x8x8xf32>
    "tpu.trace_stop"() : () -> ()
    %140 = vector.broadcast %57 : vector<2x1x8xf32> to vector<2x8x8xf32>
    %141 = arith.addf %139, %140 : vector<2x8x8xf32>
    %cst_42 = arith.constant dense<0xFF800000> : vector<2x8xf32>
    %142 = vector.multi_reduction <maximumf>, %141, %cst_42 [2] : vector<2x8x8xf32> to vector<2x8xf32>
    %143 = vector.shape_cast %142 : vector<2x8xf32> to vector<2x8x1xf32>
    %144 = vector.broadcast %143 : vector<2x8x1xf32> to vector<2x8x8xf32>
    %145 = arith.subf %141, %144 : vector<2x8x8xf32>
    %146 = math.exp %145 : vector<2x8x8xf32>
    %cst_43 = arith.constant dense<0.000000e+00> : vector<2x8xf32>
    %147 = vector.multi_reduction <add>, %146, %cst_43 [2] : vector<2x8x8xf32> to vector<2x8xf32>
    %148 = vector.shape_cast %147 : vector<2x8xf32> to vector<2x8x1xf32>
    %149 = tpu.reciprocal %148 {approx = true} : vector<2x8x1xf32> -> vector<2x8x1xf32>
    %150 = vector.broadcast %149 : vector<2x8x1xf32> to vector<2x8x8xf32>
    %151 = arith.mulf %146, %150 : vector<2x8x8xf32>
    "tpu.trace_start"() <{level = 10 : i32, message = "bqk,bkd->bqd"}> : () -> ()
    %cst_44 = arith.constant dense<0.000000e+00> : vector<2x8x8xf32>
    %152 = tpu.matmul %151, %138, %cst_44 {dimension_numbers = #tpu.dot_dimension_numbers<[2], [1], [1], [2], [0, 0, 0, 1, 1, 2], [0], [0]>} : vector<2x8x8xf32>, vector<2x8x8xf32>, vector<2x8x8xf32> -> vector<2x8x8xf32>
    "tpu.trace_stop"() : () -> ()
    %153 = vector.shape_cast %152 : vector<2x8x8xf32> to vector<16x8xf32>
    %154 = tpu.concatenate %90, %111, %132, %153 in 1 : vector<16x8xf32>, vector<16x8xf32>, vector<16x8xf32>, vector<16x8xf32> -> vector<16x32xf32>
    %cst_45 = arith.constant dense<0.000000e+00> : vector<16x32xf32>
    %155 = tpu.matmul %154, %61, %cst_45 {dimension_numbers = #tpu.dot_dimension_numbers<[1], [0], [0], [1], [0, 0, 1, 1], [], []>} : vector<16x32xf32>, vector<32x32xf32>, vector<16x32xf32> -> vector<16x32xf32>
    %c9 = arith.constant 9 : index
    %c0_46 = arith.constant 0 : index
    %156 = vector.load %arg3[%c9, %c0_46] : memref<184x128xf32, #tpu.memory_space<vmem>>, vector<1x32xf32>
    %157 = vector.broadcast %156 : vector<1x32xf32> to vector<16x32xf32>
    %158 = arith.addf %155, %157 : vector<16x32xf32>
    %159 = arith.addf %50, %158 : vector<16x32xf32>
    %c10 = arith.constant 10 : index
    %c0_47 = arith.constant 0 : index
    %160 = vector.load %arg3[%c10, %c0_47] : memref<184x128xf32, #tpu.memory_space<vmem>>, vector<1x32xf32>
    %c11 = arith.constant 11 : index
    %c0_48 = arith.constant 0 : index
    %161 = vector.load %arg3[%c11, %c0_48] : memref<184x128xf32, #tpu.memory_space<vmem>>, vector<1x32xf32>
    %cst_49 = arith.constant dense<0.000000e+00> : vector<16xf32>
    %162 = vector.multi_reduction <add>, %159, %cst_49 [1] : vector<16x32xf32> to vector<16xf32>
    %163 = vector.shape_cast %162 : vector<16xf32> to vector<16x1xf32>
    %cst_50 = arith.constant 3.200000e+01 : f32
    %164 = vector.broadcast %cst_50 : f32 to vector<16x1xf32>
    %165 = arith.divf %163, %164 : vector<16x1xf32>
    %166 = arith.mulf %159, %159 : vector<16x32xf32>
    %cst_51 = arith.constant dense<0.000000e+00> : vector<16xf32>
    %167 = vector.multi_reduction <add>, %166, %cst_51 [1] : vector<16x32xf32> to vector<16xf32>
    %168 = vector.shape_cast %167 : vector<16xf32> to vector<16x1xf32>
    %cst_52 = arith.constant 3.200000e+01 : f32
    %169 = vector.broadcast %cst_52 : f32 to vector<16x1xf32>
    %170 = arith.divf %168, %169 : vector<16x1xf32>
    %171 = arith.mulf %165, %165 : vector<16x1xf32>
    %172 = arith.subf %170, %171 : vector<16x1xf32>
    %cst_53 = arith.constant 0.000000e+00 : f32
    %173 = vector.broadcast %cst_53 : f32 to vector<16x1xf32>
    %174 = arith.maximumf %172, %173 : vector<16x1xf32>
    %175 = vector.broadcast %165 : vector<16x1xf32> to vector<16x32xf32>
    %176 = arith.subf %159, %175 : vector<16x32xf32>
    %cst_54 = arith.constant 9.99999996E-13 : f32
    %177 = vector.broadcast %cst_54 : f32 to vector<16x1xf32>
    %178 = arith.addf %174, %177 : vector<16x1xf32>
    %179 = math.rsqrt %178 : vector<16x1xf32>
    %180 = vector.broadcast %179 : vector<16x1xf32> to vector<16x32xf32>
    %181 = arith.mulf %176, %180 : vector<16x32xf32>
    %182 = vector.broadcast %160 : vector<1x32xf32> to vector<16x32xf32>
    %183 = arith.mulf %181, %182 : vector<16x32xf32>
    %184 = vector.broadcast %161 : vector<1x32xf32> to vector<16x32xf32>
    %185 = arith.addf %183, %184 : vector<16x32xf32>
    %cst_55 = arith.constant dense<0.000000e+00> : vector<16x64xf32>
    %186 = tpu.matmul %185, %63, %cst_55 {dimension_numbers = #tpu.dot_dimension_numbers<[1], [0], [0], [1], [0, 0, 1, 1], [], []>} : vector<16x32xf32>, vector<32x64xf32>, vector<16x64xf32> -> vector<16x64xf32>
    %c12 = arith.constant 12 : index
    %c0_56 = arith.constant 0 : index
    %187 = vector.load %arg3[%c12, %c0_56] : memref<184x128xf32, #tpu.memory_space<vmem>>, vector<1x64xf32>
    %188 = vector.broadcast %187 : vector<1x64xf32> to vector<16x64xf32>
    %189 = arith.addf %186, %188 : vector<16x64xf32>
    %190 = arith.mulf %189, %189 : vector<16x64xf32>
    %191 = arith.mulf %189, %190 : vector<16x64xf32>
    %cst_57 = arith.constant 4.471500e-02 : f32
    %192 = vector.broadcast %cst_57 : f32 to vector<16x64xf32>
    %193 = arith.mulf %192, %191 : vector<16x64xf32>
    %194 = arith.addf %189, %193 : vector<16x64xf32>
    %cst_58 = arith.constant 0.797884583 : f32
    %195 = vector.broadcast %cst_58 : f32 to vector<16x64xf32>
    %196 = arith.mulf %195, %194 : vector<16x64xf32>
    %197 = math.tanh %196 : vector<16x64xf32>
    %cst_59 = arith.constant 1.000000e+00 : f32
    %198 = vector.broadcast %cst_59 : f32 to vector<16x64xf32>
    %199 = arith.addf %198, %197 : vector<16x64xf32>
    %cst_60 = arith.constant 5.000000e-01 : f32
    %200 = vector.broadcast %cst_60 : f32 to vector<16x64xf32>
    %201 = arith.mulf %200, %199 : vector<16x64xf32>
    %202 = arith.mulf %189, %201 : vector<16x64xf32>
    %cst_61 = arith.constant dense<0.000000e+00> : vector<16x32xf32>
    %203 = tpu.matmul %202, %65, %cst_61 {dimension_numbers = #tpu.dot_dimension_numbers<[1], [0], [0], [1], [0, 0, 1, 1], [], []>} : vector<16x64xf32>, vector<64x32xf32>, vector<16x32xf32> -> vector<16x32xf32>
    %c13 = arith.constant 13 : index
    %c0_62 = arith.constant 0 : index
    %204 = vector.load %arg3[%c13, %c0_62] : memref<184x128xf32, #tpu.memory_space<vmem>>, vector<1x32xf32>
    %205 = vector.broadcast %204 : vector<1x32xf32> to vector<16x32xf32>
    %206 = arith.addf %203, %205 : vector<16x32xf32>
    %207 = arith.addf %185, %206 : vector<16x32xf32>
    %c14 = arith.constant 14 : index
    %c0_63 = arith.constant 0 : index
    %208 = vector.load %arg3[%c14, %c0_63] : memref<184x128xf32, #tpu.memory_space<vmem>>, vector<1x32xf32>
    %c15 = arith.constant 15 : index
    %c0_64 = arith.constant 0 : index
    %209 = vector.load %arg3[%c15, %c0_64] : memref<184x128xf32, #tpu.memory_space<vmem>>, vector<1x32xf32>
    %cst_65 = arith.constant dense<0.000000e+00> : vector<16xf32>
    %210 = vector.multi_reduction <add>, %207, %cst_65 [1] : vector<16x32xf32> to vector<16xf32>
    %211 = vector.shape_cast %210 : vector<16xf32> to vector<16x1xf32>
    %cst_66 = arith.constant 3.200000e+01 : f32
    %212 = vector.broadcast %cst_66 : f32 to vector<16x1xf32>
    %213 = arith.divf %211, %212 : vector<16x1xf32>
    %214 = arith.mulf %207, %207 : vector<16x32xf32>
    %cst_67 = arith.constant dense<0.000000e+00> : vector<16xf32>
    %215 = vector.multi_reduction <add>, %214, %cst_67 [1] : vector<16x32xf32> to vector<16xf32>
    %216 = vector.shape_cast %215 : vector<16xf32> to vector<16x1xf32>
    %cst_68 = arith.constant 3.200000e+01 : f32
    %217 = vector.broadcast %cst_68 : f32 to vector<16x1xf32>
    %218 = arith.divf %216, %217 : vector<16x1xf32>
    %219 = arith.mulf %213, %213 : vector<16x1xf32>
    %220 = arith.subf %218, %219 : vector<16x1xf32>
    %cst_69 = arith.constant 0.000000e+00 : f32
    %221 = vector.broadcast %cst_69 : f32 to vector<16x1xf32>
    %222 = arith.maximumf %220, %221 : vector<16x1xf32>
    %223 = vector.broadcast %213 : vector<16x1xf32> to vector<16x32xf32>
    %224 = arith.subf %207, %223 : vector<16x32xf32>
    %cst_70 = arith.constant 9.99999996E-13 : f32
    %225 = vector.broadcast %cst_70 : f32 to vector<16x1xf32>
    %226 = arith.addf %222, %225 : vector<16x1xf32>
    %227 = math.rsqrt %226 : vector<16x1xf32>
    %228 = vector.broadcast %227 : vector<16x1xf32> to vector<16x32xf32>
    %229 = arith.mulf %224, %228 : vector<16x32xf32>
    %230 = vector.broadcast %208 : vector<1x32xf32> to vector<16x32xf32>
    %231 = arith.mulf %229, %230 : vector<16x32xf32>
    %232 = vector.broadcast %209 : vector<1x32xf32> to vector<16x32xf32>
    %233 = arith.addf %231, %232 : vector<16x32xf32>
    %c1_71 = arith.constant 1 : index
    %c0_72 = arith.constant 0 : index
    %c0_73 = arith.constant 0 : index
    %234 = vector.load %arg2[%c1_71, %c0_72, %c0_73] : memref<2x64x512xf32, #tpu.memory_space<vmem>>, vector<1x32x96xf32>
    %235 = vector.shape_cast %234 : vector<1x32x96xf32> to vector<32x96xf32>
    %c1_74 = arith.constant 1 : index
    %c0_75 = arith.constant 0 : index
    %c128_76 = arith.constant 128 : index
    %236 = vector.load %arg2[%c1_74, %c0_75, %c128_76] : memref<2x64x512xf32, #tpu.memory_space<vmem>>, vector<1x32x32xf32>
    %237 = vector.shape_cast %236 : vector<1x32x32xf32> to vector<32x32xf32>
    %c1_77 = arith.constant 1 : index
    %c0_78 = arith.constant 0 : index
    %c256_79 = arith.constant 256 : index
    %238 = vector.load %arg2[%c1_77, %c0_78, %c256_79] : memref<2x64x512xf32, #tpu.memory_space<vmem>>, vector<1x32x64xf32>
    %239 = vector.shape_cast %238 : vector<1x32x64xf32> to vector<32x64xf32>
    %c1_80 = arith.constant 1 : index
    %c0_81 = arith.constant 0 : index
    %c384_82 = arith.constant 384 : index
    %240 = vector.load %arg2[%c1_80, %c0_81, %c384_82] : memref<2x64x512xf32, #tpu.memory_space<vmem>>, vector<1x64x32xf32>
    %241 = vector.shape_cast %240 : vector<1x64x32xf32> to vector<64x32xf32>
    %cst_83 = arith.constant dense<0.000000e+00> : vector<16x96xf32>
    %242 = tpu.matmul %233, %235, %cst_83 {dimension_numbers = #tpu.dot_dimension_numbers<[1], [0], [0], [1], [0, 0, 1, 1], [], []>} : vector<16x32xf32>, vector<32x96xf32>, vector<16x96xf32> -> vector<16x96xf32>
    %c16 = arith.constant 16 : index
    %c0_84 = arith.constant 0 : index
    %243 = vector.load %arg3[%c16, %c0_84] : memref<184x128xf32, #tpu.memory_space<vmem>>, vector<1x96xf32>
    %244 = vector.broadcast %243 : vector<1x96xf32> to vector<16x96xf32>
    %245 = arith.addf %242, %244 : vector<16x96xf32>
    %246 = vector.extract_strided_slice %245 {offsets = [0, 0], sizes = [16, 8], strides = [1, 1]} : vector<16x96xf32> to vector<16x8xf32>
    %247 = vector.shape_cast %246 : vector<16x8xf32> to vector<2x8x8xf32>
    %248 = vector.extract_strided_slice %245 {offsets = [0, 32], sizes = [16, 8], strides = [1, 1]} : vector<16x96xf32> to vector<16x8xf32>
    %249 = vector.shape_cast %248 : vector<16x8xf32> to vector<2x8x8xf32>
    %250 = vector.extract_strided_slice %245 {offsets = [0, 64], sizes = [16, 8], strides = [1, 1]} : vector<16x96xf32> to vector<16x8xf32>
    %251 = vector.shape_cast %250 : vector<16x8xf32> to vector<2x8x8xf32>
    "tpu.trace_start"() <{level = 10 : i32, message = "bqd,bkd->bqk"}> : () -> ()
    %cst_85 = arith.constant dense<0.000000e+00> : vector<2x8x8xf32>
    %252 = tpu.matmul %247, %249, %cst_85 {dimension_numbers = #tpu.dot_dimension_numbers<[2], [2], [1], [1], [0, 0, 0, 1, 1, 1], [0], [0]>} : vector<2x8x8xf32>, vector<2x8x8xf32>, vector<2x8x8xf32> -> vector<2x8x8xf32>
    "tpu.trace_stop"() : () -> ()
    %253 = vector.broadcast %57 : vector<2x1x8xf32> to vector<2x8x8xf32>
    %254 = arith.addf %252, %253 : vector<2x8x8xf32>
    %cst_86 = arith.constant dense<0xFF800000> : vector<2x8xf32>
    %255 = vector.multi_reduction <maximumf>, %254, %cst_86 [2] : vector<2x8x8xf32> to vector<2x8xf32>
    %256 = vector.shape_cast %255 : vector<2x8xf32> to vector<2x8x1xf32>
    %257 = vector.broadcast %256 : vector<2x8x1xf32> to vector<2x8x8xf32>
    %258 = arith.subf %254, %257 : vector<2x8x8xf32>
    %259 = math.exp %258 : vector<2x8x8xf32>
    %cst_87 = arith.constant dense<0.000000e+00> : vector<2x8xf32>
    %260 = vector.multi_reduction <add>, %259, %cst_87 [2] : vector<2x8x8xf32> to vector<2x8xf32>
    %261 = vector.shape_cast %260 : vector<2x8xf32> to vector<2x8x1xf32>
    %262 = tpu.reciprocal %261 {approx = true} : vector<2x8x1xf32> -> vector<2x8x1xf32>
    %263 = vector.broadcast %262 : vector<2x8x1xf32> to vector<2x8x8xf32>
    %264 = arith.mulf %259, %263 : vector<2x8x8xf32>
    "tpu.trace_start"() <{level = 10 : i32, message = "bqk,bkd->bqd"}> : () -> ()
    %cst_88 = arith.constant dense<0.000000e+00> : vector<2x8x8xf32>
    %265 = tpu.matmul %264, %251, %cst_88 {dimension_numbers = #tpu.dot_dimension_numbers<[2], [1], [1], [2], [0, 0, 0, 1, 1, 2], [0], [0]>} : vector<2x8x8xf32>, vector<2x8x8xf32>, vector<2x8x8xf32> -> vector<2x8x8xf32>
    "tpu.trace_stop"() : () -> ()
    %266 = vector.shape_cast %265 : vector<2x8x8xf32> to vector<16x8xf32>
    %267 = vector.extract_strided_slice %245 {offsets = [0, 8], sizes = [16, 8], strides = [1, 1]} : vector<16x96xf32> to vector<16x8xf32>
    %268 = vector.shape_cast %267 : vector<16x8xf32> to vector<2x8x8xf32>
    %269 = vector.extract_strided_slice %245 {offsets = [0, 40], sizes = [16, 8], strides = [1, 1]} : vector<16x96xf32> to vector<16x8xf32>
    %270 = vector.shape_cast %269 : vector<16x8xf32> to vector<2x8x8xf32>
    %271 = vector.extract_strided_slice %245 {offsets = [0, 72], sizes = [16, 8], strides = [1, 1]} : vector<16x96xf32> to vector<16x8xf32>
    %272 = vector.shape_cast %271 : vector<16x8xf32> to vector<2x8x8xf32>
    "tpu.trace_start"() <{level = 10 : i32, message = "bqd,bkd->bqk"}> : () -> ()
    %cst_89 = arith.constant dense<0.000000e+00> : vector<2x8x8xf32>
    %273 = tpu.matmul %268, %270, %cst_89 {dimension_numbers = #tpu.dot_dimension_numbers<[2], [2], [1], [1], [0, 0, 0, 1, 1, 1], [0], [0]>} : vector<2x8x8xf32>, vector<2x8x8xf32>, vector<2x8x8xf32> -> vector<2x8x8xf32>
    "tpu.trace_stop"() : () -> ()
    %274 = vector.broadcast %57 : vector<2x1x8xf32> to vector<2x8x8xf32>
    %275 = arith.addf %273, %274 : vector<2x8x8xf32>
    %cst_90 = arith.constant dense<0xFF800000> : vector<2x8xf32>
    %276 = vector.multi_reduction <maximumf>, %275, %cst_90 [2] : vector<2x8x8xf32> to vector<2x8xf32>
    %277 = vector.shape_cast %276 : vector<2x8xf32> to vector<2x8x1xf32>
    %278 = vector.broadcast %277 : vector<2x8x1xf32> to vector<2x8x8xf32>
    %279 = arith.subf %275, %278 : vector<2x8x8xf32>
    %280 = math.exp %279 : vector<2x8x8xf32>
    %cst_91 = arith.constant dense<0.000000e+00> : vector<2x8xf32>
    %281 = vector.multi_reduction <add>, %280, %cst_91 [2] : vector<2x8x8xf32> to vector<2x8xf32>
    %282 = vector.shape_cast %281 : vector<2x8xf32> to vector<2x8x1xf32>
    %283 = tpu.reciprocal %282 {approx = true} : vector<2x8x1xf32> -> vector<2x8x1xf32>
    %284 = vector.broadcast %283 : vector<2x8x1xf32> to vector<2x8x8xf32>
    %285 = arith.mulf %280, %284 : vector<2x8x8xf32>
    "tpu.trace_start"() <{level = 10 : i32, message = "bqk,bkd->bqd"}> : () -> ()
    %cst_92 = arith.constant dense<0.000000e+00> : vector<2x8x8xf32>
    %286 = tpu.matmul %285, %272, %cst_92 {dimension_numbers = #tpu.dot_dimension_numbers<[2], [1], [1], [2], [0, 0, 0, 1, 1, 2], [0], [0]>} : vector<2x8x8xf32>, vector<2x8x8xf32>, vector<2x8x8xf32> -> vector<2x8x8xf32>
    "tpu.trace_stop"() : () -> ()
    %287 = vector.shape_cast %286 : vector<2x8x8xf32> to vector<16x8xf32>
    %288 = vector.extract_strided_slice %245 {offsets = [0, 16], sizes = [16, 8], strides = [1, 1]} : vector<16x96xf32> to vector<16x8xf32>
    %289 = vector.shape_cast %288 : vector<16x8xf32> to vector<2x8x8xf32>
    %290 = vector.extract_strided_slice %245 {offsets = [0, 48], sizes = [16, 8], strides = [1, 1]} : vector<16x96xf32> to vector<16x8xf32>
    %291 = vector.shape_cast %290 : vector<16x8xf32> to vector<2x8x8xf32>
    %292 = vector.extract_strided_slice %245 {offsets = [0, 80], sizes = [16, 8], strides = [1, 1]} : vector<16x96xf32> to vector<16x8xf32>
    %293 = vector.shape_cast %292 : vector<16x8xf32> to vector<2x8x8xf32>
    "tpu.trace_start"() <{level = 10 : i32, message = "bqd,bkd->bqk"}> : () -> ()
    %cst_93 = arith.constant dense<0.000000e+00> : vector<2x8x8xf32>
    %294 = tpu.matmul %289, %291, %cst_93 {dimension_numbers = #tpu.dot_dimension_numbers<[2], [2], [1], [1], [0, 0, 0, 1, 1, 1], [0], [0]>} : vector<2x8x8xf32>, vector<2x8x8xf32>, vector<2x8x8xf32> -> vector<2x8x8xf32>
    "tpu.trace_stop"() : () -> ()
    %295 = vector.broadcast %57 : vector<2x1x8xf32> to vector<2x8x8xf32>
    %296 = arith.addf %294, %295 : vector<2x8x8xf32>
    %cst_94 = arith.constant dense<0xFF800000> : vector<2x8xf32>
    %297 = vector.multi_reduction <maximumf>, %296, %cst_94 [2] : vector<2x8x8xf32> to vector<2x8xf32>
    %298 = vector.shape_cast %297 : vector<2x8xf32> to vector<2x8x1xf32>
    %299 = vector.broadcast %298 : vector<2x8x1xf32> to vector<2x8x8xf32>
    %300 = arith.subf %296, %299 : vector<2x8x8xf32>
    %301 = math.exp %300 : vector<2x8x8xf32>
    %cst_95 = arith.constant dense<0.000000e+00> : vector<2x8xf32>
    %302 = vector.multi_reduction <add>, %301, %cst_95 [2] : vector<2x8x8xf32> to vector<2x8xf32>
    %303 = vector.shape_cast %302 : vector<2x8xf32> to vector<2x8x1xf32>
    %304 = tpu.reciprocal %303 {approx = true} : vector<2x8x1xf32> -> vector<2x8x1xf32>
    %305 = vector.broadcast %304 : vector<2x8x1xf32> to vector<2x8x8xf32>
    %306 = arith.mulf %301, %305 : vector<2x8x8xf32>
    "tpu.trace_start"() <{level = 10 : i32, message = "bqk,bkd->bqd"}> : () -> ()
    %cst_96 = arith.constant dense<0.000000e+00> : vector<2x8x8xf32>
    %307 = tpu.matmul %306, %293, %cst_96 {dimension_numbers = #tpu.dot_dimension_numbers<[2], [1], [1], [2], [0, 0, 0, 1, 1, 2], [0], [0]>} : vector<2x8x8xf32>, vector<2x8x8xf32>, vector<2x8x8xf32> -> vector<2x8x8xf32>
    "tpu.trace_stop"() : () -> ()
    %308 = vector.shape_cast %307 : vector<2x8x8xf32> to vector<16x8xf32>
    %309 = vector.extract_strided_slice %245 {offsets = [0, 24], sizes = [16, 8], strides = [1, 1]} : vector<16x96xf32> to vector<16x8xf32>
    %310 = vector.shape_cast %309 : vector<16x8xf32> to vector<2x8x8xf32>
    %311 = vector.extract_strided_slice %245 {offsets = [0, 56], sizes = [16, 8], strides = [1, 1]} : vector<16x96xf32> to vector<16x8xf32>
    %312 = vector.shape_cast %311 : vector<16x8xf32> to vector<2x8x8xf32>
    %313 = vector.extract_strided_slice %245 {offsets = [0, 88], sizes = [16, 8], strides = [1, 1]} : vector<16x96xf32> to vector<16x8xf32>
    %314 = vector.shape_cast %313 : vector<16x8xf32> to vector<2x8x8xf32>
    "tpu.trace_start"() <{level = 10 : i32, message = "bqd,bkd->bqk"}> : () -> ()
    %cst_97 = arith.constant dense<0.000000e+00> : vector<2x8x8xf32>
    %315 = tpu.matmul %310, %312, %cst_97 {dimension_numbers = #tpu.dot_dimension_numbers<[2], [2], [1], [1], [0, 0, 0, 1, 1, 1], [0], [0]>} : vector<2x8x8xf32>, vector<2x8x8xf32>, vector<2x8x8xf32> -> vector<2x8x8xf32>
    "tpu.trace_stop"() : () -> ()
    %316 = vector.broadcast %57 : vector<2x1x8xf32> to vector<2x8x8xf32>
    %317 = arith.addf %315, %316 : vector<2x8x8xf32>
    %cst_98 = arith.constant dense<0xFF800000> : vector<2x8xf32>
    %318 = vector.multi_reduction <maximumf>, %317, %cst_98 [2] : vector<2x8x8xf32> to vector<2x8xf32>
    %319 = vector.shape_cast %318 : vector<2x8xf32> to vector<2x8x1xf32>
    %320 = vector.broadcast %319 : vector<2x8x1xf32> to vector<2x8x8xf32>
    %321 = arith.subf %317, %320 : vector<2x8x8xf32>
    %322 = math.exp %321 : vector<2x8x8xf32>
    %cst_99 = arith.constant dense<0.000000e+00> : vector<2x8xf32>
    %323 = vector.multi_reduction <add>, %322, %cst_99 [2] : vector<2x8x8xf32> to vector<2x8xf32>
    %324 = vector.shape_cast %323 : vector<2x8xf32> to vector<2x8x1xf32>
    %325 = tpu.reciprocal %324 {approx = true} : vector<2x8x1xf32> -> vector<2x8x1xf32>
    %326 = vector.broadcast %325 : vector<2x8x1xf32> to vector<2x8x8xf32>
    %327 = arith.mulf %322, %326 : vector<2x8x8xf32>
    "tpu.trace_start"() <{level = 10 : i32, message = "bqk,bkd->bqd"}> : () -> ()
    %cst_100 = arith.constant dense<0.000000e+00> : vector<2x8x8xf32>
    %328 = tpu.matmul %327, %314, %cst_100 {dimension_numbers = #tpu.dot_dimension_numbers<[2], [1], [1], [2], [0, 0, 0, 1, 1, 2], [0], [0]>} : vector<2x8x8xf32>, vector<2x8x8xf32>, vector<2x8x8xf32> -> vector<2x8x8xf32>
    "tpu.trace_stop"() : () -> ()
    %329 = vector.shape_cast %328 : vector<2x8x8xf32> to vector<16x8xf32>
    %330 = tpu.concatenate %266, %287, %308, %329 in 1 : vector<16x8xf32>, vector<16x8xf32>, vector<16x8xf32>, vector<16x8xf32> -> vector<16x32xf32>
    %cst_101 = arith.constant dense<0.000000e+00> : vector<16x32xf32>
    %331 = tpu.matmul %330, %237, %cst_101 {dimension_numbers = #tpu.dot_dimension_numbers<[1], [0], [0], [1], [0, 0, 1, 1], [], []>} : vector<16x32xf32>, vector<32x32xf32>, vector<16x32xf32> -> vector<16x32xf32>
    %c17 = arith.constant 17 : index
    %c0_102 = arith.constant 0 : index
    %332 = vector.load %arg3[%c17, %c0_102] : memref<184x128xf32, #tpu.memory_space<vmem>>, vector<1x32xf32>
    %333 = vector.broadcast %332 : vector<1x32xf32> to vector<16x32xf32>
    %334 = arith.addf %331, %333 : vector<16x32xf32>
    %335 = arith.addf %233, %334 : vector<16x32xf32>
    %c18 = arith.constant 18 : index
    %c0_103 = arith.constant 0 : index
    %336 = vector.load %arg3[%c18, %c0_103] : memref<184x128xf32, #tpu.memory_space<vmem>>, vector<1x32xf32>
    %c19 = arith.constant 19 : index
    %c0_104 = arith.constant 0 : index
    %337 = vector.load %arg3[%c19, %c0_104] : memref<184x128xf32, #tpu.memory_space<vmem>>, vector<1x32xf32>
    %cst_105 = arith.constant dense<0.000000e+00> : vector<16xf32>
    %338 = vector.multi_reduction <add>, %335, %cst_105 [1] : vector<16x32xf32> to vector<16xf32>
    %339 = vector.shape_cast %338 : vector<16xf32> to vector<16x1xf32>
    %cst_106 = arith.constant 3.200000e+01 : f32
    %340 = vector.broadcast %cst_106 : f32 to vector<16x1xf32>
    %341 = arith.divf %339, %340 : vector<16x1xf32>
    %342 = arith.mulf %335, %335 : vector<16x32xf32>
    %cst_107 = arith.constant dense<0.000000e+00> : vector<16xf32>
    %343 = vector.multi_reduction <add>, %342, %cst_107 [1] : vector<16x32xf32> to vector<16xf32>
    %344 = vector.shape_cast %343 : vector<16xf32> to vector<16x1xf32>
    %cst_108 = arith.constant 3.200000e+01 : f32
    %345 = vector.broadcast %cst_108 : f32 to vector<16x1xf32>
    %346 = arith.divf %344, %345 : vector<16x1xf32>
    %347 = arith.mulf %341, %341 : vector<16x1xf32>
    %348 = arith.subf %346, %347 : vector<16x1xf32>
    %cst_109 = arith.constant 0.000000e+00 : f32
    %349 = vector.broadcast %cst_109 : f32 to vector<16x1xf32>
    %350 = arith.maximumf %348, %349 : vector<16x1xf32>
    %351 = vector.broadcast %341 : vector<16x1xf32> to vector<16x32xf32>
    %352 = arith.subf %335, %351 : vector<16x32xf32>
    %cst_110 = arith.constant 9.99999996E-13 : f32
    %353 = vector.broadcast %cst_110 : f32 to vector<16x1xf32>
    %354 = arith.addf %350, %353 : vector<16x1xf32>
    %355 = math.rsqrt %354 : vector<16x1xf32>
    %356 = vector.broadcast %355 : vector<16x1xf32> to vector<16x32xf32>
    %357 = arith.mulf %352, %356 : vector<16x32xf32>
    %358 = vector.broadcast %336 : vector<1x32xf32> to vector<16x32xf32>
    %359 = arith.mulf %357, %358 : vector<16x32xf32>
    %360 = vector.broadcast %337 : vector<1x32xf32> to vector<16x32xf32>
    %361 = arith.addf %359, %360 : vector<16x32xf32>
    %cst_111 = arith.constant dense<0.000000e+00> : vector<16x64xf32>
    %362 = tpu.matmul %361, %239, %cst_111 {dimension_numbers = #tpu.dot_dimension_numbers<[1], [0], [0], [1], [0, 0, 1, 1], [], []>} : vector<16x32xf32>, vector<32x64xf32>, vector<16x64xf32> -> vector<16x64xf32>
    %c20 = arith.constant 20 : index
    %c0_112 = arith.constant 0 : index
    %363 = vector.load %arg3[%c20, %c0_112] : memref<184x128xf32, #tpu.memory_space<vmem>>, vector<1x64xf32>
    %364 = vector.broadcast %363 : vector<1x64xf32> to vector<16x64xf32>
    %365 = arith.addf %362, %364 : vector<16x64xf32>
    %366 = arith.mulf %365, %365 : vector<16x64xf32>
    %367 = arith.mulf %365, %366 : vector<16x64xf32>
    %cst_113 = arith.constant 4.471500e-02 : f32
    %368 = vector.broadcast %cst_113 : f32 to vector<16x64xf32>
    %369 = arith.mulf %368, %367 : vector<16x64xf32>
    %370 = arith.addf %365, %369 : vector<16x64xf32>
    %cst_114 = arith.constant 0.797884583 : f32
    %371 = vector.broadcast %cst_114 : f32 to vector<16x64xf32>
    %372 = arith.mulf %371, %370 : vector<16x64xf32>
    %373 = math.tanh %372 : vector<16x64xf32>
    %cst_115 = arith.constant 1.000000e+00 : f32
    %374 = vector.broadcast %cst_115 : f32 to vector<16x64xf32>
    %375 = arith.addf %374, %373 : vector<16x64xf32>
    %cst_116 = arith.constant 5.000000e-01 : f32
    %376 = vector.broadcast %cst_116 : f32 to vector<16x64xf32>
    %377 = arith.mulf %376, %375 : vector<16x64xf32>
    %378 = arith.mulf %365, %377 : vector<16x64xf32>
    %cst_117 = arith.constant dense<0.000000e+00> : vector<16x32xf32>
    %379 = tpu.matmul %378, %241, %cst_117 {dimension_numbers = #tpu.dot_dimension_numbers<[1], [0], [0], [1], [0, 0, 1, 1], [], []>} : vector<16x64xf32>, vector<64x32xf32>, vector<16x32xf32> -> vector<16x32xf32>
    %c21 = arith.constant 21 : index
    %c0_118 = arith.constant 0 : index
    %380 = vector.load %arg3[%c21, %c0_118] : memref<184x128xf32, #tpu.memory_space<vmem>>, vector<1x32xf32>
    %381 = vector.broadcast %380 : vector<1x32xf32> to vector<16x32xf32>
    %382 = arith.addf %379, %381 : vector<16x32xf32>
    %383 = arith.addf %361, %382 : vector<16x32xf32>
    %c22 = arith.constant 22 : index
    %c0_119 = arith.constant 0 : index
    %384 = vector.load %arg3[%c22, %c0_119] : memref<184x128xf32, #tpu.memory_space<vmem>>, vector<1x32xf32>
    %c23 = arith.constant 23 : index
    %c0_120 = arith.constant 0 : index
    %385 = vector.load %arg3[%c23, %c0_120] : memref<184x128xf32, #tpu.memory_space<vmem>>, vector<1x32xf32>
    %cst_121 = arith.constant dense<0.000000e+00> : vector<16xf32>
    %386 = vector.multi_reduction <add>, %383, %cst_121 [1] : vector<16x32xf32> to vector<16xf32>
    %387 = vector.shape_cast %386 : vector<16xf32> to vector<16x1xf32>
    %cst_122 = arith.constant 3.200000e+01 : f32
    %388 = vector.broadcast %cst_122 : f32 to vector<16x1xf32>
    %389 = arith.divf %387, %388 : vector<16x1xf32>
    %390 = arith.mulf %383, %383 : vector<16x32xf32>
    %cst_123 = arith.constant dense<0.000000e+00> : vector<16xf32>
    %391 = vector.multi_reduction <add>, %390, %cst_123 [1] : vector<16x32xf32> to vector<16xf32>
    %392 = vector.shape_cast %391 : vector<16xf32> to vector<16x1xf32>
    %cst_124 = arith.constant 3.200000e+01 : f32
    %393 = vector.broadcast %cst_124 : f32 to vector<16x1xf32>
    %394 = arith.divf %392, %393 : vector<16x1xf32>
    %395 = arith.mulf %389, %389 : vector<16x1xf32>
    %396 = arith.subf %394, %395 : vector<16x1xf32>
    %cst_125 = arith.constant 0.000000e+00 : f32
    %397 = vector.broadcast %cst_125 : f32 to vector<16x1xf32>
    %398 = arith.maximumf %396, %397 : vector<16x1xf32>
    %399 = vector.broadcast %389 : vector<16x1xf32> to vector<16x32xf32>
    %400 = arith.subf %383, %399 : vector<16x32xf32>
    %cst_126 = arith.constant 9.99999996E-13 : f32
    %401 = vector.broadcast %cst_126 : f32 to vector<16x1xf32>
    %402 = arith.addf %398, %401 : vector<16x1xf32>
    %403 = math.rsqrt %402 : vector<16x1xf32>
    %404 = vector.broadcast %403 : vector<16x1xf32> to vector<16x32xf32>
    %405 = arith.mulf %400, %404 : vector<16x32xf32>
    %406 = vector.broadcast %384 : vector<1x32xf32> to vector<16x32xf32>
    %407 = arith.mulf %405, %406 : vector<16x32xf32>
    %408 = vector.broadcast %385 : vector<1x32xf32> to vector<16x32xf32>
    %409 = arith.addf %407, %408 : vector<16x32xf32>
    %410 = vector.shape_cast %409 : vector<16x32xf32> to vector<2x8x32xf32>
    %411 = vector.extract_strided_slice %410 {offsets = [0, 0, 0], sizes = [2, 1, 32], strides = [1, 1, 1]} : vector<2x8x32xf32> to vector<2x1x32xf32>
    %412 = vector.shape_cast %411 : vector<2x1x32xf32> to vector<2x32xf32>
    %c48 = arith.constant 48 : index
    %c0_127 = arith.constant 0 : index
    %413 = vector.load %arg3[%c48, %c0_127] : memref<184x128xf32, #tpu.memory_space<vmem>>, vector<32x32xf32>
    %c48_128 = arith.constant 48 : index
    %c32 = arith.constant 32 : index
    %414 = vector.load %arg3[%c48_128, %c32] : memref<184x128xf32, #tpu.memory_space<vmem>>, vector<32x23xf32>
    %cst_129 = arith.constant dense<0.000000e+00> : vector<2x32xf32>
    %415 = tpu.matmul %412, %413, %cst_129 {dimension_numbers = #tpu.dot_dimension_numbers<[1], [0], [0], [1], [0, 0, 1, 1], [], []>} : vector<2x32xf32>, vector<32x32xf32>, vector<2x32xf32> -> vector<2x32xf32>
    %c2 = arith.constant 2 : index
    %c0_130 = arith.constant 0 : index
    %416 = vector.load %arg3[%c2, %c0_130] : memref<184x128xf32, #tpu.memory_space<vmem>>, vector<1x32xf32>
    %417 = vector.broadcast %416 : vector<1x32xf32> to vector<2x32xf32>
    %418 = arith.addf %415, %417 : vector<2x32xf32>
    %419 = math.tanh %418 : vector<2x32xf32>
    %cst_131 = arith.constant dense<0.000000e+00> : vector<2x23xf32>
    %420 = tpu.matmul %419, %414, %cst_131 {dimension_numbers = #tpu.dot_dimension_numbers<[1], [0], [0], [1], [0, 0, 1, 1], [], []>} : vector<2x32xf32>, vector<32x23xf32>, vector<2x23xf32> -> vector<2x23xf32>
    %c3 = arith.constant 3 : index
    %c0_132 = arith.constant 0 : index
    %421 = vector.load %arg3[%c3, %c0_132] : memref<184x128xf32, #tpu.memory_space<vmem>>, vector<1x23xf32>
    %422 = vector.broadcast %421 : vector<1x23xf32> to vector<2x23xf32>
    %423 = arith.addf %420, %422 : vector<2x23xf32>
    %424 = tpu.concatenate %419, %423 in 1 : vector<2x32xf32>, vector<2x23xf32> -> vector<2x55xf32>
    %c0_133 = arith.constant 0 : index
    %c0_134 = arith.constant 0 : index
    %425 = vector.load %arg4[%c0_133, %c0_134] : memref<2x55xf32, #tpu.memory_space<vmem>>, vector<2x55xf32>
    tpu.vector_store %arg4[%c0_133, %c0_134], %424 {strides = array<i32>} : memref<2x55xf32, #tpu.memory_space<vmem>>, vector<2x55xf32>,
    return
  }
}

</mosaic_0001>

<llo_original>
// kernel: style_encoder_forward.1
$region0: #{style_encoder_forward.1}
  #allocation0 [shape = 'u32[]', space=smem, size = 0x4, offset = 0x4, fixed_abs, tag = 'smem constant byte address 0x4 - core index']
  #allocation1 [shape = 'u32[144,128]{1,0:T(1,128)}', space=vmem, size = 0x12000, scoped, tag = 'internal scratch']
  %s0 = inlined_call_operand.vmem [shape: s32[16,2], index: 0, kind: input, shape index: {}]
  %s1 = inlined_call_operand.vmem [shape: s32[2,8], index: 1, kind: input, shape index: {}]
  %s2 = inlined_call_operand.hbm [shape: f32[2,64,512], index: 2, kind: input, shape index: {}]
  %s3 = inlined_call_operand.hbm [shape: f32[184,128], index: 3, kind: input, shape index: {}]
  %s4 = inlined_call_operand.vmem [shape: f32[2,55], index: 4, kind: output, shape index: {}]
  %s5 = sld [smem:[#allocation0]]
  $region34: #{style_encoder_forward.1} parent=0
    _
  %s7 = ssub.s32 1, %s5
  %s8 = scalar_select 0, %s7, %s5
  $region1: #{style_encoder_forward.1} parent=0
    #allocation2 [shape = 'u8[262144]{0}', space=vmem, size = 0x40000, scoped, tag = 'input window, operand 2, single buffered']
    #allocation3 [shape = 's32[1]{0}', space=sflag, size = 0x4, scoped, tag = 'scoped memory for style_encoder_forward.1']
    #allocation4 [shape = 'u8[94208]{0}', space=vmem, size = 0x17000, scoped, tag = 'input window, operand 3, single buffered']
    #allocation5 [shape = 's32[1]{0}', space=sflag, size = 0x4, scoped, tag = 'scoped memory for style_encoder_forward.1']
    %9 = vsyncpa [#allocation3], 0
    %10 = vsyncpa [#allocation5], 0
    // Predicated region
    $region2: #{style_encoder_forward.1} parent=1 // pred_check
      _
    $region3: #{style_encoder_forward.1} parent=1 // pred_check_branch
      %12 = sbr.rel (0) target = $region5
    $region4: #{style_encoder_forward.1} parent=1 // pred_region
      _
    $region5: #{style_encoder_forward.1} parent=1 // pred_fallthru
      _
    // Predicated region
    $region6: #{style_encoder_forward.1} parent=1 // pred_check
      _
    $region7: #{style_encoder_forward.1} parent=1 // pred_check_branch
      %14 = sbr.rel (0) target = $region9
    $region8: #{style_encoder_forward.1} parent=1 // pred_region
      _
    $region9: #{style_encoder_forward.1} parent=1 // pred_fallthru
      _
    // Predicated region
    $region10: #{style_encoder_forward.1} parent=1 // pred_check
      _
    $region11: #{style_encoder_forward.1} parent=1 // pred_check_branch
      %16 = sbr.rel (0) target = $region13
    $region12: #{style_encoder_forward.1} parent=1 // pred_region
      %s18 = ssub.s32 8192, 8192
      %19 = vsyncadd [#allocation3], %s18
      %s20 = sshll.u32 [#allocation2], 4
      %s21 = int_to_ptr.vmem [resolvable:$true] %s20
      %26 = dma.hbm_to_vmem [thread:$0]  %s2, 8192, %s21, [#allocation3], 512, 512, 32
    $region13: #{style_encoder_forward.1} parent=1 // pred_fallthru
      _
    // Predicated region
    $region14: #{style_encoder_forward.1} parent=1 // pred_check
      _
    $region15: #{style_encoder_forward.1} parent=1 // pred_check_branch
      %28 = sbr.rel (0) target = $region17
    $region16: #{style_encoder_forward.1} parent=1 // pred_region
      %s30 = ssub.s32 2944, 2944
      %31 = vsyncadd [#allocation5], %s30
      %s32 = sshll.u32 [#allocation4], 4
      %s33 = int_to_ptr.vmem [resolvable:$true] %s32
      %38 = dma.hbm_to_vmem [thread:$0]  %s3, 2944, %s33, [#allocation5], 128, 128, 8
    $region17: #{style_encoder_forward.1} parent=1 // pred_fallthru
      _
    // Predicated region
    $region18: #{style_encoder_forward.1} parent=1 // pred_check
      _
    $region19: #{style_encoder_forward.1} parent=1 // pred_check_branch
      %40 = sbr.rel (0) target = $region21
    $region20: #{style_encoder_forward.1} parent=1 // pred_region
      %41 = dma.done [#allocation3], 8192
    $region21: #{style_encoder_forward.1} parent=1 // pred_fallthru
      _
    // Predicated region
    $region22: #{style_encoder_forward.1} parent=1 // pred_check
      _
    $region23: #{style_encoder_forward.1} parent=1 // pred_check_branch
      %43 = sbr.rel (0) target = $region25
    $region24: #{style_encoder_forward.1} parent=1 // pred_region
      %44 = dma.done [#allocation5], 2944
    $region25: #{style_encoder_forward.1} parent=1 // pred_fallthru
      _
    %v45 = vld [vmem:[%s0] sm:$0xff]
    %v46 = vld [vmem:[%s0 + $0x8] sm:$0xff]
    %v47 = vld [vmem:[#allocation4 + $0x50] sm:$0xff]
    %v48 = vld [vmem:[#allocation4 + $0x58] sm:$0xff]
    %v49 = vld [vmem:[#allocation4 + $0x60] sm:$0xff]
    %v50 = vld [vmem:[#allocation4 + $0x68] sm:$0xff]
    %v51 = vld [vmem:[#allocation4 + $0x70] sm:$0xff]
    %v52 = vld [vmem:[#allocation4 + $0x78] sm:$0xff]
    %v53 = vld [vmem:[#allocation4 + $0x80] sm:$0xff]
    %v54 = vld [vmem:[#allocation4 + $0x88] sm:$0xff]
    %v55 = vld [vmem:[#allocation4 + $0x90] sm:$0xff]
    %v56 = vld [vmem:[#allocation4 + $0x98] sm:$0xff]
    %v57 = vld [vmem:[#allocation4 + $0xa0] sm:$0xff]
    %v58 = vld [vmem:[#allocation4 + $0xa8] sm:$0xff]
    %v59 = vld [vmem:[#allocation4 + $0xb0] sm:$0xff]
    %v60 = vlaneseq
    %v61 = vand.u32 %v60, 127
    %62 = vset.pattern.permute.xlu0 0
    %63 = vperm.xlu0 %62, %v45
    %v64 = vpop.permute.xlu0 %63
    %65 = vset.pattern.permute.xlu0 0
    %66 = vperm.xlu0 %65, %v46
    %v67 = vpop.permute.xlu0 %66
    %vm68 = vcmp.eq.s32.totalorder %v61, %v64
    %vm69 = vcmp.eq.s32.totalorder %v61, %v67
    %v70 = vsel %vm68, 1, 0
    %v71 = vsel %vm69, 1, 0
    %v72 = vcvt.s32.f32 %v70
    %v73 = vcvt.s32.f32 %v71
    %v74 = vld [vmem:[#allocation4 + $0x18] sm:$0xff]
    %vm75 = vcmask 850944
    %v77 = vsel %vm75, %v72, 0
    %v80 = vsel %vm75, %v73, 0
    %82 = vmatprep.subr.mxu0 0.0
    %83 = vmatpush1.msra.mxu0 %v47
    %84 = vmatprep.subr.mxu0 0.0
    %85 = vmatpush1.msra.mxu0 %v48
    %86 = vmatprep.subr.mxu0 0.0
    %87 = vmatpush1.msra.mxu0 %v49
    %88 = vmatprep.subr.mxu0 0.0
    %89 = vmatpush1.msra.mxu0 %v50
    %90 = vmatprep.subr.mxu0 0.0
    %91 = vmatpush1.msra.mxu0 %v51
    %92 = vmatprep.subr.mxu0 0.0
    %93 = vmatpush1.msra.mxu0 %v52
    %94 = vmatprep.subr.mxu0 0.0
    %95 = vmatpush1.msra.mxu0 %v53
    %96 = vmatprep.subr.mxu0 0.0
    %97 = vmatpush1.msra.mxu0 %v54
    %98 = vmatprep.subr.mxu0 0.0
    %99 = vmatpush1.msra.mxu0 %v55
    %100 = vmatprep.subr.mxu0 0.0
    %101 = vmatpush1.msra.mxu0 %v56
    %102 = vmatprep.subr.mxu0 0.0
    %103 = vmatpush1.msra.mxu0 %v57
    %104 = vmatprep.subr.mxu0 0.0
    %105 = vmatpush1.msra.mxu0 %v58
    %106 = vmatprep.subr.mxu0 0.0
    %107 = vmatpush1.msra.mxu0 %v59
    %108 = vmatprep.subr.mxu0 0.0
    %109 = vmatpush1.msra.mxu0 0.0
    %110 = vmatprep.subr.mxu0 0.0
    %111 = vmatpush1.msra.mxu0 0.0
    %112 = vmatprep.subr.mxu0 0.0
    %113 = vmatpush1.msra.mxu0 0.0
    %114 = vmatprep.subr.mxu0 0.0
    %115 = vmatpush1.msra.mxu0 0.0
    %116 = vmatprep.subr.mxu0 0.0
    %117 = vmatpush1.msra.mxu0 0.0
    %118 = vmatprep.subr.mxu0 0.0
    %119 = vmatpush1.msra.mxu0 0.0
    %120 = vmatprep.subr.mxu0 0.0
    %121 = vmatpush1.msra.mxu0 0.0
    %122 = vmatprep.subr.mxu0 0.0
    %123 = vmatpush1.msra.mxu0 0.0
    %124 = vmatprep.subr.mxu0 0.0
    %125 = vmatpush1.msra.mxu0 0.0
    %126 = vmatprep.subr.mxu0 0.0
    %127 = vmatpush1.msra.mxu0 0.0
    %128 = vmatprep.subr.mxu0 0.0
    %129 = vmatpush1.msra.mxu0 0.0
    %130 = vmatprep.subr.mxu0 0.0
    %131 = vmatpush1.msra.mxu0 0.0
    %132 = vmatprep.subr.mxu0 0.0
    %133 = vmatpush1.msra.mxu0 0.0
    %134 = vmatprep.subr.mxu0 0.0
    %135 = vmatpush1.msra.mxu0 0.0
    %136 = vmatprep.subr.mxu0 0.0
    %137 = vmatpush1.msra.mxu0 0.0
    %138 = vmatprep.subr.mxu0 0.0
    %139 = vmatpush1.msra.mxu0 0.0
    %140 = vmatprep.subr.mxu0 0.0
    %141 = vmatpush1.msra.mxu0 0.0
    %142 = vmatprep.subr.mxu0 0.0
    %143 = vmatpush1.msra.mxu0 0.0
    %144 = vmatprep.subr.mxu0 0.0
    %145 = vmatpush1.msra.mxu0 0.0
    %146 = vmatprep.mubr.f32.mxu0 0.0
    %147 = vmatmul.mubr.f32.gmra.mrb[0].mxu0 %v77
    %v148 = vpop.f32.mrb[0].mxu0
    %v149 = vadd.f32 %v74, %v148
    %v150 = vpop.f32.mrb[0].mxu0
    %151 = vmatprep.mubr.f32.mxu0 0.0
    %152 = vmatmul.mubr.f32.gmra.mrb[0].mxu0 %v80
    %v153 = vpop.f32.mrb[0].mxu0
    %v154 = vadd.f32 %v74, %v153
    %v155 = vpop.f32.mrb[0].mxu0
    %156 = vdwg.mxu0
    %v157 = vld [vmem:[#allocation4 + $0x28] sm:$0x1]
    %v158 = vld [vmem:[#allocation4 + $0x29] sm:$0x1]
    %vm159 = vcmp.eq.s32.totalorder %v45, 0
    %vm160 = vcmp.eq.s32.totalorder %v46, 0
    %v161 = vsel %vm159, 1, 0
    %v162 = vsel %vm160, 1, 0
    %163 = vset.pattern.permute.xlu0 1
    %164 = vperm.xlu0 %163, %v161
    %v165 = vpop.permute.xlu0 %164
    %166 = vset.pattern.permute.xlu0 1
    %167 = vperm.xlu0 %166, %v162
    %v168 = vpop.permute.xlu0 %167
    %vm169 = vcmp.eq.s32.totalorder %v165, 1
    %vm170 = vcmp.eq.s32.totalorder %v168, 1
    %v171 = vlaneseq
    %v172 = vshrl.u32 %v171, 7
    %v173 = vsub.s32 0, %v172
    %v174 = vrot.slane %v157, %v173
    %v175 = vlaneseq
    %v176 = vshrl.u32 %v175, 7
    %v177 = vsub.s32 0, %v176
    %v178 = vrot.slane %v158, %v177
    %v179 = vsel %vm169, %v174, %v178
    %v180 = vsel %vm170, %v174, %v178
    %v181 = vadd.f32 %v149, %v179
    %v182 = vadd.f32 %v154, %v180
    %v183 = vld [vmem:[#allocation4] sm:$0x1]
    %v184 = vld [vmem:[#allocation4 + $0x1] sm:$0x1]
    %vm185 = vcmask 261120
    %v186 = vsel %vm185, %v181, 0.0
    %187 = vadd.xlane.f32.xlu0 %v186
    %v188 = vpop.xlane.xlu0 %187
    %v189 = vsel %vm185, %v182, 0.0
    %190 = vadd.xlane.f32.xlu0 %v189
    %v191 = vpop.xlane.xlu0 %190
    %v192 = vrcp.pop 32.0
    %v193 = vmul.f32 %v188, %v192
    %v194 = vmul.f32 %v191, %v192
    %v195 = vmul.f32 %v181, %v181
    %v196 = vmul.f32 %v182, %v182
    %v197 = vsel %vm185, %v195, 0.0
    %198 = vadd.xlane.f32.xlu0 %v197
    %v199 = vpop.xlane.xlu0 %198
    %v200 = vsel %vm185, %v196, 0.0
    %201 = vadd.xlane.f32.xlu0 %v200
    %v202 = vpop.xlane.xlu0 %201
    %v203 = vmul.f32 %v199, %v192
    %v204 = vmul.f32 %v202, %v192
    %v205 = vmul.f32 %v193, %v193
    %v206 = vmul.f32 %v194, %v194
    %v207 = vsub.f32 %v203, %v205
    %v208 = vsub.f32 %v204, %v206
    %v209 = vmax.f32 %v207, 0.0
    %v210 = vmax.f32 %v208, 0.0
    %v211 = vsub.f32 %v181, %v193
    %v212 = vsub.f32 %v182, %v194
    %v213 = vadd.f32 %v209, 1e-12
    %v214 = vadd.f32 %v210, 1e-12
    %v215 = vrsqrt.pop %v213
    %v216 = vrsqrt.pop %v214
    %v217 = vmul.f32 %v211, %v215
    %v218 = vmul.f32 %v212, %v216
    %v219 = vlaneseq
    %v220 = vshrl.u32 %v219, 7
    %v221 = vsub.s32 0, %v220
    %v222 = vrot.slane %v183, %v221
    %v223 = vmul.f32 %v217, %v222
    %v224 = vmul.f32 %v218, %v222
    %v225 = vlaneseq
    %v226 = vshrl.u32 %v225, 7
    %v227 = vsub.s32 0, %v226
    %v228 = vrot.slane %v184, %v227
    %v229 = vadd.f32 %v223, %v228
    %v230 = vadd.f32 %v224, %v228
    %v231 = vld [vmem:[%s1] sm:$0x3]
    %v232 = vcvt.s32.f32 %v231
    %v233 = vsub.f32 1.0, %v232
    %v234 = vmul.f32 %v233, -1e+09
    %v237 = vunpack.c.l.s4 1966171168
    %v238 = vunpack.c.0.s8 %v237
    %v239 = vlaneseq
    %v240 = vshrl.u32 %v239, 7
    %v241 = vsub.s32 %v238, %v240
    %v242 = vrot.slane %v234, %v241
    %v243 = vcombine.high %v242, %v242
    %v245 = vunpack.c.l.s4 1966171168
    %v246 = vunpack.c.0.s8 %v245
    %v247 = vlaneseq
    %v248 = vshrl.u32 %v247, 7
    %v249 = vsub.s32 %v246, %v248
    %v250 = vrot.slane %v242, %v249
    %v252 = vunpack.c.l.s4 1966171168
    %v253 = vunpack.c.0.s8 %v252
    %v254 = vlaneseq
    %v255 = vshrl.u32 %v254, 7
    %v256 = vsub.s32 %v253, %v255
    %v257 = vrot.slane %v243, %v256
    %v258 = vld [vmem:[#allocation2] sm:$0xff]
    %v259 = vld [vmem:[#allocation2 + $0x20] sm:$0xff]
    %v260 = vld [vmem:[#allocation2 + $0x40] sm:$0xff]
    %v261 = vld [vmem:[#allocation2 + $0x60] sm:$0xff]
    %v262 = vld [vmem:[#allocation2 + $0x8] sm:$0xff]
    %v263 = vld [vmem:[#allocation2 + $0x28] sm:$0xff]
    %v264 = vld [vmem:[#allocation2 + $0x48] sm:$0xff]
    %v265 = vld [vmem:[#allocation2 + $0x68] sm:$0xff]
    %v266 = vld [vmem:[#allocation2 + $0x10] sm:$0xff]
    %v267 = vld [vmem:[#allocation2 + $0x30] sm:$0xff]
    %v268 = vld [vmem:[#allocation2 + $0x50] sm:$0xff]
    %v269 = vld [vmem:[#allocation2 + $0x70] sm:$0xff]
    %v270 = vld [vmem:[#allocation2 + $0x18] sm:$0xff]
    %v271 = vld [vmem:[#allocation2 + $0x38] sm:$0xff]
    %v272 = vld [vmem:[#allocation2 + $0x58] sm:$0xff]
    %v273 = vld [vmem:[#allocation2 + $0x78] sm:$0xff]
    %v274 = vld [vmem:[#allocation2 + $0x98] sm:$0xff]
    %v275 = vld [vmem:[#allocation2 + $0xb8] sm:$0xff]
    %v276 = vld [vmem:[#allocation2 + $0xd8] sm:$0xff]
    %v277 = vld [vmem:[#allocation2 + $0xf8] sm:$0xff]
    %v278 = vld [vmem:[#allocation4 + $0x8] sm:$0x1]
    %v279 = vlaneseq
    %v280 = vshrl.u32 %v279, 7
    %v281 = vsub.s32 0, %v280
    %v282 = vrot.slane %v278, %v281
    %v284 = vsel %vm185, %v229, 0
    %v287 = vsel %vm185, %v230, 0
    %289 = vmatprep.subr.mxu0 0.0
    %290 = vmatpush1.msra.mxu0 %v258
    %291 = vmatprep.subr.mxu0 0.0
    %292 = vmatpush1.msra.mxu0 %v259
    %293 = vmatprep.subr.mxu0 0.0
    %294 = vmatpush1.msra.mxu0 %v260
    %295 = vmatprep.subr.mxu0 0.0
    %296 = vmatpush1.msra.mxu0 %v261
    %297 = vmatprep.subr.mxu0 0.0
    %298 = vmatpush1.msra.mxu0 0.0
    %299 = vmatprep.subr.mxu0 0.0
    %300 = vmatpush1.msra.mxu0 0.0
    %301 = vmatprep.subr.mxu0 0.0
    %302 = vmatpush1.msra.mxu0 0.0
    %303 = vmatprep.subr.mxu0 0.0
    %304 = vmatpush1.msra.mxu0 0.0
    %305 = vmatprep.subr.mxu0 0.0
    %306 = vmatpush1.msra.mxu0 0.0
    %307 = vmatprep.subr.mxu0 0.0
    %308 = vmatpush1.msra.mxu0 0.0
    %309 = vmatprep.subr.mxu0 0.0
    %310 = vmatpush1.msra.mxu0 0.0
    %311 = vmatprep.subr.mxu0 0.0
    %312 = vmatpush1.msra.mxu0 0.0
    %313 = vmatprep.subr.mxu0 0.0
    %314 = vmatpush1.msra.mxu0 0.0
    %315 = vmatprep.subr.mxu0 0.0
    %316 = vmatpush1.msra.mxu0 0.0
    %317 = vmatprep.subr.mxu0 0.0
    %318 = vmatpush1.msra.mxu0 0.0
    %319 = vmatprep.subr.mxu0 0.0
    %320 = vmatpush1.msra.mxu0 0.0
    %321 = vmatprep.subr.mxu0 0.0
    %322 = vmatpush1.msra.mxu0 0.0
    %323 = vmatprep.subr.mxu0 0.0
    %324 = vmatpush1.msra.mxu0 0.0
    %325 = vmatprep.subr.mxu0 0.0
    %326 = vmatpush1.msra.mxu0 0.0
    %327 = vmatprep.subr.mxu0 0.0
    %328 = vmatpush1.msra.mxu0 0.0
    %329 = vmatprep.subr.mxu0 0.0
    %330 = vmatpush1.msra.mxu0 0.0
    %331 = vmatprep.subr.mxu0 0.0
    %332 = vmatpush1.msra.mxu0 0.0
    %333 = vmatprep.subr.mxu0 0.0
    %334 = vmatpush1.msra.mxu0 0.0
    %335 = vmatprep.subr.mxu0 0.0
    %336 = vmatpush1.msra.mxu0 0.0
    %337 = vmatprep.subr.mxu0 0.0
    %338 = vmatpush1.msra.mxu0 0.0
    %339 = vmatprep.subr.mxu0 0.0
    %340 = vmatpush1.msra.mxu0 0.0
    %341 = vmatprep.subr.mxu0 0.0
    %342 = vmatpush1.msra.mxu0 0.0
    %343 = vmatprep.subr.mxu0 0.0
    %344 = vmatpush1.msra.mxu0 0.0
    %345 = vmatprep.subr.mxu0 0.0
    %346 = vmatpush1.msra.mxu0 0.0
    %347 = vmatprep.subr.mxu0 0.0
    %348 = vmatpush1.msra.mxu0 0.0
    %349 = vmatprep.subr.mxu0 0.0
    %350 = vmatpush1.msra.mxu0 0.0
    %351 = vmatprep.subr.mxu0 0.0
    %352 = vmatpush1.msra.mxu0 0.0
    %353 = vmatprep.mubr.f32.mxu0 0.0
    %354 = vmatmul.mubr.f32.gmra.mrb[0].mxu0 %v284
    %v355 = vpop.f32.mrb[0].mxu0
    %v356 = vadd.f32 %v282, %v355
    %v357 = vpop.f32.mrb[0].mxu0
    %358 = vmatprep.mubr.f32.mxu0 0.0
    %359 = vmatmul.mubr.f32.gmra.mrb[0].mxu0 %v287
    %v360 = vpop.f32.mrb[0].mxu0
    %v361 = vadd.f32 %v282, %v360
    %v362 = vpop.f32.mrb[0].mxu0
    %363 = vdwg.mxu0
    %v364 = vlaneseq
    %v365 = vshrl.u32 %v364, 7
    %v366 = vsub.s32 0, %v365
    %v367 = vrot.slane %v250, %v366
    %v368 = vlaneseq
    %v369 = vshrl.u32 %v368, 7
    %v370 = vsub.s32 0, %v369
    %v371 = vrot.slane %v257, %v370
    %375 = vrot.lane.b32.xlu0 %v356, 96
    %v376 = vpop.permute.xlu0 %375
    %vm377 = vcmask 64512
    %v378 = vsel %vm377, %v356, 0
    %v380 = vsel %vm377, %v376, 0
    %382 = vmatprep.subr.mxu0 0.0
    %383 = vmatpush1.xpose.msra.mxu0 %v380
    %384 = vmatprep.subr.mxu0 0.0
    %385 = vmatpush1.xpose.msra.mxu0 0.0
    %386 = vmatprep.subr.mxu0 0.0
    %387 = vmatpush1.xpose.msra.mxu0 0.0
    %388 = vmatprep.subr.mxu0 0.0
    %389 = vmatpush1.xpose.msra.mxu0 0.0
    %390 = vmatprep.subr.mxu0 0.0
    %391 = vmatpush1.xpose.msra.mxu0 0.0
    %392 = vmatprep.subr.mxu0 0.0
    %393 = vmatpush1.xpose.msra.mxu0 0.0
    %394 = vmatprep.subr.mxu0 0.0
    %395 = vmatpush1.xpose.msra.mxu0 0.0
    %396 = vmatprep.subr.mxu0 0.0
    %397 = vmatpush1.xpose.msra.mxu0 0.0
    %398 = vmatprep.subr.mxu0 0.0
    %399 = vmatpush1.xpose.msra.mxu0 0.0
    %400 = vmatprep.subr.mxu0 0.0
    %401 = vmatpush1.xpose.msra.mxu0 0.0
    %402 = vmatprep.subr.mxu0 0.0
    %403 = vmatpush1.xpose.msra.mxu0 0.0
    %404 = vmatprep.subr.mxu0 0.0
    %405 = vmatpush1.xpose.msra.mxu0 0.0
    %406 = vmatprep.subr.mxu0 0.0
    %407 = vmatpush1.xpose.msra.mxu0 0.0
    %408 = vmatprep.subr.mxu0 0.0
    %409 = vmatpush1.xpose.msra.mxu0 0.0
    %410 = vmatprep.subr.mxu0 0.0
    %411 = vmatpush1.xpose.msra.mxu0 0.0
    %412 = vmatprep.subr.mxu0 0.0
    %413 = vmatpush1.xpose.msra.mxu0 0.0
    %414 = vmatprep.subr.mxu0 0.0
    %415 = vmatpush1.xpose.msra.mxu0 0.0
    %416 = vmatprep.subr.mxu0 0.0
    %417 = vmatpush1.xpose.msra.mxu0 0.0
    %418 = vmatprep.subr.mxu0 0.0
    %419 = vmatpush1.xpose.msra.mxu0 0.0
    %420 = vmatprep.subr.mxu0 0.0
    %421 = vmatpush1.xpose.msra.mxu0 0.0
    %422 = vmatprep.subr.mxu0 0.0
    %423 = vmatpush1.xpose.msra.mxu0 0.0
    %424 = vmatprep.subr.mxu0 0.0
    %425 = vmatpush1.xpose.msra.mxu0 0.0
    %426 = vmatprep.subr.mxu0 0.0
    %427 = vmatpush1.xpose.msra.mxu0 0.0
    %428 = vmatprep.subr.mxu0 0.0
    %429 = vmatpush1.xpose.msra.mxu0 0.0
    %430 = vmatprep.subr.mxu0 0.0
    %431 = vmatpush1.xpose.msra.mxu0 0.0
    %432 = vmatprep.subr.mxu0 0.0
    %433 = vmatpush1.xpose.msra.mxu0 0.0
    %434 = vmatprep.subr.mxu0 0.0
    %435 = vmatpush1.xpose.msra.mxu0 0.0
    %436 = vmatprep.subr.mxu0 0.0
    %437 = vmatpush1.xpose.msra.mxu0 0.0
    %438 = vmatprep.subr.mxu0 0.0
    %439 = vmatpush1.xpose.msra.mxu0 0.0
    %440 = vmatprep.subr.mxu0 0.0
    %441 = vmatpush1.xpose.msra.mxu0 0.0
    %442 = vmatprep.subr.mxu0 0.0
    %443 = vmatpush1.xpose.msra.mxu0 0.0
    %444 = vmatprep.subr.mxu0 0.0
    %445 = vmatpush1.xpose.msra.mxu0 0.0
    %446 = vmatprep.mubr.f32.mxu0 0.0
    %447 = vmatmul.mubr.f32.gmra.mrb[0].mxu0 %v378
    %v448 = vpop.f32.mrb[0].mxu0
    %v449 = vadd.f32 %v367, %v448
    %v450 = vpop.f32.mrb[0].mxu0
    %451 = vdwg.mxu0
    %453 = vrot.lane.b32.xlu0 %v361, 96
    %v454 = vpop.permute.xlu0 %453
    %v455 = vsel %vm377, %v361, 0
    %v457 = vsel %vm377, %v454, 0
    %459 = vmatprep.subr.mxu0 0.0
    %460 = vmatpush1.xpose.msra.mxu0 %v457
    %461 = vmatprep.subr.mxu0 0.0
    %462 = vmatpush1.xpose.msra.mxu0 0.0
    %463 = vmatprep.subr.mxu0 0.0
    %464 = vmatpush1.xpose.msra.mxu0 0.0
    %465 = vmatprep.subr.mxu0 0.0
    %466 = vmatpush1.xpose.msra.mxu0 0.0
    %467 = vmatprep.subr.mxu0 0.0
    %468 = vmatpush1.xpose.msra.mxu0 0.0
    %469 = vmatprep.subr.mxu0 0.0
    %470 = vmatpush1.xpose.msra.mxu0 0.0
    %471 = vmatprep.subr.mxu0 0.0
    %472 = vmatpush1.xpose.msra.mxu0 0.0
    %473 = vmatprep.subr.mxu0 0.0
    %474 = vmatpush1.xpose.msra.mxu0 0.0
    %475 = vmatprep.subr.mxu0 0.0
    %476 = vmatpush1.xpose.msra.mxu0 0.0
    %477 = vmatprep.subr.mxu0 0.0
    %478 = vmatpush1.xpose.msra.mxu0 0.0
    %479 = vmatprep.subr.mxu0 0.0
    %480 = vmatpush1.xpose.msra.mxu0 0.0
    %481 = vmatprep.subr.mxu0 0.0
    %482 = vmatpush1.xpose.msra.mxu0 0.0
    %483 = vmatprep.subr.mxu0 0.0
    %484 = vmatpush1.xpose.msra.mxu0 0.0
    %485 = vmatprep.subr.mxu0 0.0
    %486 = vmatpush1.xpose.msra.mxu0 0.0
    %487 = vmatprep.subr.mxu0 0.0
    %488 = vmatpush1.xpose.msra.mxu0 0.0
    %489 = vmatprep.subr.mxu0 0.0
    %490 = vmatpush1.xpose.msra.mxu0 0.0
    %491 = vmatprep.subr.mxu0 0.0
    %492 = vmatpush1.xpose.msra.mxu0 0.0
    %493 = vmatprep.subr.mxu0 0.0
    %494 = vmatpush1.xpose.msra.mxu0 0.0
    %495 = vmatprep.subr.mxu0 0.0
    %496 = vmatpush1.xpose.msra.mxu0 0.0
    %497 = vmatprep.subr.mxu0 0.0
    %498 = vmatpush1.xpose.msra.mxu0 0.0
    %499 = vmatprep.subr.mxu0 0.0
    %500 = vmatpush1.xpose.msra.mxu0 0.0
    %501 = vmatprep.subr.mxu0 0.0
    %502 = vmatpush1.xpose.msra.mxu0 0.0
    %503 = vmatprep.subr.mxu0 0.0
    %504 = vmatpush1.xpose.msra.mxu0 0.0
    %505 = vmatprep.subr.mxu0 0.0
    %506 = vmatpush1.xpose.msra.mxu0 0.0
    %507 = vmatprep.subr.mxu0 0.0
    %508 = vmatpush1.xpose.msra.mxu0 0.0
    %509 = vmatprep.subr.mxu0 0.0
    %510 = vmatpush1.xpose.msra.mxu0 0.0
    %511 = vmatprep.subr.mxu0 0.0
    %512 = vmatpush1.xpose.msra.mxu0 0.0
    %513 = vmatprep.subr.mxu0 0.0
    %514 = vmatpush1.xpose.msra.mxu0 0.0
    %515 = vmatprep.subr.mxu0 0.0
    %516 = vmatpush1.xpose.msra.mxu0 0.0
    %517 = vmatprep.subr.mxu0 0.0
    %518 = vmatpush1.xpose.msra.mxu0 0.0
    %519 = vmatprep.subr.mxu0 0.0
    %520 = vmatpush1.xpose.msra.mxu0 0.0
    %521 = vmatprep.subr.mxu0 0.0
    %522 = vmatpush1.xpose.msra.mxu0 0.0
    %523 = vmatprep.mubr.f32.mxu0 0.0
    %524 = vmatmul.mubr.f32.gmra.mrb[0].mxu0 %v455
    %v525 = vpop.f32.mrb[0].mxu0
    %v526 = vadd.f32 %v371, %v525
    %v527 = vpop.f32.mrb[0].mxu0
    %528 = vdwg.mxu0
    %v529 = vsel %vm377, %v449, -inf
    %530 = vmax.xlane.f32.xlu0 %v529
    %v531 = vpop.xlane.xlu0 %530
    %v532 = vsel %vm377, %v526, -inf
    %533 = vmax.xlane.f32.xlu0 %v532
    %v534 = vpop.xlane.xlu0 %533
    %v535 = vsub.f32 %v449, %v531
    %v536 = vsub.f32 %v526, %v534
    %v537 = vmul.f32 %v535, 1.442695
    %v538 = vpow.pop %v537
    %v539 = vmul.f32 %v536, 1.442695
    %v540 = vpow.pop %v539
    %v541 = vsel %vm377, %v538, 0.0
    %542 = vadd.xlane.f32.xlu0 %v541
    %v543 = vpop.xlane.xlu0 %542
    %v544 = vsel %vm377, %v540, 0.0
    %545 = vadd.xlane.f32.xlu0 %v544
    %v546 = vpop.xlane.xlu0 %545
    %v547 = vrcp.pop %v543
    %v548 = vrcp.pop %v546
    %v549 = vmul.f32 %v538, %v547
    %v550 = vmul.f32 %v540, %v548
    %551 = vrot.lane.b32.xlu0 %v356, 64
    %v552 = vpop.permute.xlu0 %551
    %v555 = vsel %vm377, %v549, 0
    %557 = vmatprep.subr.mxu0 0.0
    %558 = vmatpush1.msra.mxu0 %v552
    %559 = vmatprep.subr.mxu0 0.0
    %560 = vmatpush1.msra.mxu0 0.0
    %561 = vmatprep.subr.mxu0 0.0
    %562 = vmatpush1.msra.mxu0 0.0
    %563 = vmatprep.subr.mxu0 0.0
    %564 = vmatpush1.msra.mxu0 0.0
    %565 = vmatprep.subr.mxu0 0.0
    %566 = vmatpush1.msra.mxu0 0.0
    %567 = vmatprep.subr.mxu0 0.0
    %568 = vmatpush1.msra.mxu0 0.0
    %569 = vmatprep.subr.mxu0 0.0
    %570 = vmatpush1.msra.mxu0 0.0
    %571 = vmatprep.subr.mxu0 0.0
    %572 = vmatpush1.msra.mxu0 0.0
    %573 = vmatprep.subr.mxu0 0.0
    %574 = vmatpush1.msra.mxu0 0.0
    %575 = vmatprep.subr.mxu0 0.0
    %576 = vmatpush1.msra.mxu0 0.0
    %577 = vmatprep.subr.mxu0 0.0
    %578 = vmatpush1.msra.mxu0 0.0
    %579 = vmatprep.subr.mxu0 0.0
    %580 = vmatpush1.msra.mxu0 0.0
    %581 = vmatprep.subr.mxu0 0.0
    %582 = vmatpush1.msra.mxu0 0.0
    %583 = vmatprep.subr.mxu0 0.0
    %584 = vmatpush1.msra.mxu0 0.0
    %585 = vmatprep.subr.mxu0 0.0
    %586 = vmatpush1.msra.mxu0 0.0
    %587 = vmatprep.subr.mxu0 0.0
    %588 = vmatpush1.msra.mxu0 0.0
    %589 = vmatprep.subr.mxu0 0.0
    %590 = vmatpush1.msra.mxu0 0.0
    %591 = vmatprep.subr.mxu0 0.0
    %592 = vmatpush1.msra.mxu0 0.0
    %593 = vmatprep.subr.mxu0 0.0
    %594 = vmatpush1.msra.mxu0 0.0
    %595 = vmatprep.subr.mxu0 0.0
    %596 = vmatpush1.msra.mxu0 0.0
    %597 = vmatprep.subr.mxu0 0.0
    %598 = vmatpush1.msra.mxu0 0.0
    %599 = vmatprep.subr.mxu0 0.0
    %600 = vmatpush1.msra.mxu0 0.0
    %601 = vmatprep.subr.mxu0 0.0
    %602 = vmatpush1.msra.mxu0 0.0
    %603 = vmatprep.subr.mxu0 0.0
    %604 = vmatpush1.msra.mxu0 0.0
    %605 = vmatprep.subr.mxu0 0.0
    %606 = vmatpush1.msra.mxu0 0.0
    %607 = vmatprep.subr.mxu0 0.0
    %608 = vmatpush1.msra.mxu0 0.0
    %609 = vmatprep.subr.mxu0 0.0
    %610 = vmatpush1.msra.mxu0 0.0
    %611 = vmatprep.subr.mxu0 0.0
    %612 = vmatpush1.msra.mxu0 0.0
    %613 = vmatprep.subr.mxu0 0.0
    %614 = vmatpush1.msra.mxu0 0.0
    %615 = vmatprep.subr.mxu0 0.0
    %616 = vmatpush1.msra.mxu0 0.0
    %617 = vmatprep.subr.mxu0 0.0
    %618 = vmatpush1.msra.mxu0 0.0
    %619 = vmatprep.subr.mxu0 0.0
    %620 = vmatpush1.msra.mxu0 0.0
    %621 = vmatprep.mubr.f32.mxu0 0.0
    %622 = vmatmul.mubr.f32.gmra.mrb[0].mxu0 %v555
    %v623 = vpop.f32.mrb[0].mxu0
    %v624 = vadd.f32 0.0, %v623
    %v625 = vpop.f32.mrb[0].mxu0
    %626 = vdwg.mxu0
    %627 = vrot.lane.b32.xlu0 %v361, 64
    %v628 = vpop.permute.xlu0 %627
    %v631 = vsel %vm377, %v550, 0
    %633 = vmatprep.subr.mxu0 0.0
    %634 = vmatpush1.msra.mxu0 %v628
    %635 = vmatprep.subr.mxu0 0.0
    %636 = vmatpush1.msra.mxu0 0.0
    %637 = vmatprep.subr.mxu0 0.0
    %638 = vmatpush1.msra.mxu0 0.0
    %639 = vmatprep.subr.mxu0 0.0
    %640 = vmatpush1.msra.mxu0 0.0
    %641 = vmatprep.subr.mxu0 0.0
    %642 = vmatpush1.msra.mxu0 0.0
    %643 = vmatprep.subr.mxu0 0.0
    %644 = vmatpush1.msra.mxu0 0.0
    %645 = vmatprep.subr.mxu0 0.0
    %646 = vmatpush1.msra.mxu0 0.0
    %647 = vmatprep.subr.mxu0 0.0
    %648 = vmatpush1.msra.mxu0 0.0
    %649 = vmatprep.subr.mxu0 0.0
    %650 = vmatpush1.msra.mxu0 0.0
    %651 = vmatprep.subr.mxu0 0.0
    %652 = vmatpush1.msra.mxu0 0.0
    %653 = vmatprep.subr.mxu0 0.0
    %654 = vmatpush1.msra.mxu0 0.0
    %655 = vmatprep.subr.mxu0 0.0
    %656 = vmatpush1.msra.mxu0 0.0
    %657 = vmatprep.subr.mxu0 0.0
    %658 = vmatpush1.msra.mxu0 0.0
    %659 = vmatprep.subr.mxu0 0.0
    %660 = vmatpush1.msra.mxu0 0.0
    %661 = vmatprep.subr.mxu0 0.0
    %662 = vmatpush1.msra.mxu0 0.0
    %663 = vmatprep.subr.mxu0 0.0
    %664 = vmatpush1.msra.mxu0 0.0
    %665 = vmatprep.subr.mxu0 0.0
    %666 = vmatpush1.msra.mxu0 0.0
    %667 = vmatprep.subr.mxu0 0.0
    %668 = vmatpush1.msra.mxu0 0.0
    %669 = vmatprep.subr.mxu0 0.0
    %670 = vmatpush1.msra.mxu0 0.0
    %671 = vmatprep.subr.mxu0 0.0
    %672 = vmatpush1.msra.mxu0 0.0
    %673 = vmatprep.subr.mxu0 0.0
    %674 = vmatpush1.msra.mxu0 0.0
    %675 = vmatprep.subr.mxu0 0.0
    %676 = vmatpush1.msra.mxu0 0.0
    %677 = vmatprep.subr.mxu0 0.0
    %678 = vmatpush1.msra.mxu0 0.0
    %679 = vmatprep.subr.mxu0 0.0
    %680 = vmatpush1.msra.mxu0 0.0
    %681 = vmatprep.subr.mxu0 0.0
    %682 = vmatpush1.msra.mxu0 0.0
    %683 = vmatprep.subr.mxu0 0.0
    %684 = vmatpush1.msra.mxu0 0.0
    %685 = vmatprep.subr.mxu0 0.0
    %686 = vmatpush1.msra.mxu0 0.0
    %687 = vmatprep.subr.mxu0 0.0
    %688 = vmatpush1.msra.mxu0 0.0
    %689 = vmatprep.subr.mxu0 0.0
    %690 = vmatpush1.msra.mxu0 0.0
    %691 = vmatprep.subr.mxu0 0.0
    %692 = vmatpush1.msra.mxu0 0.0
    %693 = vmatprep.subr.mxu0 0.0
    %694 = vmatpush1.msra.mxu0 0.0
    %695 = vmatprep.subr.mxu0 0.0
    %696 = vmatpush1.msra.mxu0 0.0
    %697 = vmatprep.mubr.f32.mxu0 0.0
    %698 = vmatmul.mubr.f32.gmra.mrb[0].mxu0 %v631
    %v699 = vpop.f32.mrb[0].mxu0
    %v700 = vadd.f32 0.0, %v699
    %v701 = vpop.f32.mrb[0].mxu0
    %702 = vdwg.mxu0
    %703 = vrot.lane.b32.xlu0 %v356, 120
    %v704 = vpop.permute.xlu0 %703
    %705 = vrot.lane.b32.xlu0 %v356, 88
    %v706 = vpop.permute.xlu0 %705
    %v707 = vsel %vm377, %v704, 0
    %v709 = vsel %vm377, %v706, 0
    %711 = vmatprep.subr.mxu0 0.0
    %712 = vmatpush1.xpose.msra.mxu0 %v709
    %713 = vmatprep.subr.mxu0 0.0
    %714 = vmatpush1.xpose.msra.mxu0 0.0
    %715 = vmatprep.subr.mxu0 0.0
    %716 = vmatpush1.xpose.msra.mxu0 0.0
    %717 = vmatprep.subr.mxu0 0.0
    %718 = vmatpush1.xpose.msra.mxu0 0.0
    %719 = vmatprep.subr.mxu0 0.0
    %720 = vmatpush1.xpose.msra.mxu0 0.0
    %721 = vmatprep.subr.mxu0 0.0
    %722 = vmatpush1.xpose.msra.mxu0 0.0
    %723 = vmatprep.subr.mxu0 0.0
    %724 = vmatpush1.xpose.msra.mxu0 0.0
    %725 = vmatprep.subr.mxu0 0.0
    %726 = vmatpush1.xpose.msra.mxu0 0.0
    %727 = vmatprep.subr.mxu0 0.0
    %728 = vmatpush1.xpose.msra.mxu0 0.0
    %729 = vmatprep.subr.mxu0 0.0
    %730 = vmatpush1.xpose.msra.mxu0 0.0
    %731 = vmatprep.subr.mxu0 0.0
    %732 = vmatpush1.xpose.msra.mxu0 0.0
    %733 = vmatprep.subr.mxu0 0.0
    %734 = vmatpush1.xpose.msra.mxu0 0.0
    %735 = vmatprep.subr.mxu0 0.0
    %736 = vmatpush1.xpose.msra.mxu0 0.0
    %737 = vmatprep.subr.mxu0 0.0
    %738 = vmatpush1.xpose.msra.mxu0 0.0
    %739 = vmatprep.subr.mxu0 0.0
    %740 = vmatpush1.xpose.msra.mxu0 0.0
    %741 = vmatprep.subr.mxu0 0.0
    %742 = vmatpush1.xpose.msra.mxu0 0.0
    %743 = vmatprep.subr.mxu0 0.0
    %744 = vmatpush1.xpose.msra.mxu0 0.0
    %745 = vmatprep.subr.mxu0 0.0
    %746 = vmatpush1.xpose.msra.mxu0 0.0
    %747 = vmatprep.subr.mxu0 0.0
    %748 = vmatpush1.xpose.msra.mxu0 0.0
    %749 = vmatprep.subr.mxu0 0.0
    %750 = vmatpush1.xpose.msra.mxu0 0.0
    %751 = vmatprep.subr.mxu0 0.0
    %752 = vmatpush1.xpose.msra.mxu0 0.0
    %753 = vmatprep.subr.mxu0 0.0
    %754 = vmatpush1.xpose.msra.mxu0 0.0
    %755 = vmatprep.subr.mxu0 0.0
    %756 = vmatpush1.xpose.msra.mxu0 0.0
    %757 = vmatprep.subr.mxu0 0.0
    %758 = vmatpush1.xpose.msra.mxu0 0.0
    %759 = vmatprep.subr.mxu0 0.0
    %760 = vmatpush1.xpose.msra.mxu0 0.0
    %761 = vmatprep.subr.mxu0 0.0
    %762 = vmatpush1.xpose.msra.mxu0 0.0
    %763 = vmatprep.subr.mxu0 0.0
    %764 = vmatpush1.xpose.msra.mxu0 0.0
    %765 = vmatprep.subr.mxu0 0.0
    %766 = vmatpush1.xpose.msra.mxu0 0.0
    %767 = vmatprep.subr.mxu0 0.0
    %768 = vmatpush1.xpose.msra.mxu0 0.0
    %769 = vmatprep.subr.mxu0 0.0
    %770 = vmatpush1.xpose.msra.mxu0 0.0
    %771 = vmatprep.subr.mxu0 0.0
    %772 = vmatpush1.xpose.msra.mxu0 0.0
    %773 = vmatprep.subr.mxu0 0.0
    %774 = vmatpush1.xpose.msra.mxu0 0.0
    %775 = vmatprep.mubr.f32.mxu0 0.0
    %776 = vmatmul.mubr.f32.gmra.mrb[0].mxu0 %v707
    %v777 = vpop.f32.mrb[0].mxu0
    %v778 = vadd.f32 %v367, %v777
    %v779 = vpop.f32.mrb[0].mxu0
    %780 = vdwg.mxu0
    %781 = vrot.lane.b32.xlu0 %v361, 120
    %v782 = vpop.permute.xlu0 %781
    %783 = vrot.lane.b32.xlu0 %v361, 88
    %v784 = vpop.permute.xlu0 %783
    %v785 = vsel %vm377, %v782, 0
    %v787 = vsel %vm377, %v784, 0
    %789 = vmatprep.subr.mxu0 0.0
    %790 = vmatpush1.xpose.msra.mxu0 %v787
    %791 = vmatprep.subr.mxu0 0.0
    %792 = vmatpush1.xpose.msra.mxu0 0.0
    %793 = vmatprep.subr.mxu0 0.0
    %794 = vmatpush1.xpose.msra.mxu0 0.0
    %795 = vmatprep.subr.mxu0 0.0
    %796 = vmatpush1.xpose.msra.mxu0 0.0
    %797 = vmatprep.subr.mxu0 0.0
    %798 = vmatpush1.xpose.msra.mxu0 0.0
    %799 = vmatprep.subr.mxu0 0.0
    %800 = vmatpush1.xpose.msra.mxu0 0.0
    %801 = vmatprep.subr.mxu0 0.0
    %802 = vmatpush1.xpose.msra.mxu0 0.0
    %803 = vmatprep.subr.mxu0 0.0
    %804 = vmatpush1.xpose.msra.mxu0 0.0
    %805 = vmatprep.subr.mxu0 0.0
    %806 = vmatpush1.xpose.msra.mxu0 0.0
    %807 = vmatprep.subr.mxu0 0.0
    %808 = vmatpush1.xpose.msra.mxu0 0.0
    %809 = vmatprep.subr.mxu0 0.0
    %810 = vmatpush1.xpose.msra.mxu0 0.0
    %811 = vmatprep.subr.mxu0 0.0
    %812 = vmatpush1.xpose.msra.mxu0 0.0
    %813 = vmatprep.subr.mxu0 0.0
    %814 = vmatpush1.xpose.msra.mxu0 0.0
    %815 = vmatprep.subr.mxu0 0.0
    %816 = vmatpush1.xpose.msra.mxu0 0.0
    %817 = vmatprep.subr.mxu0 0.0
    %818 = vmatpush1.xpose.msra.mxu0 0.0
    %819 = vmatprep.subr.mxu0 0.0
    %820 = vmatpush1.xpose.msra.mxu0 0.0
    %821 = vmatprep.subr.mxu0 0.0
    %822 = vmatpush1.xpose.msra.mxu0 0.0
    %823 = vmatprep.subr.mxu0 0.0
    %824 = vmatpush1.xpose.msra.mxu0 0.0
    %825 = vmatprep.subr.mxu0 0.0
    %826 = vmatpush1.xpose.msra.mxu0 0.0
    %827 = vmatprep.subr.mxu0 0.0
    %828 = vmatpush1.xpose.msra.mxu0 0.0
    %829 = vmatprep.subr.mxu0 0.0
    %830 = vmatpush1.xpose.msra.mxu0 0.0
    %831 = vmatprep.subr.mxu0 0.0
    %832 = vmatpush1.xpose.msra.mxu0 0.0
    %833 = vmatprep.subr.mxu0 0.0
    %834 = vmatpush1.xpose.msra.mxu0 0.0
    %835 = vmatprep.subr.mxu0 0.0
    %836 = vmatpush1.xpose.msra.mxu0 0.0
    %837 = vmatprep.subr.mxu0 0.0
    %838 = vmatpush1.xpose.msra.mxu0 0.0
    %839 = vmatprep.subr.mxu0 0.0
    %840 = vmatpush1.xpose.msra.mxu0 0.0
    %841 = vmatprep.subr.mxu0 0.0
    %842 = vmatpush1.xpose.msra.mxu0 0.0
    %843 = vmatprep.subr.mxu0 0.0
    %844 = vmatpush1.xpose.msra.mxu0 0.0
    %845 = vmatprep.subr.mxu0 0.0
    %846 = vmatpush1.xpose.msra.mxu0 0.0
    %847 = vmatprep.subr.mxu0 0.0
    %848 = vmatpush1.xpose.msra.mxu0 0.0
    %849 = vmatprep.subr.mxu0 0.0
    %850 = vmatpush1.xpose.msra.mxu0 0.0
    %851 = vmatprep.subr.mxu0 0.0
    %852 = vmatpush1.xpose.msra.mxu0 0.0
    %853 = vmatprep.mubr.f32.mxu0 0.0
    %854 = vmatmul.mubr.f32.gmra.mrb[0].mxu0 %v785
    %v855 = vpop.f32.mrb[0].mxu0
    %v856 = vadd.f32 %v371, %v855
    %v857 = vpop.f32.mrb[0].mxu0
    %858 = vdwg.mxu0
    %v859 = vsel %vm377, %v778, -inf
    %860 = vmax.xlane.f32.xlu0 %v859
    %v861 = vpop.xlane.xlu0 %860
    %v862 = vsel %vm377, %v856, -inf
    %863 = vmax.xlane.f32.xlu0 %v862
    %v864 = vpop.xlane.xlu0 %863
    %v865 = vsub.f32 %v778, %v861
    %v866 = vsub.f32 %v856, %v864
    %v867 = vmul.f32 %v865, 1.442695
    %v868 = vpow.pop %v867
    %v869 = vmul.f32 %v866, 1.442695
    %v870 = vpow.pop %v869
    %v871 = vsel %vm377, %v868, 0.0
    %872 = vadd.xlane.f32.xlu0 %v871
    %v873 = vpop.xlane.xlu0 %872
    %v874 = vsel %vm377, %v870, 0.0
    %875 = vadd.xlane.f32.xlu0 %v874
    %v876 = vpop.xlane.xlu0 %875
    %v877 = vrcp.pop %v873
    %v878 = vrcp.pop %v876
    %v879 = vmul.f32 %v868, %v877
    %v880 = vmul.f32 %v870, %v878
    %881 = vrot.lane.b32.xlu0 %v356, 56
    %v882 = vpop.permute.xlu0 %881
    %v885 = vsel %vm377, %v879, 0
    %887 = vmatprep.subr.mxu0 0.0
    %888 = vmatpush1.msra.mxu0 %v882
    %889 = vmatprep.subr.mxu0 0.0
    %890 = vmatpush1.msra.mxu0 0.0
    %891 = vmatprep.subr.mxu0 0.0
    %892 = vmatpush1.msra.mxu0 0.0
    %893 = vmatprep.subr.mxu0 0.0
    %894 = vmatpush1.msra.mxu0 0.0
    %895 = vmatprep.subr.mxu0 0.0
    %896 = vmatpush1.msra.mxu0 0.0
    %897 = vmatprep.subr.mxu0 0.0
    %898 = vmatpush1.msra.mxu0 0.0
    %899 = vmatprep.subr.mxu0 0.0
    %900 = vmatpush1.msra.mxu0 0.0
    %901 = vmatprep.subr.mxu0 0.0
    %902 = vmatpush1.msra.mxu0 0.0
    %903 = vmatprep.subr.mxu0 0.0
    %904 = vmatpush1.msra.mxu0 0.0
    %905 = vmatprep.subr.mxu0 0.0
    %906 = vmatpush1.msra.mxu0 0.0
    %907 = vmatprep.subr.mxu0 0.0
    %908 = vmatpush1.msra.mxu0 0.0
    %909 = vmatprep.subr.mxu0 0.0
    %910 = vmatpush1.msra.mxu0 0.0
    %911 = vmatprep.subr.mxu0 0.0
    %912 = vmatpush1.msra.mxu0 0.0
    %913 = vmatprep.subr.mxu0 0.0
    %914 = vmatpush1.msra.mxu0 0.0
    %915 = vmatprep.subr.mxu0 0.0
    %916 = vmatpush1.msra.mxu0 0.0
    %917 = vmatprep.subr.mxu0 0.0
    %918 = vmatpush1.msra.mxu0 0.0
    %919 = vmatprep.subr.mxu0 0.0
    %920 = vmatpush1.msra.mxu0 0.0
    %921 = vmatprep.subr.mxu0 0.0
    %922 = vmatpush1.msra.mxu0 0.0
    %923 = vmatprep.subr.mxu0 0.0
    %924 = vmatpush1.msra.mxu0 0.0
    %925 = vmatprep.subr.mxu0 0.0
    %926 = vmatpush1.msra.mxu0 0.0
    %927 = vmatprep.subr.mxu0 0.0
    %928 = vmatpush1.msra.mxu0 0.0
    %929 = vmatprep.subr.mxu0 0.0
    %930 = vmatpush1.msra.mxu0 0.0
    %931 = vmatprep.subr.mxu0 0.0
    %932 = vmatpush1.msra.mxu0 0.0
    %933 = vmatprep.subr.mxu0 0.0
    %934 = vmatpush1.msra.mxu0 0.0
    %935 = vmatprep.subr.mxu0 0.0
    %936 = vmatpush1.msra.mxu0 0.0
    %937 = vmatprep.subr.mxu0 0.0
    %938 = vmatpush1.msra.mxu0 0.0
    %939 = vmatprep.subr.mxu0 0.0
    %940 = vmatpush1.msra.mxu0 0.0
    %941 = vmatprep.subr.mxu0 0.0
    %942 = vmatpush1.msra.mxu0 0.0
    %943 = vmatprep.subr.mxu0 0.0
    %944 = vmatpush1.msra.mxu0 0.0
    %945 = vmatprep.subr.mxu0 0.0
    %946 = vmatpush1.msra.mxu0 0.0
    %947 = vmatprep.subr.mxu0 0.0
    %948 = vmatpush1.msra.mxu0 0.0
    %949 = vmatprep.subr.mxu0 0.0
    %950 = vmatpush1.msra.mxu0 0.0
    %951 = vmatprep.mubr.f32.mxu0 0.0
    %952 = vmatmul.mubr.f32.gmra.mrb[0].mxu0 %v885
    %v953 = vpop.f32.mrb[0].mxu0
    %v954 = vadd.f32 0.0, %v953
    %v955 = vpop.f32.mrb[0].mxu0
    %956 = vdwg.mxu0
    %957 = vrot.lane.b32.xlu0 %v361, 56
    %v958 = vpop.permute.xlu0 %957
    %v961 = vsel %vm377, %v880, 0
    %963 = vmatprep.subr.mxu0 0.0
    %964 = vmatpush1.msra.mxu0 %v958
    %965 = vmatprep.subr.mxu0 0.0
    %966 = vmatpush1.msra.mxu0 0.0
    %967 = vmatprep.subr.mxu0 0.0
    %968 = vmatpush1.msra.mxu0 0.0
    %969 = vmatprep.subr.mxu0 0.0
    %970 = vmatpush1.msra.mxu0 0.0
    %971 = vmatprep.subr.mxu0 0.0
    %972 = vmatpush1.msra.mxu0 0.0
    %973 = vmatprep.subr.mxu0 0.0
    %974 = vmatpush1.msra.mxu0 0.0
    %975 = vmatprep.subr.mxu0 0.0
    %976 = vmatpush1.msra.mxu0 0.0
    %977 = vmatprep.subr.mxu0 0.0
    %978 = vmatpush1.msra.mxu0 0.0
    %979 = vmatprep.subr.mxu0 0.0
    %980 = vmatpush1.msra.mxu0 0.0
    %981 = vmatprep.subr.mxu0 0.0
    %982 = vmatpush1.msra.mxu0 0.0
    %983 = vmatprep.subr.mxu0 0.0
    %984 = vmatpush1.msra.mxu0 0.0
    %985 = vmatprep.subr.mxu0 0.0
    %986 = vmatpush1.msra.mxu0 0.0
    %987 = vmatprep.subr.mxu0 0.0
    %988 = vmatpush1.msra.mxu0 0.0
    %989 = vmatprep.subr.mxu0 0.0
    %990 = vmatpush1.msra.mxu0 0.0
    %991 = vmatprep.subr.mxu0 0.0
    %992 = vmatpush1.msra.mxu0 0.0
    %993 = vmatprep.subr.mxu0 0.0
    %994 = vmatpush1.msra.mxu0 0.0
    %995 = vmatprep.subr.mxu0 0.0
    %996 = vmatpush1.msra.mxu0 0.0
    %997 = vmatprep.subr.mxu0 0.0
    %998 = vmatpush1.msra.mxu0 0.0
    %999 = vmatprep.subr.mxu0 0.0
    %1000 = vmatpush1.msra.mxu0 0.0
    %1001 = vmatprep.subr.mxu0 0.0
    %1002 = vmatpush1.msra.mxu0 0.0
    %1003 = vmatprep.subr.mxu0 0.0
    %1004 = vmatpush1.msra.mxu0 0.0
    %1005 = vmatprep.subr.mxu0 0.0
    %1006 = vmatpush1.msra.mxu0 0.0
    %1007 = vmatprep.subr.mxu0 0.0
    %1008 = vmatpush1.msra.mxu0 0.0
    %1009 = vmatprep.subr.mxu0 0.0
    %1010 = vmatpush1.msra.mxu0 0.0
    %1011 = vmatprep.subr.mxu0 0.0
    %1012 = vmatpush1.msra.mxu0 0.0
    %1013 = vmatprep.subr.mxu0 0.0
    %1014 = vmatpush1.msra.mxu0 0.0
    %1015 = vmatprep.subr.mxu0 0.0
    %1016 = vmatpush1.msra.mxu0 0.0
    %1017 = vmatprep.subr.mxu0 0.0
    %1018 = vmatpush1.msra.mxu0 0.0
    %1019 = vmatprep.subr.mxu0 0.0
    %1020 = vmatpush1.msra.mxu0 0.0
    %1021 = vmatprep.subr.mxu0 0.0
    %1022 = vmatpush1.msra.mxu0 0.0
    %1023 = vmatprep.subr.mxu0 0.0
    %1024 = vmatpush1.msra.mxu0 0.0
    %1025 = vmatprep.subr.mxu0 0.0
    %1026 = vmatpush1.msra.mxu0 0.0
    %1027 = vmatprep.mubr.f32.mxu0 0.0
    %1028 = vmatmul.mubr.f32.gmra.mrb[0].mxu0 %v961
    %v1029 = vpop.f32.mrb[0].mxu0
    %v1030 = vadd.f32 0.0, %v1029
    %v1031 = vpop.f32.mrb[0].mxu0
    %1032 = vdwg.mxu0
    %1033 = vrot.lane.b32.xlu0 %v356, 112
    %v1034 = vpop.permute.xlu0 %1033
    %1035 = vrot.lane.b32.xlu0 %v356, 80
    %v1036 = vpop.permute.xlu0 %1035
    %v1037 = vsel %vm377, %v1034, 0
    %v1039 = vsel %vm377, %v1036, 0
    %1041 = vmatprep.subr.mxu0 0.0
    %1042 = vmatpush1.xpose.msra.mxu0 %v1039
    %1043 = vmatprep.subr.mxu0 0.0
    %1044 = vmatpush1.xpose.msra.mxu0 0.0
    %1045 = vmatprep.subr.mxu0 0.0
    %1046 = vmatpush1.xpose.msra.mxu0 0.0
    %1047 = vmatprep.subr.mxu0 0.0
    %1048 = vmatpush1.xpose.msra.mxu0 0.0
    %1049 = vmatprep.subr.mxu0 0.0
    %1050 = vmatpush1.xpose.msra.mxu0 0.0
    %1051 = vmatprep.subr.mxu0 0.0
    %1052 = vmatpush1.xpose.msra.mxu0 0.0
    %1053 = vmatprep.subr.mxu0 0.0
    %1054 = vmatpush1.xpose.msra.mxu0 0.0
    %1055 = vmatprep.subr.mxu0 0.0
    %1056 = vmatpush1.xpose.msra.mxu0 0.0
    %1057 = vmatprep.subr.mxu0 0.0
    %1058 = vmatpush1.xpose.msra.mxu0 0.0
    %1059 = vmatprep.subr.mxu0 0.0
    %1060 = vmatpush1.xpose.msra.mxu0 0.0
    %1061 = vmatprep.subr.mxu0 0.0
    %1062 = vmatpush1.xpose.msra.mxu0 0.0
    %1063 = vmatprep.subr.mxu0 0.0
    %1064 = vmatpush1.xpose.msra.mxu0 0.0
    %1065 = vmatprep.subr.mxu0 0.0
    %1066 = vmatpush1.xpose.msra.mxu0 0.0
    %1067 = vmatprep.subr.mxu0 0.0
    %1068 = vmatpush1.xpose.msra.mxu0 0.0
    %1069 = vmatprep.subr.mxu0 0.0
    %1070 = vmatpush1.xpose.msra.mxu0 0.0
    %1071 = vmatprep.subr.mxu0 0.0
    %1072 = vmatpush1.xpose.msra.mxu0 0.0
    %1073 = vmatprep.subr.mxu0 0.0
    %1074 = vmatpush1.xpose.msra.mxu0 0.0
    %1075 = vmatprep.subr.mxu0 0.0
    %1076 = vmatpush1.xpose.msra.mxu0 0.0
    %1077 = vmatprep.subr.mxu0 0.0
    %1078 = vmatpush1.xpose.msra.mxu0 0.0
    %1079 = vmatprep.subr.mxu0 0.0
    %1080 = vmatpush1.xpose.msra.mxu0 0.0
    %1081 = vmatprep.subr.mxu0 0.0
    %1082 = vmatpush1.xpose.msra.mxu0 0.0
    %1083 = vmatprep.subr.mxu0 0.0
    %1084 = vmatpush1.xpose.msra.mxu0 0.0
    %1085 = vmatprep.subr.mxu0 0.0
    %1086 = vmatpush1.xpose.msra.mxu0 0.0
    %1087 = vmatprep.subr.mxu0 0.0
    %1088 = vmatpush1.xpose.msra.mxu0 0.0
    %1089 = vmatprep.subr.mxu0 0.0
    %1090 = vmatpush1.xpose.msra.mxu0 0.0
    %1091 = vmatprep.subr.mxu0 0.0
    %1092 = vmatpush1.xpose.msra.mxu0 0.0
    %1093 = vmatprep.subr.mxu0 0.0
    %1094 = vmatpush1.xpose.msra.mxu0 0.0
    %1095 = vmatprep.subr.mxu0 0.0
    %1096 = vmatpush1.xpose.msra.mxu0 0.0
    %1097 = vmatprep.subr.mxu0 0.0
    %1098 = vmatpush1.xpose.msra.mxu0 0.0
    %1099 = vmatprep.subr.mxu0 0.0
    %1100 = vmatpush1.xpose.msra.mxu0 0.0
    %1101 = vmatprep.subr.mxu0 0.0
    %1102 = vmatpush1.xpose.msra.mxu0 0.0
    %1103 = vmatprep.subr.mxu0 0.0
    %1104 = vmatpush1.xpose.msra.mxu0 0.0
    %1105 = vmatprep.mubr.f32.mxu0 0.0
    %1106 = vmatmul.mubr.f32.gmra.mrb[0].mxu0 %v1037
    %v1107 = vpop.f32.mrb[0].mxu0
    %v1108 = vadd.f32 %v367, %v1107
    %v1109 = vpop.f32.mrb[0].mxu0
    %1110 = vdwg.mxu0
    %1111 = vrot.lane.b32.xlu0 %v361, 112
    %v1112 = vpop.permute.xlu0 %1111
    %1113 = vrot.lane.b32.xlu0 %v361, 80
    %v1114 = vpop.permute.xlu0 %1113
    %v1115 = vsel %vm377, %v1112, 0
    %v1117 = vsel %vm377, %v1114, 0
    %1119 = vmatprep.subr.mxu0 0.0
    %1120 = vmatpush1.xpose.msra.mxu0 %v1117
    %1121 = vmatprep.subr.mxu0 0.0
    %1122 = vmatpush1.xpose.msra.mxu0 0.0
    %1123 = vmatprep.subr.mxu0 0.0
    %1124 = vmatpush1.xpose.msra.mxu0 0.0
    %1125 = vmatprep.subr.mxu0 0.0
    %1126 = vmatpush1.xpose.msra.mxu0 0.0
    %1127 = vmatprep.subr.mxu0 0.0
    %1128 = vmatpush1.xpose.msra.mxu0 0.0
    %1129 = vmatprep.subr.mxu0 0.0
    %1130 = vmatpush1.xpose.msra.mxu0 0.0
    %1131 = vmatprep.subr.mxu0 0.0
    %1132 = vmatpush1.xpose.msra.mxu0 0.0
    %1133 = vmatprep.subr.mxu0 0.0
    %1134 = vmatpush1.xpose.msra.mxu0 0.0
    %1135 = vmatprep.subr.mxu0 0.0
    %1136 = vmatpush1.xpose.msra.mxu0 0.0
    %1137 = vmatprep.subr.mxu0 0.0
    %1138 = vmatpush1.xpose.msra.mxu0 0.0
    %1139 = vmatprep.subr.mxu0 0.0
    %1140 = vmatpush1.xpose.msra.mxu0 0.0
    %1141 = vmatprep.subr.mxu0 0.0
    %1142 = vmatpush1.xpose.msra.mxu0 0.0
    %1143 = vmatprep.subr.mxu0 0.0
    %1144 = vmatpush1.xpose.msra.mxu0 0.0
    %1145 = vmatprep.subr.mxu0 0.0
    %1146 = vmatpush1.xpose.msra.mxu0 0.0
    %1147 = vmatprep.subr.mxu0 0.0
    %1148 = vmatpush1.xpose.msra.mxu0 0.0
    %1149 = vmatprep.subr.mxu0 0.0
    %1150 = vmatpush1.xpose.msra.mxu0 0.0
    %1151 = vmatprep.subr.mxu0 0.0
    %1152 = vmatpush1.xpose.msra.mxu0 0.0
    %1153 = vmatprep.subr.mxu0 0.0
    %1154 = vmatpush1.xpose.msra.mxu0 0.0
    %1155 = vmatprep.subr.mxu0 0.0
    %1156 = vmatpush1.xpose.msra.mxu0 0.0
    %1157 = vmatprep.subr.mxu0 0.0
    %1158 = vmatpush1.xpose.msra.mxu0 0.0
    %1159 = vmatprep.subr.mxu0 0.0
    %1160 = vmatpush1.xpose.msra.mxu0 0.0
    %1161 = vmatprep.subr.mxu0 0.0
    %1162 = vmatpush1.xpose.msra.mxu0 0.0
    %1163 = vmatprep.subr.mxu0 0.0
    %1164 = vmatpush1.xpose.msra.mxu0 0.0
    %1165 = vmatprep.subr.mxu0 0.0
    %1166 = vmatpush1.xpose.msra.mxu0 0.0
    %1167 = vmatprep.subr.mxu0 0.0
    %1168 = vmatpush1.xpose.msra.mxu0 0.0
    %1169 = vmatprep.subr.mxu0 0.0
    %1170 = vmatpush1.xpose.msra.mxu0 0.0
    %1171 = vmatprep.subr.mxu0 0.0
    %1172 = vmatpush1.xpose.msra.mxu0 0.0
    %1173 = vmatprep.subr.mxu0 0.0
    %1174 = vmatpush1.xpose.msra.mxu0 0.0
    %1175 = vmatprep.subr.mxu0 0.0
    %1176 = vmatpush1.xpose.msra.mxu0 0.0
    %1177 = vmatprep.subr.mxu0 0.0
    %1178 = vmatpush1.xpose.msra.mxu0 0.0
    %1179 = vmatprep.subr.mxu0 0.0
    %1180 = vmatpush1.xpose.msra.mxu0 0.0
    %1181 = vmatprep.subr.mxu0 0.0
    %1182 = vmatpush1.xpose.msra.mxu0 0.0
    %1183 = vmatprep.mubr.f32.mxu0 0.0
    %1184 = vmatmul.mubr.f32.gmra.mrb[0].mxu0 %v1115
    %v1185 = vpop.f32.mrb[0].mxu0
    %v1186 = vadd.f32 %v371, %v1185
    %v1187 = vpop.f32.mrb[0].mxu0
    %1188 = vdwg.mxu0
    %v1189 = vsel %vm377, %v1108, -inf
    %1190 = vmax.xlane.f32.xlu0 %v1189
    %v1191 = vpop.xlane.xlu0 %1190
    %v1192 = vsel %vm377, %v1186, -inf
    %1193 = vmax.xlane.f32.xlu0 %v1192
    %v1194 = vpop.xlane.xlu0 %1193
    %v1195 = vsub.f32 %v1108, %v1191
    %v1196 = vsub.f32 %v1186, %v1194
    %v1197 = vmul.f32 %v1195, 1.442695
    %v1198 = vpow.pop %v1197
    %v1199 = vmul.f32 %v1196, 1.442695
    %v1200 = vpow.pop %v1199
    %v1201 = vsel %vm377, %v1198, 0.0
    %1202 = vadd.xlane.f32.xlu0 %v1201
    %v1203 = vpop.xlane.xlu0 %1202
    %v1204 = vsel %vm377, %v1200, 0.0
    %1205 = vadd.xlane.f32.xlu0 %v1204
    %v1206 = vpop.xlane.xlu0 %1205
    %v1207 = vrcp.pop %v1203
    %v1208 = vrcp.pop %v1206
    %v1209 = vmul.f32 %v1198, %v1207
    %v1210 = vmul.f32 %v1200, %v1208
    %1211 = vrot.lane.b32.xlu0 %v356, 48
    %v1212 = vpop.permute.xlu0 %1211
    %v1215 = vsel %vm377, %v1209, 0
    %1217 = vmatprep.subr.mxu0 0.0
    %1218 = vmatpush1.msra.mxu0 %v1212
    %1219 = vmatprep.subr.mxu0 0.0
    %1220 = vmatpush1.msra.mxu0 0.0
    %1221 = vmatprep.subr.mxu0 0.0
    %1222 = vmatpush1.msra.mxu0 0.0
    %1223 = vmatprep.subr.mxu0 0.0
    %1224 = vmatpush1.msra.mxu0 0.0
    %1225 = vmatprep.subr.mxu0 0.0
    %1226 = vmatpush1.msra.mxu0 0.0
    %1227 = vmatprep.subr.mxu0 0.0
    %1228 = vmatpush1.msra.mxu0 0.0
    %1229 = vmatprep.subr.mxu0 0.0
    %1230 = vmatpush1.msra.mxu0 0.0
    %1231 = vmatprep.subr.mxu0 0.0
    %1232 = vmatpush1.msra.mxu0 0.0
    %1233 = vmatprep.subr.mxu0 0.0
    %1234 = vmatpush1.msra.mxu0 0.0
    %1235 = vmatprep.subr.mxu0 0.0
    %1236 = vmatpush1.msra.mxu0 0.0
    %1237 = vmatprep.subr.mxu0 0.0
    %1238 = vmatpush1.msra.mxu0 0.0
    %1239 = vmatprep.subr.mxu0 0.0
    %1240 = vmatpush1.msra.mxu0 0.0
    %1241 = vmatprep.subr.mxu0 0.0
    %1242 = vmatpush1.msra.mxu0 0.0
    %1243 = vmatprep.subr.mxu0 0.0
    %1244 = vmatpush1.msra.mxu0 0.0
    %1245 = vmatprep.subr.mxu0 0.0
    %1246 = vmatpush1.msra.mxu0 0.0
    %1247 = vmatprep.subr.mxu0 0.0
    %1248 = vmatpush1.msra.mxu0 0.0
    %1249 = vmatprep.subr.mxu0 0.0
    %1250 = vmatpush1.msra.mxu0 0.0
    %1251 = vmatprep.subr.mxu0 0.0
    %1252 = vmatpush1.msra.mxu0 0.0
    %1253 = vmatprep.subr.mxu0 0.0
    %1254 = vmatpush1.msra.mxu0 0.0
    %1255 = vmatprep.subr.mxu0 0.0
    %1256 = vmatpush1.msra.mxu0 0.0
    %1257 = vmatprep.subr.mxu0 0.0
    %1258 = vmatpush1.msra.mxu0 0.0
    %1259 = vmatprep.subr.mxu0 0.0
    %1260 = vmatpush1.msra.mxu0 0.0
    %1261 = vmatprep.subr.mxu0 0.0
    %1262 = vmatpush1.msra.mxu0 0.0
    %1263 = vmatprep.subr.mxu0 0.0
    %1264 = vmatpush1.msra.mxu0 0.0
    %1265 = vmatprep.subr.mxu0 0.0
    %1266 = vmatpush1.msra.mxu0 0.0
    %1267 = vmatprep.subr.mxu0 0.0
    %1268 = vmatpush1.msra.mxu0 0.0
    %1269 = vmatprep.subr.mxu0 0.0
    %1270 = vmatpush1.msra.mxu0 0.0
    %1271 = vmatprep.subr.mxu0 0.0
    %1272 = vmatpush1.msra.mxu0 0.0
    %1273 = vmatprep.subr.mxu0 0.0
    %1274 = vmatpush1.msra.mxu0 0.0
    %1275 = vmatprep.subr.mxu0 0.0
    %1276 = vmatpush1.msra.mxu0 0.0
    %1277 = vmatprep.subr.mxu0 0.0
    %1278 = vmatpush1.msra.mxu0 0.0
    %1279 = vmatprep.subr.mxu0 0.0
    %1280 = vmatpush1.msra.mxu0 0.0
    %1281 = vmatprep.mubr.f32.mxu0 0.0
    %1282 = vmatmul.mubr.f32.gmra.mrb[0].mxu0 %v1215
    %v1283 = vpop.f32.mrb[0].mxu0
    %v1284 = vadd.f32 0.0, %v1283
    %v1285 = vpop.f32.mrb[0].mxu0
    %1286 = vdwg.mxu0
    %1287 = vrot.lane.b32.xlu0 %v361, 48
    %v1288 = vpop.permute.xlu0 %1287
    %v1291 = vsel %vm377, %v1210, 0
    %1293 = vmatprep.subr.mxu0 0.0
    %1294 = vmatpush1.msra.mxu0 %v1288
    %1295 = vmatprep.subr.mxu0 0.0
    %1296 = vmatpush1.msra.mxu0 0.0
    %1297 = vmatprep.subr.mxu0 0.0
    %1298 = vmatpush1.msra.mxu0 0.0
    %1299 = vmatprep.subr.mxu0 0.0
    %1300 = vmatpush1.msra.mxu0 0.0
    %1301 = vmatprep.subr.mxu0 0.0
    %1302 = vmatpush1.msra.mxu0 0.0
    %1303 = vmatprep.subr.mxu0 0.0
    %1304 = vmatpush1.msra.mxu0 0.0
    %1305 = vmatprep.subr.mxu0 0.0
    %1306 = vmatpush1.msra.mxu0 0.0
    %1307 = vmatprep.subr.mxu0 0.0
    %1308 = vmatpush1.msra.mxu0 0.0
    %1309 = vmatprep.subr.mxu0 0.0
    %1310 = vmatpush1.msra.mxu0 0.0
    %1311 = vmatprep.subr.mxu0 0.0
    %1312 = vmatpush1.msra.mxu0 0.0
    %1313 = vmatprep.subr.mxu0 0.0
    %1314 = vmatpush1.msra.mxu0 0.0
    %1315 = vmatprep.subr.mxu0 0.0
    %1316 = vmatpush1.msra.mxu0 0.0
    %1317 = vmatprep.subr.mxu0 0.0
    %1318 = vmatpush1.msra.mxu0 0.0
    %1319 = vmatprep.subr.mxu0 0.0
    %1320 = vmatpush1.msra.mxu0 0.0
    %1321 = vmatprep.subr.mxu0 0.0
    %1322 = vmatpush1.msra.mxu0 0.0
    %1323 = vmatprep.subr.mxu0 0.0
    %1324 = vmatpush1.msra.mxu0 0.0
    %1325 = vmatprep.subr.mxu0 0.0
    %1326 = vmatpush1.msra.mxu0 0.0
    %1327 = vmatprep.subr.mxu0 0.0
    %1328 = vmatpush1.msra.mxu0 0.0
    %1329 = vmatprep.subr.mxu0 0.0
    %1330 = vmatpush1.msra.mxu0 0.0
    %1331 = vmatprep.subr.mxu0 0.0
    %1332 = vmatpush1.msra.mxu0 0.0
    %1333 = vmatprep.subr.mxu0 0.0
    %1334 = vmatpush1.msra.mxu0 0.0
    %1335 = vmatprep.subr.mxu0 0.0
    %1336 = vmatpush1.msra.mxu0 0.0
    %1337 = vmatprep.subr.mxu0 0.0
    %1338 = vmatpush1.msra.mxu0 0.0
    %1339 = vmatprep.subr.mxu0 0.0
    %1340 = vmatpush1.msra.mxu0 0.0
    %1341 = vmatprep.subr.mxu0 0.0
    %1342 = vmatpush1.msra.mxu0 0.0
    %1343 = vmatprep.subr.mxu0 0.0
    %1344 = vmatpush1.msra.mxu0 0.0
    %1345 = vmatprep.subr.mxu0 0.0
    %1346 = vmatpush1.msra.mxu0 0.0
    %1347 = vmatprep.subr.mxu0 0.0
    %1348 = vmatpush1.msra.mxu0 0.0
    %1349 = vmatprep.subr.mxu0 0.0
    %1350 = vmatpush1.msra.mxu0 0.0
    %1351 = vmatprep.subr.mxu0 0.0
    %1352 = vmatpush1.msra.mxu0 0.0
    %1353 = vmatprep.subr.mxu0 0.0
    %1354 = vmatpush1.msra.mxu0 0.0
    %1355 = vmatprep.subr.mxu0 0.0
    %1356 = vmatpush1.msra.mxu0 0.0
    %1357 = vmatprep.mubr.f32.mxu0 0.0
    %1358 = vmatmul.mubr.f32.gmra.mrb[0].mxu0 %v1291
    %v1359 = vpop.f32.mrb[0].mxu0
    %v1360 = vadd.f32 0.0, %v1359
    %v1361 = vpop.f32.mrb[0].mxu0
    %1362 = vdwg.mxu0
    %1363 = vrot.lane.b32.xlu0 %v356, 104
    %v1364 = vpop.permute.xlu0 %1363
    %1365 = vrot.lane.b32.xlu0 %v356, 72
    %v1366 = vpop.permute.xlu0 %1365
    %v1367 = vsel %vm377, %v1364, 0
    %v1369 = vsel %vm377, %v1366, 0
    %1371 = vmatprep.subr.mxu0 0.0
    %1372 = vmatpush1.xpose.msra.mxu0 %v1369
    %1373 = vmatprep.subr.mxu0 0.0
    %1374 = vmatpush1.xpose.msra.mxu0 0.0
    %1375 = vmatprep.subr.mxu0 0.0
    %1376 = vmatpush1.xpose.msra.mxu0 0.0
    %1377 = vmatprep.subr.mxu0 0.0
    %1378 = vmatpush1.xpose.msra.mxu0 0.0
    %1379 = vmatprep.subr.mxu0 0.0
    %1380 = vmatpush1.xpose.msra.mxu0 0.0
    %1381 = vmatprep.subr.mxu0 0.0
    %1382 = vmatpush1.xpose.msra.mxu0 0.0
    %1383 = vmatprep.subr.mxu0 0.0
    %1384 = vmatpush1.xpose.msra.mxu0 0.0
    %1385 = vmatprep.subr.mxu0 0.0
    %1386 = vmatpush1.xpose.msra.mxu0 0.0
    %1387 = vmatprep.subr.mxu0 0.0
    %1388 = vmatpush1.xpose.msra.mxu0 0.0
    %1389 = vmatprep.subr.mxu0 0.0
    %1390 = vmatpush1.xpose.msra.mxu0 0.0
    %1391 = vmatprep.subr.mxu0 0.0
    %1392 = vmatpush1.xpose.msra.mxu0 0.0
    %1393 = vmatprep.subr.mxu0 0.0
    %1394 = vmatpush1.xpose.msra.mxu0 0.0
    %1395 = vmatprep.subr.mxu0 0.0
    %1396 = vmatpush1.xpose.msra.mxu0 0.0
    %1397 = vmatprep.subr.mxu0 0.0
    %1398 = vmatpush1.xpose.msra.mxu0 0.0
    %1399 = vmatprep.subr.mxu0 0.0
    %1400 = vmatpush1.xpose.msra.mxu0 0.0
    %1401 = vmatprep.subr.mxu0 0.0
    %1402 = vmatpush1.xpose.msra.mxu0 0.0
    %1403 = vmatprep.subr.mxu0 0.0
    %1404 = vmatpush1.xpose.msra.mxu0 0.0
    %1405 = vmatprep.subr.mxu0 0.0
    %1406 = vmatpush1.xpose.msra.mxu0 0.0
    %1407 = vmatprep.subr.mxu0 0.0
    %1408 = vmatpush1.xpose.msra.mxu0 0.0
    %1409 = vmatprep.subr.mxu0 0.0
    %1410 = vmatpush1.xpose.msra.mxu0 0.0
    %1411 = vmatprep.subr.mxu0 0.0
    %1412 = vmatpush1.xpose.msra.mxu0 0.0
    %1413 = vmatprep.subr.mxu0 0.0
    %1414 = vmatpush1.xpose.msra.mxu0 0.0
    %1415 = vmatprep.subr.mxu0 0.0
    %1416 = vmatpush1.xpose.msra.mxu0 0.0
    %1417 = vmatprep.subr.mxu0 0.0
    %1418 = vmatpush1.xpose.msra.mxu0 0.0
    %1419 = vmatprep.subr.mxu0 0.0
    %1420 = vmatpush1.xpose.msra.mxu0 0.0
    %1421 = vmatprep.subr.mxu0 0.0
    %1422 = vmatpush1.xpose.msra.mxu0 0.0
    %1423 = vmatprep.subr.mxu0 0.0
    %1424 = vmatpush1.xpose.msra.mxu0 0.0
    %1425 = vmatprep.subr.mxu0 0.0
    %1426 = vmatpush1.xpose.msra.mxu0 0.0
    %1427 = vmatprep.subr.mxu0 0.0
    %1428 = vmatpush1.xpose.msra.mxu0 0.0
    %1429 = vmatprep.subr.mxu0 0.0
    %1430 = vmatpush1.xpose.msra.mxu0 0.0
    %1431 = vmatprep.subr.mxu0 0.0
    %1432 = vmatpush1.xpose.msra.mxu0 0.0
    %1433 = vmatprep.subr.mxu0 0.0
    %1434 = vmatpush1.xpose.msra.mxu0 0.0
    %1435 = vmatprep.mubr.f32.mxu0 0.0
    %1436 = vmatmul.mubr.f32.gmra.mrb[0].mxu0 %v1367
    %v1437 = vpop.f32.mrb[0].mxu0
    %v1438 = vadd.f32 %v367, %v1437
    %v1439 = vpop.f32.mrb[0].mxu0
    %1440 = vdwg.mxu0
    %1441 = vrot.lane.b32.xlu0 %v361, 104
    %v1442 = vpop.permute.xlu0 %1441
    %1443 = vrot.lane.b32.xlu0 %v361, 72
    %v1444 = vpop.permute.xlu0 %1443
    %v1445 = vsel %vm377, %v1442, 0
    %v1447 = vsel %vm377, %v1444, 0
    %1449 = vmatprep.subr.mxu0 0.0
    %1450 = vmatpush1.xpose.msra.mxu0 %v1447
    %1451 = vmatprep.subr.mxu0 0.0
    %1452 = vmatpush1.xpose.msra.mxu0 0.0
    %1453 = vmatprep.subr.mxu0 0.0
    %1454 = vmatpush1.xpose.msra.mxu0 0.0
    %1455 = vmatprep.subr.mxu0 0.0
    %1456 = vmatpush1.xpose.msra.mxu0 0.0
    %1457 = vmatprep.subr.mxu0 0.0
    %1458 = vmatpush1.xpose.msra.mxu0 0.0
    %1459 = vmatprep.subr.mxu0 0.0
    %1460 = vmatpush1.xpose.msra.mxu0 0.0
    %1461 = vmatprep.subr.mxu0 0.0
    %1462 = vmatpush1.xpose.msra.mxu0 0.0
    %1463 = vmatprep.subr.mxu0 0.0
    %1464 = vmatpush1.xpose.msra.mxu0 0.0
    %1465 = vmatprep.subr.mxu0 0.0
    %1466 = vmatpush1.xpose.msra.mxu0 0.0
    %1467 = vmatprep.subr.mxu0 0.0
    %1468 = vmatpush1.xpose.msra.mxu0 0.0
    %1469 = vmatprep.subr.mxu0 0.0
    %1470 = vmatpush1.xpose.msra.mxu0 0.0
    %1471 = vmatprep.subr.mxu0 0.0
    %1472 = vmatpush1.xpose.msra.mxu0 0.0
    %1473 = vmatprep.subr.mxu0 0.0
    %1474 = vmatpush1.xpose.msra.mxu0 0.0
    %1475 = vmatprep.subr.mxu0 0.0
    %1476 = vmatpush1.xpose.msra.mxu0 0.0
    %1477 = vmatprep.subr.mxu0 0.0
    %1478 = vmatpush1.xpose.msra.mxu0 0.0
    %1479 = vmatprep.subr.mxu0 0.0
    %1480 = vmatpush1.xpose.msra.mxu0 0.0
    %1481 = vmatprep.subr.mxu0 0.0
    %1482 = vmatpush1.xpose.msra.mxu0 0.0
    %1483 = vmatprep.subr.mxu0 0.0
    %1484 = vmatpush1.xpose.msra.mxu0 0.0
    %1485 = vmatprep.subr.mxu0 0.0
    %1486 = vmatpush1.xpose.msra.mxu0 0.0
    %1487 = vmatprep.subr.mxu0 0.0
    %1488 = vmatpush1.xpose.msra.mxu0 0.0
    %1489 = vmatprep.subr.mxu0 0.0
    %1490 = vmatpush1.xpose.msra.mxu0 0.0
    %1491 = vmatprep.subr.mxu0 0.0
    %1492 = vmatpush1.xpose.msra.mxu0 0.0
    %1493 = vmatprep.subr.mxu0 0.0
    %1494 = vmatpush1.xpose.msra.mxu0 0.0
    %1495 = vmatprep.subr.mxu0 0.0
    %1496 = vmatpush1.xpose.msra.mxu0 0.0
    %1497 = vmatprep.subr.mxu0 0.0
    %1498 = vmatpush1.xpose.msra.mxu0 0.0
    %1499 = vmatprep.subr.mxu0 0.0
    %1500 = vmatpush1.xpose.msra.mxu0 0.0
    %1501 = vmatprep.subr.mxu0 0.0
    %1502 = vmatpush1.xpose.msra.mxu0 0.0
    %1503 = vmatprep.subr.mxu0 0.0
    %1504 = vmatpush1.xpose.msra.mxu0 0.0
    %1505 = vmatprep.subr.mxu0 0.0
    %1506 = vmatpush1.xpose.msra.mxu0 0.0
    %1507 = vmatprep.subr.mxu0 0.0
    %1508 = vmatpush1.xpose.msra.mxu0 0.0
    %1509 = vmatprep.subr.mxu0 0.0
    %1510 = vmatpush1.xpose.msra.mxu0 0.0
    %1511 = vmatprep.subr.mxu0 0.0
    %1512 = vmatpush1.xpose.msra.mxu0 0.0
    %1513 = vmatprep.mubr.f32.mxu0 0.0
    %1514 = vmatmul.mubr.f32.gmra.mrb[0].mxu0 %v1445
    %v1515 = vpop.f32.mrb[0].mxu0
    %v1516 = vadd.f32 %v371, %v1515
    %v1517 = vpop.f32.mrb[0].mxu0
    %1518 = vdwg.mxu0
    %v1519 = vsel %vm377, %v1438, -inf
    %1520 = vmax.xlane.f32.xlu0 %v1519
    %v1521 = vpop.xlane.xlu0 %1520
    %v1522 = vsel %vm377, %v1516, -inf
    %1523 = vmax.xlane.f32.xlu0 %v1522
    %v1524 = vpop.xlane.xlu0 %1523
    %v1525 = vsub.f32 %v1438, %v1521
    %v1526 = vsub.f32 %v1516, %v1524
    %v1527 = vmul.f32 %v1525, 1.442695
    %v1528 = vpow.pop %v1527
    %v1529 = vmul.f32 %v1526, 1.442695
    %v1530 = vpow.pop %v1529
    %v1531 = vsel %vm377, %v1528, 0.0
    %1532 = vadd.xlane.f32.xlu0 %v1531
    %v1533 = vpop.xlane.xlu0 %1532
    %v1534 = vsel %vm377, %v1530, 0.0
    %1535 = vadd.xlane.f32.xlu0 %v1534
    %v1536 = vpop.xlane.xlu0 %1535
    %v1537 = vrcp.pop %v1533
    %v1538 = vrcp.pop %v1536
    %v1539 = vmul.f32 %v1528, %v1537
    %v1540 = vmul.f32 %v1530, %v1538
    %1541 = vrot.lane.b32.xlu0 %v356, 40
    %v1542 = vpop.permute.xlu0 %1541
    %v1545 = vsel %vm377, %v1539, 0
    %1547 = vmatprep.subr.mxu0 0.0
    %1548 = vmatpush1.msra.mxu0 %v1542
    %1549 = vmatprep.subr.mxu0 0.0
    %1550 = vmatpush1.msra.mxu0 0.0
    %1551 = vmatprep.subr.mxu0 0.0
    %1552 = vmatpush1.msra.mxu0 0.0
    %1553 = vmatprep.subr.mxu0 0.0
    %1554 = vmatpush1.msra.mxu0 0.0
    %1555 = vmatprep.subr.mxu0 0.0
    %1556 = vmatpush1.msra.mxu0 0.0
    %1557 = vmatprep.subr.mxu0 0.0
    %1558 = vmatpush1.msra.mxu0 0.0
    %1559 = vmatprep.subr.mxu0 0.0
    %1560 = vmatpush1.msra.mxu0 0.0
    %1561 = vmatprep.subr.mxu0 0.0
    %1562 = vmatpush1.msra.mxu0 0.0
    %1563 = vmatprep.subr.mxu0 0.0
    %1564 = vmatpush1.msra.mxu0 0.0
    %1565 = vmatprep.subr.mxu0 0.0
    %1566 = vmatpush1.msra.mxu0 0.0
    %1567 = vmatprep.subr.mxu0 0.0
    %1568 = vmatpush1.msra.mxu0 0.0
    %1569 = vmatprep.subr.mxu0 0.0
    %1570 = vmatpush1.msra.mxu0 0.0
    %1571 = vmatprep.subr.mxu0 0.0
    %1572 = vmatpush1.msra.mxu0 0.0
    %1573 = vmatprep.subr.mxu0 0.0
    %1574 = vmatpush1.msra.mxu0 0.0
    %1575 = vmatprep.subr.mxu0 0.0
    %1576 = vmatpush1.msra.mxu0 0.0
    %1577 = vmatprep.subr.mxu0 0.0
    %1578 = vmatpush1.msra.mxu0 0.0
    %1579 = vmatprep.subr.mxu0 0.0
    %1580 = vmatpush1.msra.mxu0 0.0
    %1581 = vmatprep.subr.mxu0 0.0
    %1582 = vmatpush1.msra.mxu0 0.0
    %1583 = vmatprep.subr.mxu0 0.0
    %1584 = vmatpush1.msra.mxu0 0.0
    %1585 = vmatprep.subr.mxu0 0.0
    %1586 = vmatpush1.msra.mxu0 0.0
    %1587 = vmatprep.subr.mxu0 0.0
    %1588 = vmatpush1.msra.mxu0 0.0
    %1589 = vmatprep.subr.mxu0 0.0
    %1590 = vmatpush1.msra.mxu0 0.0
    %1591 = vmatprep.subr.mxu0 0.0
    %1592 = vmatpush1.msra.mxu0 0.0
    %1593 = vmatprep.subr.mxu0 0.0
    %1594 = vmatpush1.msra.mxu0 0.0
    %1595 = vmatprep.subr.mxu0 0.0
    %1596 = vmatpush1.msra.mxu0 0.0
    %1597 = vmatprep.subr.mxu0 0.0
    %1598 = vmatpush1.msra.mxu0 0.0
    %1599 = vmatprep.subr.mxu0 0.0
    %1600 = vmatpush1.msra.mxu0 0.0
    %1601 = vmatprep.subr.mxu0 0.0
    %1602 = vmatpush1.msra.mxu0 0.0
    %1603 = vmatprep.subr.mxu0 0.0
    %1604 = vmatpush1.msra.mxu0 0.0
    %1605 = vmatprep.subr.mxu0 0.0
    %1606 = vmatpush1.msra.mxu0 0.0
    %1607 = vmatprep.subr.mxu0 0.0
    %1608 = vmatpush1.msra.mxu0 0.0
    %1609 = vmatprep.subr.mxu0 0.0
    %1610 = vmatpush1.msra.mxu0 0.0
    %1611 = vmatprep.mubr.f32.mxu0 0.0
    %1612 = vmatmul.mubr.f32.gmra.mrb[0].mxu0 %v1545
    %v1613 = vpop.f32.mrb[0].mxu0
    %v1614 = vadd.f32 0.0, %v1613
    %v1615 = vpop.f32.mrb[0].mxu0
    %1616 = vdwg.mxu0
    %1617 = vrot.lane.b32.xlu0 %v361, 40
    %v1618 = vpop.permute.xlu0 %1617
    %v1621 = vsel %vm377, %v1540, 0
    %1623 = vmatprep.subr.mxu0 0.0
    %1624 = vmatpush1.msra.mxu0 %v1618
    %1625 = vmatprep.subr.mxu0 0.0
    %1626 = vmatpush1.msra.mxu0 0.0
    %1627 = vmatprep.subr.mxu0 0.0
    %1628 = vmatpush1.msra.mxu0 0.0
    %1629 = vmatprep.subr.mxu0 0.0
    %1630 = vmatpush1.msra.mxu0 0.0
    %1631 = vmatprep.subr.mxu0 0.0
    %1632 = vmatpush1.msra.mxu0 0.0
    %1633 = vmatprep.subr.mxu0 0.0
    %1634 = vmatpush1.msra.mxu0 0.0
    %1635 = vmatprep.subr.mxu0 0.0
    %1636 = vmatpush1.msra.mxu0 0.0
    %1637 = vmatprep.subr.mxu0 0.0
    %1638 = vmatpush1.msra.mxu0 0.0
    %1639 = vmatprep.subr.mxu0 0.0
    %1640 = vmatpush1.msra.mxu0 0.0
    %1641 = vmatprep.subr.mxu0 0.0
    %1642 = vmatpush1.msra.mxu0 0.0
    %1643 = vmatprep.subr.mxu0 0.0
    %1644 = vmatpush1.msra.mxu0 0.0
    %1645 = vmatprep.subr.mxu0 0.0
    %1646 = vmatpush1.msra.mxu0 0.0
    %1647 = vmatprep.subr.mxu0 0.0
    %1648 = vmatpush1.msra.mxu0 0.0
    %1649 = vmatprep.subr.mxu0 0.0
    %1650 = vmatpush1.msra.mxu0 0.0
    %1651 = vmatprep.subr.mxu0 0.0
    %1652 = vmatpush1.msra.mxu0 0.0
    %1653 = vmatprep.subr.mxu0 0.0
    %1654 = vmatpush1.msra.mxu0 0.0
    %1655 = vmatprep.subr.mxu0 0.0
    %1656 = vmatpush1.msra.mxu0 0.0
    %1657 = vmatprep.subr.mxu0 0.0
    %1658 = vmatpush1.msra.mxu0 0.0
    %1659 = vmatprep.subr.mxu0 0.0
    %1660 = vmatpush1.msra.mxu0 0.0
    %1661 = vmatprep.subr.mxu0 0.0
    %1662 = vmatpush1.msra.mxu0 0.0
    %1663 = vmatprep.subr.mxu0 0.0
    %1664 = vmatpush1.msra.mxu0 0.0
    %1665 = vmatprep.subr.mxu0 0.0
    %1666 = vmatpush1.msra.mxu0 0.0
    %1667 = vmatprep.subr.mxu0 0.0
    %1668 = vmatpush1.msra.mxu0 0.0
    %1669 = vmatprep.subr.mxu0 0.0
    %1670 = vmatpush1.msra.mxu0 0.0
    %1671 = vmatprep.subr.mxu0 0.0
    %1672 = vmatpush1.msra.mxu0 0.0
    %1673 = vmatprep.subr.mxu0 0.0
    %1674 = vmatpush1.msra.mxu0 0.0
    %1675 = vmatprep.subr.mxu0 0.0
    %1676 = vmatpush1.msra.mxu0 0.0
    %1677 = vmatprep.subr.mxu0 0.0
    %1678 = vmatpush1.msra.mxu0 0.0
    %1679 = vmatprep.subr.mxu0 0.0
    %1680 = vmatpush1.msra.mxu0 0.0
    %1681 = vmatprep.subr.mxu0 0.0
    %1682 = vmatpush1.msra.mxu0 0.0
    %1683 = vmatprep.subr.mxu0 0.0
    %1684 = vmatpush1.msra.mxu0 0.0
    %1685 = vmatprep.subr.mxu0 0.0
    %1686 = vmatpush1.msra.mxu0 0.0
    %1687 = vmatprep.mubr.f32.mxu0 0.0
    %1688 = vmatmul.mubr.f32.gmra.mrb[0].mxu0 %v1621
    %v1689 = vpop.f32.mrb[0].mxu0
    %v1690 = vadd.f32 0.0, %v1689
    %v1691 = vpop.f32.mrb[0].mxu0
    %1692 = vdwg.mxu0
    %1695 = vrot.lane.b32.xlu0 %v954, 8
    %v1696 = vpop.permute.xlu0 %1695
    %1697 = vrot.lane.b32.xlu0 %v1030, 8
    %v1698 = vpop.permute.xlu0 %1697
    %1703 = vrot.lane.b32.xlu0 %v1284, 16
    %v1704 = vpop.permute.xlu0 %1703
    %1705 = vrot.lane.b32.xlu0 %v1360, 16
    %v1706 = vpop.permute.xlu0 %1705
    %1711 = vrot.lane.b32.xlu0 %v1614, 24
    %v1712 = vpop.permute.xlu0 %1711
    %1713 = vrot.lane.b32.xlu0 %v1690, 24
    %v1714 = vpop.permute.xlu0 %1713
    %v1717 = vsel %vm377, %v624, %v1696
    %v1718 = vsel %vm377, %v700, %v1698
    %vm1719 = vcmask 130048
    %v1720 = vsel %vm1719, %v1717, %v1704
    %v1721 = vsel %vm1719, %v1718, %v1706
    %vm1722 = vcmask 195584
    %v1723 = vsel %vm1722, %v1720, %v1712
    %v1724 = vsel %vm1722, %v1721, %v1714
    %v1725 = vld [vmem:[#allocation4 + $0x9] sm:$0x1]
    %v1726 = vlaneseq
    %v1727 = vshrl.u32 %v1726, 7
    %v1728 = vsub.s32 0, %v1727
    %v1729 = vrot.slane %v1725, %v1728
    %v1731 = vsel %vm185, %v1723, 0
    %v1734 = vsel %vm185, %v1724, 0
    %1736 = vmatprep.subr.mxu0 0.0
    %1737 = vmatpush1.msra.mxu0 %v262
    %1738 = vmatprep.subr.mxu0 0.0
    %1739 = vmatpush1.msra.mxu0 %v263
    %1740 = vmatprep.subr.mxu0 0.0
    %1741 = vmatpush1.msra.mxu0 %v264
    %1742 = vmatprep.subr.mxu0 0.0
    %1743 = vmatpush1.msra.mxu0 %v265
    %1744 = vmatprep.subr.mxu0 0.0
    %1745 = vmatpush1.msra.mxu0 0.0
    %1746 = vmatprep.subr.mxu0 0.0
    %1747 = vmatpush1.msra.mxu0 0.0
    %1748 = vmatprep.subr.mxu0 0.0
    %1749 = vmatpush1.msra.mxu0 0.0
    %1750 = vmatprep.subr.mxu0 0.0
    %1751 = vmatpush1.msra.mxu0 0.0
    %1752 = vmatprep.subr.mxu0 0.0
    %1753 = vmatpush1.msra.mxu0 0.0
    %1754 = vmatprep.subr.mxu0 0.0
    %1755 = vmatpush1.msra.mxu0 0.0
    %1756 = vmatprep.subr.mxu0 0.0
    %1757 = vmatpush1.msra.mxu0 0.0
    %1758 = vmatprep.subr.mxu0 0.0
    %1759 = vmatpush1.msra.mxu0 0.0
    %1760 = vmatprep.subr.mxu0 0.0
    %1761 = vmatpush1.msra.mxu0 0.0
    %1762 = vmatprep.subr.mxu0 0.0
    %1763 = vmatpush1.msra.mxu0 0.0
    %1764 = vmatprep.subr.mxu0 0.0
    %1765 = vmatpush1.msra.mxu0 0.0
    %1766 = vmatprep.subr.mxu0 0.0
    %1767 = vmatpush1.msra.mxu0 0.0
    %1768 = vmatprep.subr.mxu0 0.0
    %1769 = vmatpush1.msra.mxu0 0.0
    %1770 = vmatprep.subr.mxu0 0.0
    %1771 = vmatpush1.msra.mxu0 0.0
    %1772 = vmatprep.subr.mxu0 0.0
    %1773 = vmatpush1.msra.mxu0 0.0
    %1774 = vmatprep.subr.mxu0 0.0
    %1775 = vmatpush1.msra.mxu0 0.0
    %1776 = vmatprep.subr.mxu0 0.0
    %1777 = vmatpush1.msra.mxu0 0.0
    %1778 = vmatprep.subr.mxu0 0.0
    %1779 = vmatpush1.msra.mxu0 0.0
    %1780 = vmatprep.subr.mxu0 0.0
    %1781 = vmatpush1.msra.mxu0 0.0
    %1782 = vmatprep.subr.mxu0 0.0
    %1783 = vmatpush1.msra.mxu0 0.0
    %1784 = vmatprep.subr.mxu0 0.0
    %1785 = vmatpush1.msra.mxu0 0.0
    %1786 = vmatprep.subr.mxu0 0.0
    %1787 = vmatpush1.msra.mxu0 0.0
    %1788 = vmatprep.subr.mxu0 0.0
    %1789 = vmatpush1.msra.mxu0 0.0
    %1790 = vmatprep.subr.mxu0 0.0
    %1791 = vmatpush1.msra.mxu0 0.0
    %1792 = vmatprep.subr.mxu0 0.0
    %1793 = vmatpush1.msra.mxu0 0.0
    %1794 = vmatprep.subr.mxu0 0.0
    %1795 = vmatpush1.msra.mxu0 0.0
    %1796 = vmatprep.subr.mxu0 0.0
    %1797 = vmatpush1.msra.mxu0 0.0
    %1798 = vmatprep.subr.mxu0 0.0
    %1799 = vmatpush1.msra.mxu0 0.0
    %1800 = vmatprep.mubr.f32.mxu0 0.0
    %1801 = vmatmul.mubr.f32.gmra.mrb[0].mxu0 %v1731
    %v1802 = vpop.f32.mrb[0].mxu0
    %v1803 = vadd.f32 %v1729, %v1802
    %v1804 = vpop.f32.mrb[0].mxu0
    %1805 = vmatprep.mubr.f32.mxu0 0.0
    %1806 = vmatmul.mubr.f32.gmra.mrb[0].mxu0 %v1734
    %v1807 = vpop.f32.mrb[0].mxu0
    %v1808 = vadd.f32 %v1729, %v1807
    %v1809 = vpop.f32.mrb[0].mxu0
    %1810 = vdwg.mxu0
    %v1811 = vadd.f32 %v229, %v1803
    %v1812 = vadd.f32 %v230, %v1808
    %v1813 = vld [vmem:[#allocation4 + $0xa] sm:$0x1]
    %v1814 = vld [vmem:[#allocation4 + $0xb] sm:$0x1]
    %v1815 = vsel %vm185, %v1811, 0.0
    %1816 = vadd.xlane.f32.xlu0 %v1815
    %v1817 = vpop.xlane.xlu0 %1816
    %v1818 = vsel %vm185, %v1812, 0.0
    %1819 = vadd.xlane.f32.xlu0 %v1818
    %v1820 = vpop.xlane.xlu0 %1819
    %v1821 = vmul.f32 %v1817, %v192
    %v1822 = vmul.f32 %v1820, %v192
    %v1823 = vmul.f32 %v1811, %v1811
    %v1824 = vmul.f32 %v1812, %v1812
    %v1825 = vsel %vm185, %v1823, 0.0
    %1826 = vadd.xlane.f32.xlu0 %v1825
    %v1827 = vpop.xlane.xlu0 %1826
    %v1828 = vsel %vm185, %v1824, 0.0
    %1829 = vadd.xlane.f32.xlu0 %v1828
    %v1830 = vpop.xlane.xlu0 %1829
    %v1831 = vmul.f32 %v1827, %v192
    %v1832 = vmul.f32 %v1830, %v192
    %v1833 = vmul.f32 %v1821, %v1821
    %v1834 = vmul.f32 %v1822, %v1822
    %v1835 = vsub.f32 %v1831, %v1833
    %v1836 = vsub.f32 %v1832, %v1834
    %v1837 = vmax.f32 %v1835, 0.0
    %v1838 = vmax.f32 %v1836, 0.0
    %v1839 = vsub.f32 %v1811, %v1821
    %v1840 = vsub.f32 %v1812, %v1822
    %v1841 = vadd.f32 %v1837, 1e-12
    %v1842 = vadd.f32 %v1838, 1e-12
    %v1843 = vrsqrt.pop %v1841
    %v1844 = vrsqrt.pop %v1842
    %v1845 = vmul.f32 %v1839, %v1843
    %v1846 = vmul.f32 %v1840, %v1844
    %v1847 = vlaneseq
    %v1848 = vshrl.u32 %v1847, 7
    %v1849 = vsub.s32 0, %v1848
    %v1850 = vrot.slane %v1813, %v1849
    %v1851 = vmul.f32 %v1845, %v1850
    %v1852 = vmul.f32 %v1846, %v1850
    %v1853 = vlaneseq
    %v1854 = vshrl.u32 %v1853, 7
    %v1855 = vsub.s32 0, %v1854
    %v1856 = vrot.slane %v1814, %v1855
    %v1857 = vadd.f32 %v1851, %v1856
    %v1858 = vadd.f32 %v1852, %v1856
    %v1859 = vld [vmem:[#allocation4 + $0xc] sm:$0x1]
    %v1860 = vlaneseq
    %v1861 = vshrl.u32 %v1860, 7
    %v1862 = vsub.s32 0, %v1861
    %v1863 = vrot.slane %v1859, %v1862
    %v1865 = vsel %vm185, %v1857, 0
    %v1868 = vsel %vm185, %v1858, 0
    %1870 = vmatprep.subr.mxu0 0.0
    %1871 = vmatpush1.msra.mxu0 %v266
    %1872 = vmatprep.subr.mxu0 0.0
    %1873 = vmatpush1.msra.mxu0 %v267
    %1874 = vmatprep.subr.mxu0 0.0
    %1875 = vmatpush1.msra.mxu0 %v268
    %1876 = vmatprep.subr.mxu0 0.0
    %1877 = vmatpush1.msra.mxu0 %v269
    %1878 = vmatprep.subr.mxu0 0.0
    %1879 = vmatpush1.msra.mxu0 0.0
    %1880 = vmatprep.subr.mxu0 0.0
    %1881 = vmatpush1.msra.mxu0 0.0
    %1882 = vmatprep.subr.mxu0 0.0
    %1883 = vmatpush1.msra.mxu0 0.0
    %1884 = vmatprep.subr.mxu0 0.0
    %1885 = vmatpush1.msra.mxu0 0.0
    %1886 = vmatprep.subr.mxu0 0.0
    %1887 = vmatpush1.msra.mxu0 0.0
    %1888 = vmatprep.subr.mxu0 0.0
    %1889 = vmatpush1.msra.mxu0 0.0
    %1890 = vmatprep.subr.mxu0 0.0
    %1891 = vmatpush1.msra.mxu0 0.0
    %1892 = vmatprep.subr.mxu0 0.0
    %1893 = vmatpush1.msra.mxu0 0.0
    %1894 = vmatprep.subr.mxu0 0.0
    %1895 = vmatpush1.msra.mxu0 0.0
    %1896 = vmatprep.subr.mxu0 0.0
    %1897 = vmatpush1.msra.mxu0 0.0
    %1898 = vmatprep.subr.mxu0 0.0
    %1899 = vmatpush1.msra.mxu0 0.0
    %1900 = vmatprep.subr.mxu0 0.0
    %1901 = vmatpush1.msra.mxu0 0.0
    %1902 = vmatprep.subr.mxu0 0.0
    %1903 = vmatpush1.msra.mxu0 0.0
    %1904 = vmatprep.subr.mxu0 0.0
    %1905 = vmatpush1.msra.mxu0 0.0
    %1906 = vmatprep.subr.mxu0 0.0
    %1907 = vmatpush1.msra.mxu0 0.0
    %1908 = vmatprep.subr.mxu0 0.0
    %1909 = vmatpush1.msra.mxu0 0.0
    %1910 = vmatprep.subr.mxu0 0.0
    %1911 = vmatpush1.msra.mxu0 0.0
    %1912 = vmatprep.subr.mxu0 0.0
    %1913 = vmatpush1.msra.mxu0 0.0
    %1914 = vmatprep.subr.mxu0 0.0
    %1915 = vmatpush1.msra.mxu0 0.0
    %1916 = vmatprep.subr.mxu0 0.0
    %1917 = vmatpush1.msra.mxu0 0.0
    %1918 = vmatprep.subr.mxu0 0.0
    %1919 = vmatpush1.msra.mxu0 0.0
    %1920 = vmatprep.subr.mxu0 0.0
    %1921 = vmatpush1.msra.mxu0 0.0
    %1922 = vmatprep.subr.mxu0 0.0
    %1923 = vmatpush1.msra.mxu0 0.0
    %1924 = vmatprep.subr.mxu0 0.0
    %1925 = vmatpush1.msra.mxu0 0.0
    %1926 = vmatprep.subr.mxu0 0.0
    %1927 = vmatpush1.msra.mxu0 0.0
    %1928 = vmatprep.subr.mxu0 0.0
    %1929 = vmatpush1.msra.mxu0 0.0
    %1930 = vmatprep.subr.mxu0 0.0
    %1931 = vmatpush1.msra.mxu0 0.0
    %1932 = vmatprep.subr.mxu0 0.0
    %1933 = vmatpush1.msra.mxu0 0.0
    %1934 = vmatprep.mubr.f32.mxu0 0.0
    %1935 = vmatmul.mubr.f32.gmra.mrb[0].mxu0 %v1865
    %v1936 = vpop.f32.mrb[0].mxu0
    %v1937 = vadd.f32 %v1863, %v1936
    %v1938 = vpop.f32.mrb[0].mxu0
    %1939 = vmatprep.mubr.f32.mxu0 0.0
    %1940 = vmatmul.mubr.f32.gmra.mrb[0].mxu0 %v1868
    %v1941 = vpop.f32.mrb[0].mxu0
    %v1942 = vadd.f32 %v1863, %v1941
    %v1943 = vpop.f32.mrb[0].mxu0
    %1944 = vdwg.mxu0
    %v1945 = vmul.f32 %v1937, %v1937
    %v1946 = vmul.f32 %v1942, %v1942
    %v1947 = vmul.f32 %v1937, %v1945
    %v1948 = vmul.f32 %v1942, %v1946
    %v1949 = vmul.f32 %v1947, 0.044715
    %v1950 = vmul.f32 %v1948, 0.044715
    %v1951 = vadd.f32 %v1937, %v1949
    %v1952 = vadd.f32 %v1942, %v1950
    %v1953 = vmul.f32 %v1951, 0.7978846
    %v1954 = vmul.f32 %v1952, 0.7978846
    %v1955 = vtanh.pop %v1953
    %v1956 = vtanh.pop %v1954
    %v1957 = vadd.f32 %v1955, 1.0
    %v1958 = vadd.f32 %v1956, 1.0
    %v1959 = vmul.f32 %v1957, 0.5
    %v1960 = vmul.f32 %v1958, 0.5
    %v1961 = vmul.f32 %v1937, %v1959
    %v1962 = vmul.f32 %v1942, %v1960
    %v1963 = vld [vmem:[#allocation4 + $0xd] sm:$0x1]
    %v1964 = vlaneseq
    %v1965 = vshrl.u32 %v1964, 7
    %v1966 = vsub.s32 0, %v1965
    %v1967 = vrot.slane %v1963, %v1966
    %vm1968 = vcmask 523264
    %v1970 = vsel %vm1968, %v1961, 0
    %v1973 = vsel %vm1968, %v1962, 0
    %1975 = vmatprep.subr.mxu0 0.0
    %1976 = vmatpush1.msra.mxu0 %v270
    %1977 = vmatprep.subr.mxu0 0.0
    %1978 = vmatpush1.msra.mxu0 %v271
    %1979 = vmatprep.subr.mxu0 0.0
    %1980 = vmatpush1.msra.mxu0 %v272
    %1981 = vmatprep.subr.mxu0 0.0
    %1982 = vmatpush1.msra.mxu0 %v273
    %1983 = vmatprep.subr.mxu0 0.0
    %1984 = vmatpush1.msra.mxu0 %v274
    %1985 = vmatprep.subr.mxu0 0.0
    %1986 = vmatpush1.msra.mxu0 %v275
    %1987 = vmatprep.subr.mxu0 0.0
    %1988 = vmatpush1.msra.mxu0 %v276
    %1989 = vmatprep.subr.mxu0 0.0
    %1990 = vmatpush1.msra.mxu0 %v277
    %1991 = vmatprep.subr.mxu0 0.0
    %1992 = vmatpush1.msra.mxu0 0.0
    %1993 = vmatprep.subr.mxu0 0.0
    %1994 = vmatpush1.msra.mxu0 0.0
    %1995 = vmatprep.subr.mxu0 0.0
    %1996 = vmatpush1.msra.mxu0 0.0
    %1997 = vmatprep.subr.mxu0 0.0
    %1998 = vmatpush1.msra.mxu0 0.0
    %1999 = vmatprep.subr.mxu0 0.0
    %2000 = vmatpush1.msra.mxu0 0.0
    %2001 = vmatprep.subr.mxu0 0.0
    %2002 = vmatpush1.msra.mxu0 0.0
    %2003 = vmatprep.subr.mxu0 0.0
    %2004 = vmatpush1.msra.mxu0 0.0
    %2005 = vmatprep.subr.mxu0 0.0
    %2006 = vmatpush1.msra.mxu0 0.0
    %2007 = vmatprep.subr.mxu0 0.0
    %2008 = vmatpush1.msra.mxu0 0.0
    %2009 = vmatprep.subr.mxu0 0.0
    %2010 = vmatpush1.msra.mxu0 0.0
    %2011 = vmatprep.subr.mxu0 0.0
    %2012 = vmatpush1.msra.mxu0 0.0
    %2013 = vmatprep.subr.mxu0 0.0
    %2014 = vmatpush1.msra.mxu0 0.0
    %2015 = vmatprep.subr.mxu0 0.0
    %2016 = vmatpush1.msra.mxu0 0.0
    %2017 = vmatprep.subr.mxu0 0.0
    %2018 = vmatpush1.msra.mxu0 0.0
    %2019 = vmatprep.subr.mxu0 0.0
    %2020 = vmatpush1.msra.mxu0 0.0
    %2021 = vmatprep.subr.mxu0 0.0
    %2022 = vmatpush1.msra.mxu0 0.0
    %2023 = vmatprep.subr.mxu0 0.0
    %2024 = vmatpush1.msra.mxu0 0.0
    %2025 = vmatprep.subr.mxu0 0.0
    %2026 = vmatpush1.msra.mxu0 0.0
    %2027 = vmatprep.subr.mxu0 0.0
    %2028 = vmatpush1.msra.mxu0 0.0
    %2029 = vmatprep.subr.mxu0 0.0
    %2030 = vmatpush1.msra.mxu0 0.0
    %2031 = vmatprep.subr.mxu0 0.0
    %2032 = vmatpush1.msra.mxu0 0.0
    %2033 = vmatprep.subr.mxu0 0.0
    %2034 = vmatpush1.msra.mxu0 0.0
    %2035 = vmatprep.subr.mxu0 0.0
    %2036 = vmatpush1.msra.mxu0 0.0
    %2037 = vmatprep.subr.mxu0 0.0
    %2038 = vmatpush1.msra.mxu0 0.0
    %2039 = vmatprep.mubr.f32.mxu0 0.0
    %2040 = vmatmul.mubr.f32.gmra.mrb[0].mxu0 %v1970
    %v2041 = vpop.f32.mrb[0].mxu0
    %v2042 = vadd.f32 %v1967, %v2041
    %v2043 = vpop.f32.mrb[0].mxu0
    %2044 = vmatprep.mubr.f32.mxu0 0.0
    %2045 = vmatmul.mubr.f32.gmra.mrb[0].mxu0 %v1973
    %v2046 = vpop.f32.mrb[0].mxu0
    %v2047 = vadd.f32 %v1967, %v2046
    %v2048 = vpop.f32.mrb[0].mxu0
    %2049 = vdwg.mxu0
    %v2050 = vadd.f32 %v1857, %v2042
    %v2051 = vadd.f32 %v1858, %v2047
    %v2052 = vld [vmem:[#allocation4 + $0xe] sm:$0x1]
    %v2053 = vld [vmem:[#allocation4 + $0xf] sm:$0x1]
    %v2054 = vsel %vm185, %v2050, 0.0
    %2055 = vadd.xlane.f32.xlu0 %v2054
    %v2056 = vpop.xlane.xlu0 %2055
    %v2057 = vsel %vm185, %v2051, 0.0
    %2058 = vadd.xlane.f32.xlu0 %v2057
    %v2059 = vpop.xlane.xlu0 %2058
    %v2060 = vmul.f32 %v2056, %v192
    %v2061 = vmul.f32 %v2059, %v192
    %v2062 = vmul.f32 %v2050, %v2050
    %v2063 = vmul.f32 %v2051, %v2051
    %v2064 = vsel %vm185, %v2062, 0.0
    %2065 = vadd.xlane.f32.xlu0 %v2064
    %v2066 = vpop.xlane.xlu0 %2065
    %v2067 = vsel %vm185, %v2063, 0.0
    %2068 = vadd.xlane.f32.xlu0 %v2067
    %v2069 = vpop.xlane.xlu0 %2068
    %v2070 = vmul.f32 %v2066, %v192
    %v2071 = vmul.f32 %v2069, %v192
    %v2072 = vmul.f32 %v2060, %v2060
    %v2073 = vmul.f32 %v2061, %v2061
    %v2074 = vsub.f32 %v2070, %v2072
    %v2075 = vsub.f32 %v2071, %v2073
    %v2076 = vmax.f32 %v2074, 0.0
    %v2077 = vmax.f32 %v2075, 0.0
    %v2078 = vsub.f32 %v2050, %v2060
    %v2079 = vsub.f32 %v2051, %v2061
    %v2080 = vadd.f32 %v2076, 1e-12
    %v2081 = vadd.f32 %v2077, 1e-12
    %v2082 = vrsqrt.pop %v2080
    %v2083 = vrsqrt.pop %v2081
    %v2084 = vmul.f32 %v2078, %v2082
    %v2085 = vmul.f32 %v2079, %v2083
    %v2086 = vlaneseq
    %v2087 = vshrl.u32 %v2086, 7
    %v2088 = vsub.s32 0, %v2087
    %v2089 = vrot.slane %v2052, %v2088
    %v2090 = vmul.f32 %v2084, %v2089
    %v2091 = vmul.f32 %v2085, %v2089
    %v2092 = vlaneseq
    %v2093 = vshrl.u32 %v2092, 7
    %v2094 = vsub.s32 0, %v2093
    %v2095 = vrot.slane %v2053, %v2094
    %v2096 = vadd.f32 %v2090, %v2095
    %v2097 = vadd.f32 %v2091, %v2095
    %s2098 = scalar_lea.vmem [#allocation2], 256
    %v2099 = vld [vmem:[%s2098] sm:$0xff]
    %v2100 = vld [vmem:[%s2098 + $0x20] sm:$0xff]
    %v2101 = vld [vmem:[%s2098 + $0x40] sm:$0xff]
    %v2102 = vld [vmem:[%s2098 + $0x60] sm:$0xff]
    %v2103 = vld [vmem:[%s2098 + $0x8] sm:$0xff]
    %v2104 = vld [vmem:[%s2098 + $0x28] sm:$0xff]
    %v2105 = vld [vmem:[%s2098 + $0x48] sm:$0xff]
    %v2106 = vld [vmem:[%s2098 + $0x68] sm:$0xff]
    %v2107 = vld [vmem:[%s2098 + $0x10] sm:$0xff]
    %v2108 = vld [vmem:[%s2098 + $0x30] sm:$0xff]
    %v2109 = vld [vmem:[%s2098 + $0x50] sm:$0xff]
    %v2110 = vld [vmem:[%s2098 + $0x70] sm:$0xff]
    %v2111 = vld [vmem:[%s2098 + $0x18] sm:$0xff]
    %v2112 = vld [vmem:[%s2098 + $0x38] sm:$0xff]
    %v2113 = vld [vmem:[%s2098 + $0x58] sm:$0xff]
    %v2114 = vld [vmem:[%s2098 + $0x78] sm:$0xff]
    %v2115 = vld [vmem:[%s2098 + $0x98] sm:$0xff]
    %v2116 = vld [vmem:[%s2098 + $0xb8] sm:$0xff]
    %v2117 = vld [vmem:[%s2098 + $0xd8] sm:$0xff]
    %v2118 = vld [vmem:[%s2098 + $0xf8] sm:$0xff]
    %v2119 = vld [vmem:[#allocation4 + $0x10] sm:$0x1]
    %v2120 = vlaneseq
    %v2121 = vshrl.u32 %v2120, 7
    %v2122 = vsub.s32 0, %v2121
    %v2123 = vrot.slane %v2119, %v2122
    %v2125 = vsel %vm185, %v2096, 0
    %v2128 = vsel %vm185, %v2097, 0
    %2130 = vmatprep.subr.mxu0 0.0
    %2131 = vmatpush1.msra.mxu0 %v2099
    %2132 = vmatprep.subr.mxu0 0.0
    %2133 = vmatpush1.msra.mxu0 %v2100
    %2134 = vmatprep.subr.mxu0 0.0
    %2135 = vmatpush1.msra.mxu0 %v2101
    %2136 = vmatprep.subr.mxu0 0.0
    %2137 = vmatpush1.msra.mxu0 %v2102
    %2138 = vmatprep.subr.mxu0 0.0
    %2139 = vmatpush1.msra.mxu0 0.0
    %2140 = vmatprep.subr.mxu0 0.0
    %2141 = vmatpush1.msra.mxu0 0.0
    %2142 = vmatprep.subr.mxu0 0.0
    %2143 = vmatpush1.msra.mxu0 0.0
    %2144 = vmatprep.subr.mxu0 0.0
    %2145 = vmatpush1.msra.mxu0 0.0
    %2146 = vmatprep.subr.mxu0 0.0
    %2147 = vmatpush1.msra.mxu0 0.0
    %2148 = vmatprep.subr.mxu0 0.0
    %2149 = vmatpush1.msra.mxu0 0.0
    %2150 = vmatprep.subr.mxu0 0.0
    %2151 = vmatpush1.msra.mxu0 0.0
    %2152 = vmatprep.subr.mxu0 0.0
    %2153 = vmatpush1.msra.mxu0 0.0
    %2154 = vmatprep.subr.mxu0 0.0
    %2155 = vmatpush1.msra.mxu0 0.0
    %2156 = vmatprep.subr.mxu0 0.0
    %2157 = vmatpush1.msra.mxu0 0.0
    %2158 = vmatprep.subr.mxu0 0.0
    %2159 = vmatpush1.msra.mxu0 0.0
    %2160 = vmatprep.subr.mxu0 0.0
    %2161 = vmatpush1.msra.mxu0 0.0
    %2162 = vmatprep.subr.mxu0 0.0
    %2163 = vmatpush1.msra.mxu0 0.0
    %2164 = vmatprep.subr.mxu0 0.0
    %2165 = vmatpush1.msra.mxu0 0.0
    %2166 = vmatprep.subr.mxu0 0.0
    %2167 = vmatpush1.msra.mxu0 0.0
    %2168 = vmatprep.subr.mxu0 0.0
    %2169 = vmatpush1.msra.mxu0 0.0
    %2170 = vmatprep.subr.mxu0 0.0
    %2171 = vmatpush1.msra.mxu0 0.0
    %2172 = vmatprep.subr.mxu0 0.0
    %2173 = vmatpush1.msra.mxu0 0.0
    %2174 = vmatprep.subr.mxu0 0.0
    %2175 = vmatpush1.msra.mxu0 0.0
    %2176 = vmatprep.subr.mxu0 0.0
    %2177 = vmatpush1.msra.mxu0 0.0
    %2178 = vmatprep.subr.mxu0 0.0
    %2179 = vmatpush1.msra.mxu0 0.0
    %2180 = vmatprep.subr.mxu0 0.0
    %2181 = vmatpush1.msra.mxu0 0.0
    %2182 = vmatprep.subr.mxu0 0.0
    %2183 = vmatpush1.msra.mxu0 0.0
    %2184 = vmatprep.subr.mxu0 0.0
    %2185 = vmatpush1.msra.mxu0 0.0
    %2186 = vmatprep.subr.mxu0 0.0
    %2187 = vmatpush1.msra.mxu0 0.0
    %2188 = vmatprep.subr.mxu0 0.0
    %2189 = vmatpush1.msra.mxu0 0.0
    %2190 = vmatprep.subr.mxu0 0.0
    %2191 = vmatpush1.msra.mxu0 0.0
    %2192 = vmatprep.subr.mxu0 0.0
    %2193 = vmatpush1.msra.mxu0 0.0
    %2194 = vmatprep.mubr.f32.mxu0 0.0
    %2195 = vmatmul.mubr.f32.gmra.mrb[0].mxu0 %v2125
    %v2196 = vpop.f32.mrb[0].mxu0
    %v2197 = vadd.f32 %v2123, %v2196
    %v2198 = vpop.f32.mrb[0].mxu0
    %2199 = vmatprep.mubr.f32.mxu0 0.0
    %2200 = vmatmul.mubr.f32.gmra.mrb[0].mxu0 %v2128
    %v2201 = vpop.f32.mrb[0].mxu0
    %v2202 = vadd.f32 %v2123, %v2201
    %v2203 = vpop.f32.mrb[0].mxu0
    %2204 = vdwg.mxu0
    %2206 = vrot.lane.b32.xlu0 %v2197, 96
    %v2207 = vpop.permute.xlu0 %2206
    %v2208 = vsel %vm377, %v2197, 0
    %v2210 = vsel %vm377, %v2207, 0
    %2212 = vmatprep.subr.mxu0 0.0
    %2213 = vmatpush1.xpose.msra.mxu0 %v2210
    %2214 = vmatprep.subr.mxu0 0.0
    %2215 = vmatpush1.xpose.msra.mxu0 0.0
    %2216 = vmatprep.subr.mxu0 0.0
    %2217 = vmatpush1.xpose.msra.mxu0 0.0
    %2218 = vmatprep.subr.mxu0 0.0
    %2219 = vmatpush1.xpose.msra.mxu0 0.0
    %2220 = vmatprep.subr.mxu0 0.0
    %2221 = vmatpush1.xpose.msra.mxu0 0.0
    %2222 = vmatprep.subr.mxu0 0.0
    %2223 = vmatpush1.xpose.msra.mxu0 0.0
    %2224 = vmatprep.subr.mxu0 0.0
    %2225 = vmatpush1.xpose.msra.mxu0 0.0
    %2226 = vmatprep.subr.mxu0 0.0
    %2227 = vmatpush1.xpose.msra.mxu0 0.0
    %2228 = vmatprep.subr.mxu0 0.0
    %2229 = vmatpush1.xpose.msra.mxu0 0.0
    %2230 = vmatprep.subr.mxu0 0.0
    %2231 = vmatpush1.xpose.msra.mxu0 0.0
    %2232 = vmatprep.subr.mxu0 0.0
    %2233 = vmatpush1.xpose.msra.mxu0 0.0
    %2234 = vmatprep.subr.mxu0 0.0
    %2235 = vmatpush1.xpose.msra.mxu0 0.0
    %2236 = vmatprep.subr.mxu0 0.0
    %2237 = vmatpush1.xpose.msra.mxu0 0.0
    %2238 = vmatprep.subr.mxu0 0.0
    %2239 = vmatpush1.xpose.msra.mxu0 0.0
    %2240 = vmatprep.subr.mxu0 0.0
    %2241 = vmatpush1.xpose.msra.mxu0 0.0
    %2242 = vmatprep.subr.mxu0 0.0
    %2243 = vmatpush1.xpose.msra.mxu0 0.0
    %2244 = vmatprep.subr.mxu0 0.0
    %2245 = vmatpush1.xpose.msra.mxu0 0.0
    %2246 = vmatprep.subr.mxu0 0.0
    %2247 = vmatpush1.xpose.msra.mxu0 0.0
    %2248 = vmatprep.subr.mxu0 0.0
    %2249 = vmatpush1.xpose.msra.mxu0 0.0
    %2250 = vmatprep.subr.mxu0 0.0
    %2251 = vmatpush1.xpose.msra.mxu0 0.0
    %2252 = vmatprep.subr.mxu0 0.0
    %2253 = vmatpush1.xpose.msra.mxu0 0.0
    %2254 = vmatprep.subr.mxu0 0.0
    %2255 = vmatpush1.xpose.msra.mxu0 0.0
    %2256 = vmatprep.subr.mxu0 0.0
    %2257 = vmatpush1.xpose.msra.mxu0 0.0
    %2258 = vmatprep.subr.mxu0 0.0
    %2259 = vmatpush1.xpose.msra.mxu0 0.0
    %2260 = vmatprep.subr.mxu0 0.0
    %2261 = vmatpush1.xpose.msra.mxu0 0.0
    %2262 = vmatprep.subr.mxu0 0.0
    %2263 = vmatpush1.xpose.msra.mxu0 0.0
    %2264 = vmatprep.subr.mxu0 0.0
    %2265 = vmatpush1.xpose.msra.mxu0 0.0
    %2266 = vmatprep.subr.mxu0 0.0
    %2267 = vmatpush1.xpose.msra.mxu0 0.0
    %2268 = vmatprep.subr.mxu0 0.0
    %2269 = vmatpush1.xpose.msra.mxu0 0.0
    %2270 = vmatprep.subr.mxu0 0.0
    %2271 = vmatpush1.xpose.msra.mxu0 0.0
    %2272 = vmatprep.subr.mxu0 0.0
    %2273 = vmatpush1.xpose.msra.mxu0 0.0
    %2274 = vmatprep.subr.mxu0 0.0
    %2275 = vmatpush1.xpose.msra.mxu0 0.0
    %2276 = vmatprep.mubr.f32.mxu0 0.0
    %2277 = vmatmul.mubr.f32.gmra.mrb[0].mxu0 %v2208
    %v2278 = vpop.f32.mrb[0].mxu0
    %v2279 = vadd.f32 %v367, %v2278
    %v2280 = vpop.f32.mrb[0].mxu0
    %2281 = vdwg.mxu0
    %2283 = vrot.lane.b32.xlu0 %v2202, 96
    %v2284 = vpop.permute.xlu0 %2283
    %v2285 = vsel %vm377, %v2202, 0
    %v2287 = vsel %vm377, %v2284, 0
    %2289 = vmatprep.subr.mxu0 0.0
    %2290 = vmatpush1.xpose.msra.mxu0 %v2287
    %2291 = vmatprep.subr.mxu0 0.0
    %2292 = vmatpush1.xpose.msra.mxu0 0.0
    %2293 = vmatprep.subr.mxu0 0.0
    %2294 = vmatpush1.xpose.msra.mxu0 0.0
    %2295 = vmatprep.subr.mxu0 0.0
    %2296 = vmatpush1.xpose.msra.mxu0 0.0
    %2297 = vmatprep.subr.mxu0 0.0
    %2298 = vmatpush1.xpose.msra.mxu0 0.0
    %2299 = vmatprep.subr.mxu0 0.0
    %2300 = vmatpush1.xpose.msra.mxu0 0.0
    %2301 = vmatprep.subr.mxu0 0.0
    %2302 = vmatpush1.xpose.msra.mxu0 0.0
    %2303 = vmatprep.subr.mxu0 0.0
    %2304 = vmatpush1.xpose.msra.mxu0 0.0
    %2305 = vmatprep.subr.mxu0 0.0
    %2306 = vmatpush1.xpose.msra.mxu0 0.0
    %2307 = vmatprep.subr.mxu0 0.0
    %2308 = vmatpush1.xpose.msra.mxu0 0.0
    %2309 = vmatprep.subr.mxu0 0.0
    %2310 = vmatpush1.xpose.msra.mxu0 0.0
    %2311 = vmatprep.subr.mxu0 0.0
    %2312 = vmatpush1.xpose.msra.mxu0 0.0
    %2313 = vmatprep.subr.mxu0 0.0
    %2314 = vmatpush1.xpose.msra.mxu0 0.0
    %2315 = vmatprep.subr.mxu0 0.0
    %2316 = vmatpush1.xpose.msra.mxu0 0.0
    %2317 = vmatprep.subr.mxu0 0.0
    %2318 = vmatpush1.xpose.msra.mxu0 0.0
    %2319 = vmatprep.subr.mxu0 0.0
    %2320 = vmatpush1.xpose.msra.mxu0 0.0
    %2321 = vmatprep.subr.mxu0 0.0
    %2322 = vmatpush1.xpose.msra.mxu0 0.0
    %2323 = vmatprep.subr.mxu0 0.0
    %2324 = vmatpush1.xpose.msra.mxu0 0.0
    %2325 = vmatprep.subr.mxu0 0.0
    %2326 = vmatpush1.xpose.msra.mxu0 0.0
    %2327 = vmatprep.subr.mxu0 0.0
    %2328 = vmatpush1.xpose.msra.mxu0 0.0
    %2329 = vmatprep.subr.mxu0 0.0
    %2330 = vmatpush1.xpose.msra.mxu0 0.0
    %2331 = vmatprep.subr.mxu0 0.0
    %2332 = vmatpush1.xpose.msra.mxu0 0.0
    %2333 = vmatprep.subr.mxu0 0.0
    %2334 = vmatpush1.xpose.msra.mxu0 0.0
    %2335 = vmatprep.subr.mxu0 0.0
    %2336 = vmatpush1.xpose.msra.mxu0 0.0
    %2337 = vmatprep.subr.mxu0 0.0
    %2338 = vmatpush1.xpose.msra.mxu0 0.0
    %2339 = vmatprep.subr.mxu0 0.0
    %2340 = vmatpush1.xpose.msra.mxu0 0.0
    %2341 = vmatprep.subr.mxu0 0.0
    %2342 = vmatpush1.xpose.msra.mxu0 0.0
    %2343 = vmatprep.subr.mxu0 0.0
    %2344 = vmatpush1.xpose.msra.mxu0 0.0
    %2345 = vmatprep.subr.mxu0 0.0
    %2346 = vmatpush1.xpose.msra.mxu0 0.0
    %2347 = vmatprep.subr.mxu0 0.0
    %2348 = vmatpush1.xpose.msra.mxu0 0.0
    %2349 = vmatprep.subr.mxu0 0.0
    %2350 = vmatpush1.xpose.msra.mxu0 0.0
    %2351 = vmatprep.subr.mxu0 0.0
    %2352 = vmatpush1.xpose.msra.mxu0 0.0
    %2353 = vmatprep.mubr.f32.mxu0 0.0
    %2354 = vmatmul.mubr.f32.gmra.mrb[0].mxu0 %v2285
    %v2355 = vpop.f32.mrb[0].mxu0
    %v2356 = vadd.f32 %v371, %v2355
    %v2357 = vpop.f32.mrb[0].mxu0
    %2358 = vdwg.mxu0
    %v2359 = vsel %vm377, %v2279, -inf
    %2360 = vmax.xlane.f32.xlu0 %v2359
    %v2361 = vpop.xlane.xlu0 %2360
    %v2362 = vsel %vm377, %v2356, -inf
    %2363 = vmax.xlane.f32.xlu0 %v2362
    %v2364 = vpop.xlane.xlu0 %2363
    %v2365 = vsub.f32 %v2279, %v2361
    %v2366 = vsub.f32 %v2356, %v2364
    %v2367 = vmul.f32 %v2365, 1.442695
    %v2368 = vpow.pop %v2367
    %v2369 = vmul.f32 %v2366, 1.442695
    %v2370 = vpow.pop %v2369
    %v2371 = vsel %vm377, %v2368, 0.0
    %2372 = vadd.xlane.f32.xlu0 %v2371
    %v2373 = vpop.xlane.xlu0 %2372
    %v2374 = vsel %vm377, %v2370, 0.0
    %2375 = vadd.xlane.f32.xlu0 %v2374
    %v2376 = vpop.xlane.xlu0 %2375
    %v2377 = vrcp.pop %v2373
    %v2378 = vrcp.pop %v2376
    %v2379 = vmul.f32 %v2368, %v2377
    %v2380 = vmul.f32 %v2370, %v2378
    %2381 = vrot.lane.b32.xlu0 %v2197, 64
    %v2382 = vpop.permute.xlu0 %2381
    %v2385 = vsel %vm377, %v2379, 0
    %2387 = vmatprep.subr.mxu0 0.0
    %2388 = vmatpush1.msra.mxu0 %v2382
    %2389 = vmatprep.subr.mxu0 0.0
    %2390 = vmatpush1.msra.mxu0 0.0
    %2391 = vmatprep.subr.mxu0 0.0
    %2392 = vmatpush1.msra.mxu0 0.0
    %2393 = vmatprep.subr.mxu0 0.0
    %2394 = vmatpush1.msra.mxu0 0.0
    %2395 = vmatprep.subr.mxu0 0.0
    %2396 = vmatpush1.msra.mxu0 0.0
    %2397 = vmatprep.subr.mxu0 0.0
    %2398 = vmatpush1.msra.mxu0 0.0
    %2399 = vmatprep.subr.mxu0 0.0
    %2400 = vmatpush1.msra.mxu0 0.0
    %2401 = vmatprep.subr.mxu0 0.0
    %2402 = vmatpush1.msra.mxu0 0.0
    %2403 = vmatprep.subr.mxu0 0.0
    %2404 = vmatpush1.msra.mxu0 0.0
    %2405 = vmatprep.subr.mxu0 0.0
    %2406 = vmatpush1.msra.mxu0 0.0
    %2407 = vmatprep.subr.mxu0 0.0
    %2408 = vmatpush1.msra.mxu0 0.0
    %2409 = vmatprep.subr.mxu0 0.0
    %2410 = vmatpush1.msra.mxu0 0.0
    %2411 = vmatprep.subr.mxu0 0.0
    %2412 = vmatpush1.msra.mxu0 0.0
    %2413 = vmatprep.subr.mxu0 0.0
    %2414 = vmatpush1.msra.mxu0 0.0
    %2415 = vmatprep.subr.mxu0 0.0
    %2416 = vmatpush1.msra.mxu0 0.0
    %2417 = vmatprep.subr.mxu0 0.0
    %2418 = vmatpush1.msra.mxu0 0.0
    %2419 = vmatprep.subr.mxu0 0.0
    %2420 = vmatpush1.msra.mxu0 0.0
    %2421 = vmatprep.subr.mxu0 0.0
    %2422 = vmatpush1.msra.mxu0 0.0
    %2423 = vmatprep.subr.mxu0 0.0
    %2424 = vmatpush1.msra.mxu0 0.0
    %2425 = vmatprep.subr.mxu0 0.0
    %2426 = vmatpush1.msra.mxu0 0.0
    %2427 = vmatprep.subr.mxu0 0.0
    %2428 = vmatpush1.msra.mxu0 0.0
    %2429 = vmatprep.subr.mxu0 0.0
    %2430 = vmatpush1.msra.mxu0 0.0
    %2431 = vmatprep.subr.mxu0 0.0
    %2432 = vmatpush1.msra.mxu0 0.0
    %2433 = vmatprep.subr.mxu0 0.0
    %2434 = vmatpush1.msra.mxu0 0.0
    %2435 = vmatprep.subr.mxu0 0.0
    %2436 = vmatpush1.msra.mxu0 0.0
    %2437 = vmatprep.subr.mxu0 0.0
    %2438 = vmatpush1.msra.mxu0 0.0
    %2439 = vmatprep.subr.mxu0 0.0
    %2440 = vmatpush1.msra.mxu0 0.0
    %2441 = vmatprep.subr.mxu0 0.0
    %2442 = vmatpush1.msra.mxu0 0.0
    %2443 = vmatprep.subr.mxu0 0.0
    %2444 = vmatpush1.msra.mxu0 0.0
    %2445 = vmatprep.subr.mxu0 0.0
    %2446 = vmatpush1.msra.mxu0 0.0
    %2447 = vmatprep.subr.mxu0 0.0
    %2448 = vmatpush1.msra.mxu0 0.0
    %2449 = vmatprep.subr.mxu0 0.0
    %2450 = vmatpush1.msra.mxu0 0.0
    %2451 = vmatprep.mubr.f32.mxu0 0.0
    %2452 = vmatmul.mubr.f32.gmra.mrb[0].mxu0 %v2385
    %v2453 = vpop.f32.mrb[0].mxu0
    %v2454 = vadd.f32 0.0, %v2453
    %v2455 = vpop.f32.mrb[0].mxu0
    %2456 = vdwg.mxu0
    %2457 = vrot.lane.b32.xlu0 %v2202, 64
    %v2458 = vpop.permute.xlu0 %2457
    %v2461 = vsel %vm377, %v2380, 0
    %2463 = vmatprep.subr.mxu0 0.0
    %2464 = vmatpush1.msra.mxu0 %v2458
    %2465 = vmatprep.subr.mxu0 0.0
    %2466 = vmatpush1.msra.mxu0 0.0
    %2467 = vmatprep.subr.mxu0 0.0
    %2468 = vmatpush1.msra.mxu0 0.0
    %2469 = vmatprep.subr.mxu0 0.0
    %2470 = vmatpush1.msra.mxu0 0.0
    %2471 = vmatprep.subr.mxu0 0.0
    %2472 = vmatpush1.msra.mxu0 0.0
    %2473 = vmatprep.subr.mxu0 0.0
    %2474 = vmatpush1.msra.mxu0 0.0
    %2475 = vmatprep.subr.mxu0 0.0
    %2476 = vmatpush1.msra.mxu0 0.0
    %2477 = vmatprep.subr.mxu0 0.0
    %2478 = vmatpush1.msra.mxu0 0.0
    %2479 = vmatprep.subr.mxu0 0.0
    %2480 = vmatpush1.msra.mxu0 0.0
    %2481 = vmatprep.subr.mxu0 0.0
    %2482 = vmatpush1.msra.mxu0 0.0
    %2483 = vmatprep.subr.mxu0 0.0
    %2484 = vmatpush1.msra.mxu0 0.0
    %2485 = vmatprep.subr.mxu0 0.0
    %2486 = vmatpush1.msra.mxu0 0.0
    %2487 = vmatprep.subr.mxu0 0.0
    %2488 = vmatpush1.msra.mxu0 0.0
    %2489 = vmatprep.subr.mxu0 0.0
    %2490 = vmatpush1.msra.mxu0 0.0
    %2491 = vmatprep.subr.mxu0 0.0
    %2492 = vmatpush1.msra.mxu0 0.0
    %2493 = vmatprep.subr.mxu0 0.0
    %2494 = vmatpush1.msra.mxu0 0.0
    %2495 = vmatprep.subr.mxu0 0.0
    %2496 = vmatpush1.msra.mxu0 0.0
    %2497 = vmatprep.subr.mxu0 0.0
    %2498 = vmatpush1.msra.mxu0 0.0
    %2499 = vmatprep.subr.mxu0 0.0
    %2500 = vmatpush1.msra.mxu0 0.0
    %2501 = vmatprep.subr.mxu0 0.0
    %2502 = vmatpush1.msra.mxu0 0.0
    %2503 = vmatprep.subr.mxu0 0.0
    %2504 = vmatpush1.msra.mxu0 0.0
    %2505 = vmatprep.subr.mxu0 0.0
    %2506 = vmatpush1.msra.mxu0 0.0
    %2507 = vmatprep.subr.mxu0 0.0
    %2508 = vmatpush1.msra.mxu0 0.0
    %2509 = vmatprep.subr.mxu0 0.0
    %2510 = vmatpush1.msra.mxu0 0.0
    %2511 = vmatprep.subr.mxu0 0.0
    %2512 = vmatpush1.msra.mxu0 0.0
    %2513 = vmatprep.subr.mxu0 0.0
    %2514 = vmatpush1.msra.mxu0 0.0
    %2515 = vmatprep.subr.mxu0 0.0
    %2516 = vmatpush1.msra.mxu0 0.0
    %2517 = vmatprep.subr.mxu0 0.0
    %2518 = vmatpush1.msra.mxu0 0.0
    %2519 = vmatprep.subr.mxu0 0.0
    %2520 = vmatpush1.msra.mxu0 0.0
    %2521 = vmatprep.subr.mxu0 0.0
    %2522 = vmatpush1.msra.mxu0 0.0
    %2523 = vmatprep.subr.mxu0 0.0
    %2524 = vmatpush1.msra.mxu0 0.0
    %2525 = vmatprep.subr.mxu0 0.0
    %2526 = vmatpush1.msra.mxu0 0.0
    %2527 = vmatprep.mubr.f32.mxu0 0.0
    %2528 = vmatmul.mubr.f32.gmra.mrb[0].mxu0 %v2461
    %v2529 = vpop.f32.mrb[0].mxu0
    %v2530 = vadd.f32 0.0, %v2529
    %v2531 = vpop.f32.mrb[0].mxu0
    %2532 = vdwg.mxu0
    %2533 = vrot.lane.b32.xlu0 %v2197, 120
    %v2534 = vpop.permute.xlu0 %2533
    %2535 = vrot.lane.b32.xlu0 %v2197, 88
    %v2536 = vpop.permute.xlu0 %2535
    %v2537 = vsel %vm377, %v2534, 0
    %v2539 = vsel %vm377, %v2536, 0
    %2541 = vmatprep.subr.mxu0 0.0
    %2542 = vmatpush1.xpose.msra.mxu0 %v2539
    %2543 = vmatprep.subr.mxu0 0.0
    %2544 = vmatpush1.xpose.msra.mxu0 0.0
    %2545 = vmatprep.subr.mxu0 0.0
    %2546 = vmatpush1.xpose.msra.mxu0 0.0
    %2547 = vmatprep.subr.mxu0 0.0
    %2548 = vmatpush1.xpose.msra.mxu0 0.0
    %2549 = vmatprep.subr.mxu0 0.0
    %2550 = vmatpush1.xpose.msra.mxu0 0.0
    %2551 = vmatprep.subr.mxu0 0.0
    %2552 = vmatpush1.xpose.msra.mxu0 0.0
    %2553 = vmatprep.subr.mxu0 0.0
    %2554 = vmatpush1.xpose.msra.mxu0 0.0
    %2555 = vmatprep.subr.mxu0 0.0
    %2556 = vmatpush1.xpose.msra.mxu0 0.0
    %2557 = vmatprep.subr.mxu0 0.0
    %2558 = vmatpush1.xpose.msra.mxu0 0.0
    %2559 = vmatprep.subr.mxu0 0.0
    %2560 = vmatpush1.xpose.msra.mxu0 0.0
    %2561 = vmatprep.subr.mxu0 0.0
    %2562 = vmatpush1.xpose.msra.mxu0 0.0
    %2563 = vmatprep.subr.mxu0 0.0
    %2564 = vmatpush1.xpose.msra.mxu0 0.0
    %2565 = vmatprep.subr.mxu0 0.0
    %2566 = vmatpush1.xpose.msra.mxu0 0.0
    %2567 = vmatprep.subr.mxu0 0.0
    %2568 = vmatpush1.xpose.msra.mxu0 0.0
    %2569 = vmatprep.subr.mxu0 0.0
    %2570 = vmatpush1.xpose.msra.mxu0 0.0
    %2571 = vmatprep.subr.mxu0 0.0
    %2572 = vmatpush1.xpose.msra.mxu0 0.0
    %2573 = vmatprep.subr.mxu0 0.0
    %2574 = vmatpush1.xpose.msra.mxu0 0.0
    %2575 = vmatprep.subr.mxu0 0.0
    %2576 = vmatpush1.xpose.msra.mxu0 0.0
    %2577 = vmatprep.subr.mxu0 0.0
    %2578 = vmatpush1.xpose.msra.mxu0 0.0
    %2579 = vmatprep.subr.mxu0 0.0
    %2580 = vmatpush1.xpose.msra.mxu0 0.0
    %2581 = vmatprep.subr.mxu0 0.0
    %2582 = vmatpush1.xpose.msra.mxu0 0.0
    %2583 = vmatprep.subr.mxu0 0.0
    %2584 = vmatpush1.xpose.msra.mxu0 0.0
    %2585 = vmatprep.subr.mxu0 0.0
    %2586 = vmatpush1.xpose.msra.mxu0 0.0
    %2587 = vmatprep.subr.mxu0 0.0
    %2588 = vmatpush1.xpose.msra.mxu0 0.0
    %2589 = vmatprep.subr.mxu0 0.0
    %2590 = vmatpush1.xpose.msra.mxu0 0.0
    %2591 = vmatprep.subr.mxu0 0.0
    %2592 = vmatpush1.xpose.msra.mxu0 0.0
    %2593 = vmatprep.subr.mxu0 0.0
    %2594 = vmatpush1.xpose.msra.mxu0 0.0
    %2595 = vmatprep.subr.mxu0 0.0
    %2596 = vmatpush1.xpose.msra.mxu0 0.0
    %2597 = vmatprep.subr.mxu0 0.0
    %2598 = vmatpush1.xpose.msra.mxu0 0.0
    %2599 = vmatprep.subr.mxu0 0.0
    %2600 = vmatpush1.xpose.msra.mxu0 0.0
    %2601 = vmatprep.subr.mxu0 0.0
    %2602 = vmatpush1.xpose.msra.mxu0 0.0
    %2603 = vmatprep.subr.mxu0 0.0
    %2604 = vmatpush1.xpose.msra.mxu0 0.0
    %2605 = vmatprep.mubr.f32.mxu0 0.0
    %2606 = vmatmul.mubr.f32.gmra.mrb[0].mxu0 %v2537
    %v2607 = vpop.f32.mrb[0].mxu0
    %v2608 = vadd.f32 %v367, %v2607
    %v2609 = vpop.f32.mrb[0].mxu0
    %2610 = vdwg.mxu0
    %2611 = vrot.lane.b32.xlu0 %v2202, 120
    %v2612 = vpop.permute.xlu0 %2611
    %2613 = vrot.lane.b32.xlu0 %v2202, 88
    %v2614 = vpop.permute.xlu0 %2613
    %v2615 = vsel %vm377, %v2612, 0
    %v2617 = vsel %vm377, %v2614, 0
    %2619 = vmatprep.subr.mxu0 0.0
    %2620 = vmatpush1.xpose.msra.mxu0 %v2617
    %2621 = vmatprep.subr.mxu0 0.0
    %2622 = vmatpush1.xpose.msra.mxu0 0.0
    %2623 = vmatprep.subr.mxu0 0.0
    %2624 = vmatpush1.xpose.msra.mxu0 0.0
    %2625 = vmatprep.subr.mxu0 0.0
    %2626 = vmatpush1.xpose.msra.mxu0 0.0
    %2627 = vmatprep.subr.mxu0 0.0
    %2628 = vmatpush1.xpose.msra.mxu0 0.0
    %2629 = vmatprep.subr.mxu0 0.0
    %2630 = vmatpush1.xpose.msra.mxu0 0.0
    %2631 = vmatprep.subr.mxu0 0.0
    %2632 = vmatpush1.xpose.msra.mxu0 0.0
    %2633 = vmatprep.subr.mxu0 0.0
    %2634 = vmatpush1.xpose.msra.mxu0 0.0
    %2635 = vmatprep.subr.mxu0 0.0
    %2636 = vmatpush1.xpose.msra.mxu0 0.0
    %2637 = vmatprep.subr.mxu0 0.0
    %2638 = vmatpush1.xpose.msra.mxu0 0.0
    %2639 = vmatprep.subr.mxu0 0.0
    %2640 = vmatpush1.xpose.msra.mxu0 0.0
    %2641 = vmatprep.subr.mxu0 0.0
    %2642 = vmatpush1.xpose.msra.mxu0 0.0
    %2643 = vmatprep.subr.mxu0 0.0
    %2644 = vmatpush1.xpose.msra.mxu0 0.0
    %2645 = vmatprep.subr.mxu0 0.0
    %2646 = vmatpush1.xpose.msra.mxu0 0.0
    %2647 = vmatprep.subr.mxu0 0.0
    %2648 = vmatpush1.xpose.msra.mxu0 0.0
    %2649 = vmatprep.subr.mxu0 0.0
    %2650 = vmatpush1.xpose.msra.mxu0 0.0
    %2651 = vmatprep.subr.mxu0 0.0
    %2652 = vmatpush1.xpose.msra.mxu0 0.0
    %2653 = vmatprep.subr.mxu0 0.0
    %2654 = vmatpush1.xpose.msra.mxu0 0.0
    %2655 = vmatprep.subr.mxu0 0.0
    %2656 = vmatpush1.xpose.msra.mxu0 0.0
    %2657 = vmatprep.subr.mxu0 0.0
    %2658 = vmatpush1.xpose.msra.mxu0 0.0
    %2659 = vmatprep.subr.mxu0 0.0
    %2660 = vmatpush1.xpose.msra.mxu0 0.0
    %2661 = vmatprep.subr.mxu0 0.0
    %2662 = vmatpush1.xpose.msra.mxu0 0.0
    %2663 = vmatprep.subr.mxu0 0.0
    %2664 = vmatpush1.xpose.msra.mxu0 0.0
    %2665 = vmatprep.subr.mxu0 0.0
    %2666 = vmatpush1.xpose.msra.mxu0 0.0
    %2667 = vmatprep.subr.mxu0 0.0
    %2668 = vmatpush1.xpose.msra.mxu0 0.0
    %2669 = vmatprep.subr.mxu0 0.0
    %2670 = vmatpush1.xpose.msra.mxu0 0.0
    %2671 = vmatprep.subr.mxu0 0.0
    %2672 = vmatpush1.xpose.msra.mxu0 0.0
    %2673 = vmatprep.subr.mxu0 0.0
    %2674 = vmatpush1.xpose.msra.mxu0 0.0
    %2675 = vmatprep.subr.mxu0 0.0
    %2676 = vmatpush1.xpose.msra.mxu0 0.0
    %2677 = vmatprep.subr.mxu0 0.0
    %2678 = vmatpush1.xpose.msra.mxu0 0.0
    %2679 = vmatprep.subr.mxu0 0.0
    %2680 = vmatpush1.xpose.msra.mxu0 0.0
    %2681 = vmatprep.subr.mxu0 0.0
    %2682 = vmatpush1.xpose.msra.mxu0 0.0
    %2683 = vmatprep.mubr.f32.mxu0 0.0
    %2684 = vmatmul.mubr.f32.gmra.mrb[0].mxu0 %v2615
    %v2685 = vpop.f32.mrb[0].mxu0
    %v2686 = vadd.f32 %v371, %v2685
    %v2687 = vpop.f32.mrb[0].mxu0
    %2688 = vdwg.mxu0
    %v2689 = vsel %vm377, %v2608, -inf
    %2690 = vmax.xlane.f32.xlu0 %v2689
    %v2691 = vpop.xlane.xlu0 %2690
    %v2692 = vsel %vm377, %v2686, -inf
    %2693 = vmax.xlane.f32.xlu0 %v2692
    %v2694 = vpop.xlane.xlu0 %2693
    %v2695 = vsub.f32 %v2608, %v2691
    %v2696 = vsub.f32 %v2686, %v2694
    %v2697 = vmul.f32 %v2695, 1.442695
    %v2698 = vpow.pop %v2697
    %v2699 = vmul.f32 %v2696, 1.442695
    %v2700 = vpow.pop %v2699
    %v2701 = vsel %vm377, %v2698, 0.0
    %2702 = vadd.xlane.f32.xlu0 %v2701
    %v2703 = vpop.xlane.xlu0 %2702
    %v2704 = vsel %vm377, %v2700, 0.0
    %2705 = vadd.xlane.f32.xlu0 %v2704
    %v2706 = vpop.xlane.xlu0 %2705
    %v2707 = vrcp.pop %v2703
    %v2708 = vrcp.pop %v2706
    %v2709 = vmul.f32 %v2698, %v2707
    %v2710 = vmul.f32 %v2700, %v2708
    %2711 = vrot.lane.b32.xlu0 %v2197, 56
    %v2712 = vpop.permute.xlu0 %2711
    %v2715 = vsel %vm377, %v2709, 0
    %2717 = vmatprep.subr.mxu0 0.0
    %2718 = vmatpush1.msra.mxu0 %v2712
    %2719 = vmatprep.subr.mxu0 0.0
    %2720 = vmatpush1.msra.mxu0 0.0
    %2721 = vmatprep.subr.mxu0 0.0
    %2722 = vmatpush1.msra.mxu0 0.0
    %2723 = vmatprep.subr.mxu0 0.0
    %2724 = vmatpush1.msra.mxu0 0.0
    %2725 = vmatprep.subr.mxu0 0.0
    %2726 = vmatpush1.msra.mxu0 0.0
    %2727 = vmatprep.subr.mxu0 0.0
    %2728 = vmatpush1.msra.mxu0 0.0
    %2729 = vmatprep.subr.mxu0 0.0
    %2730 = vmatpush1.msra.mxu0 0.0
    %2731 = vmatprep.subr.mxu0 0.0
    %2732 = vmatpush1.msra.mxu0 0.0
    %2733 = vmatprep.subr.mxu0 0.0
    %2734 = vmatpush1.msra.mxu0 0.0
    %2735 = vmatprep.subr.mxu0 0.0
    %2736 = vmatpush1.msra.mxu0 0.0
    %2737 = vmatprep.subr.mxu0 0.0
    %2738 = vmatpush1.msra.mxu0 0.0
    %2739 = vmatprep.subr.mxu0 0.0
    %2740 = vmatpush1.msra.mxu0 0.0
    %2741 = vmatprep.subr.mxu0 0.0
    %2742 = vmatpush1.msra.mxu0 0.0
    %2743 = vmatprep.subr.mxu0 0.0
    %2744 = vmatpush1.msra.mxu0 0.0
    %2745 = vmatprep.subr.mxu0 0.0
    %2746 = vmatpush1.msra.mxu0 0.0
    %2747 = vmatprep.subr.mxu0 0.0
    %2748 = vmatpush1.msra.mxu0 0.0
    %2749 = vmatprep.subr.mxu0 0.0
    %2750 = vmatpush1.msra.mxu0 0.0
    %2751 = vmatprep.subr.mxu0 0.0
    %2752 = vmatpush1.msra.mxu0 0.0
    %2753 = vmatprep.subr.mxu0 0.0
    %2754 = vmatpush1.msra.mxu0 0.0
    %2755 = vmatprep.subr.mxu0 0.0
    %2756 = vmatpush1.msra.mxu0 0.0
    %2757 = vmatprep.subr.mxu0 0.0
    %2758 = vmatpush1.msra.mxu0 0.0
    %2759 = vmatprep.subr.mxu0 0.0
    %2760 = vmatpush1.msra.mxu0 0.0
    %2761 = vmatprep.subr.mxu0 0.0
    %2762 = vmatpush1.msra.mxu0 0.0
    %2763 = vmatprep.subr.mxu0 0.0
    %2764 = vmatpush1.msra.mxu0 0.0
    %2765 = vmatprep.subr.mxu0 0.0
    %2766 = vmatpush1.msra.mxu0 0.0
    %2767 = vmatprep.subr.mxu0 0.0
    %2768 = vmatpush1.msra.mxu0 0.0
    %2769 = vmatprep.subr.mxu0 0.0
    %2770 = vmatpush1.msra.mxu0 0.0
    %2771 = vmatprep.subr.mxu0 0.0
    %2772 = vmatpush1.msra.mxu0 0.0
    %2773 = vmatprep.subr.mxu0 0.0
    %2774 = vmatpush1.msra.mxu0 0.0
    %2775 = vmatprep.subr.mxu0 0.0
    %2776 = vmatpush1.msra.mxu0 0.0
    %2777 = vmatprep.subr.mxu0 0.0
    %2778 = vmatpush1.msra.mxu0 0.0
    %2779 = vmatprep.subr.mxu0 0.0
    %2780 = vmatpush1.msra.mxu0 0.0
    %2781 = vmatprep.mubr.f32.mxu0 0.0
    %2782 = vmatmul.mubr.f32.gmra.mrb[0].mxu0 %v2715
    %v2783 = vpop.f32.mrb[0].mxu0
    %v2784 = vadd.f32 0.0, %v2783
    %v2785 = vpop.f32.mrb[0].mxu0
    %2786 = vdwg.mxu0
    %2787 = vrot.lane.b32.xlu0 %v2202, 56
    %v2788 = vpop.permute.xlu0 %2787
    %v2791 = vsel %vm377, %v2710, 0
    %2793 = vmatprep.subr.mxu0 0.0
    %2794 = vmatpush1.msra.mxu0 %v2788
    %2795 = vmatprep.subr.mxu0 0.0
    %2796 = vmatpush1.msra.mxu0 0.0
    %2797 = vmatprep.subr.mxu0 0.0
    %2798 = vmatpush1.msra.mxu0 0.0
    %2799 = vmatprep.subr.mxu0 0.0
    %2800 = vmatpush1.msra.mxu0 0.0
    %2801 = vmatprep.subr.mxu0 0.0
    %2802 = vmatpush1.msra.mxu0 0.0
    %2803 = vmatprep.subr.mxu0 0.0
    %2804 = vmatpush1.msra.mxu0 0.0
    %2805 = vmatprep.subr.mxu0 0.0
    %2806 = vmatpush1.msra.mxu0 0.0
    %2807 = vmatprep.subr.mxu0 0.0
    %2808 = vmatpush1.msra.mxu0 0.0
    %2809 = vmatprep.subr.mxu0 0.0
    %2810 = vmatpush1.msra.mxu0 0.0
    %2811 = vmatprep.subr.mxu0 0.0
    %2812 = vmatpush1.msra.mxu0 0.0
    %2813 = vmatprep.subr.mxu0 0.0
    %2814 = vmatpush1.msra.mxu0 0.0
    %2815 = vmatprep.subr.mxu0 0.0
    %2816 = vmatpush1.msra.mxu0 0.0
    %2817 = vmatprep.subr.mxu0 0.0
    %2818 = vmatpush1.msra.mxu0 0.0
    %2819 = vmatprep.subr.mxu0 0.0
    %2820 = vmatpush1.msra.mxu0 0.0
    %2821 = vmatprep.subr.mxu0 0.0
    %2822 = vmatpush1.msra.mxu0 0.0
    %2823 = vmatprep.subr.mxu0 0.0
    %2824 = vmatpush1.msra.mxu0 0.0
    %2825 = vmatprep.subr.mxu0 0.0
    %2826 = vmatpush1.msra.mxu0 0.0
    %2827 = vmatprep.subr.mxu0 0.0
    %2828 = vmatpush1.msra.mxu0 0.0
    %2829 = vmatprep.subr.mxu0 0.0
    %2830 = vmatpush1.msra.mxu0 0.0
    %2831 = vmatprep.subr.mxu0 0.0
    %2832 = vmatpush1.msra.mxu0 0.0
    %2833 = vmatprep.subr.mxu0 0.0
    %2834 = vmatpush1.msra.mxu0 0.0
    %2835 = vmatprep.subr.mxu0 0.0
    %2836 = vmatpush1.msra.mxu0 0.0
    %2837 = vmatprep.subr.mxu0 0.0
    %2838 = vmatpush1.msra.mxu0 0.0
    %2839 = vmatprep.subr.mxu0 0.0
    %2840 = vmatpush1.msra.mxu0 0.0
    %2841 = vmatprep.subr.mxu0 0.0
    %2842 = vmatpush1.msra.mxu0 0.0
    %2843 = vmatprep.subr.mxu0 0.0
    %2844 = vmatpush1.msra.mxu0 0.0
    %2845 = vmatprep.subr.mxu0 0.0
    %2846 = vmatpush1.msra.mxu0 0.0
    %2847 = vmatprep.subr.mxu0 0.0
    %2848 = vmatpush1.msra.mxu0 0.0
    %2849 = vmatprep.subr.mxu0 0.0
    %2850 = vmatpush1.msra.mxu0 0.0
    %2851 = vmatprep.subr.mxu0 0.0
    %2852 = vmatpush1.msra.mxu0 0.0
    %2853 = vmatprep.subr.mxu0 0.0
    %2854 = vmatpush1.msra.mxu0 0.0
    %2855 = vmatprep.subr.mxu0 0.0
    %2856 = vmatpush1.msra.mxu0 0.0
    %2857 = vmatprep.mubr.f32.mxu0 0.0
    %2858 = vmatmul.mubr.f32.gmra.mrb[0].mxu0 %v2791
    %v2859 = vpop.f32.mrb[0].mxu0
    %v2860 = vadd.f32 0.0, %v2859
    %v2861 = vpop.f32.mrb[0].mxu0
    %2862 = vdwg.mxu0
    %2863 = vrot.lane.b32.xlu0 %v2197, 112
    %v2864 = vpop.permute.xlu0 %2863
    %2865 = vrot.lane.b32.xlu0 %v2197, 80
    %v2866 = vpop.permute.xlu0 %2865
    %v2867 = vsel %vm377, %v2864, 0
    %v2869 = vsel %vm377, %v2866, 0
    %2871 = vmatprep.subr.mxu0 0.0
    %2872 = vmatpush1.xpose.msra.mxu0 %v2869
    %2873 = vmatprep.subr.mxu0 0.0
    %2874 = vmatpush1.xpose.msra.mxu0 0.0
    %2875 = vmatprep.subr.mxu0 0.0
    %2876 = vmatpush1.xpose.msra.mxu0 0.0
    %2877 = vmatprep.subr.mxu0 0.0
    %2878 = vmatpush1.xpose.msra.mxu0 0.0
    %2879 = vmatprep.subr.mxu0 0.0
    %2880 = vmatpush1.xpose.msra.mxu0 0.0
    %2881 = vmatprep.subr.mxu0 0.0
    %2882 = vmatpush1.xpose.msra.mxu0 0.0
    %2883 = vmatprep.subr.mxu0 0.0
    %2884 = vmatpush1.xpose.msra.mxu0 0.0
    %2885 = vmatprep.subr.mxu0 0.0
    %2886 = vmatpush1.xpose.msra.mxu0 0.0
    %2887 = vmatprep.subr.mxu0 0.0
    %2888 = vmatpush1.xpose.msra.mxu0 0.0
    %2889 = vmatprep.subr.mxu0 0.0
    %2890 = vmatpush1.xpose.msra.mxu0 0.0
    %2891 = vmatprep.subr.mxu0 0.0
    %2892 = vmatpush1.xpose.msra.mxu0 0.0
    %2893 = vmatprep.subr.mxu0 0.0
    %2894 = vmatpush1.xpose.msra.mxu0 0.0
    %2895 = vmatprep.subr.mxu0 0.0
    %2896 = vmatpush1.xpose.msra.mxu0 0.0
    %2897 = vmatprep.subr.mxu0 0.0
    %2898 = vmatpush1.xpose.msra.mxu0 0.0
    %2899 = vmatprep.subr.mxu0 0.0
    %2900 = vmatpush1.xpose.msra.mxu0 0.0
    %2901 = vmatprep.subr.mxu0 0.0
    %2902 = vmatpush1.xpose.msra.mxu0 0.0
    %2903 = vmatprep.subr.mxu0 0.0
    %2904 = vmatpush1.xpose.msra.mxu0 0.0
    %2905 = vmatprep.subr.mxu0 0.0
    %2906 = vmatpush1.xpose.msra.mxu0 0.0
    %2907 = vmatprep.subr.mxu0 0.0
    %2908 = vmatpush1.xpose.msra.mxu0 0.0
    %2909 = vmatprep.subr.mxu0 0.0
    %2910 = vmatpush1.xpose.msra.mxu0 0.0
    %2911 = vmatprep.subr.mxu0 0.0
    %2912 = vmatpush1.xpose.msra.mxu0 0.0
    %2913 = vmatprep.subr.mxu0 0.0
    %2914 = vmatpush1.xpose.msra.mxu0 0.0
    %2915 = vmatprep.subr.mxu0 0.0
    %2916 = vmatpush1.xpose.msra.mxu0 0.0
    %2917 = vmatprep.subr.mxu0 0.0
    %2918 = vmatpush1.xpose.msra.mxu0 0.0
    %2919 = vmatprep.subr.mxu0 0.0
    %2920 = vmatpush1.xpose.msra.mxu0 0.0
    %2921 = vmatprep.subr.mxu0 0.0
    %2922 = vmatpush1.xpose.msra.mxu0 0.0
    %2923 = vmatprep.subr.mxu0 0.0
    %2924 = vmatpush1.xpose.msra.mxu0 0.0
    %2925 = vmatprep.subr.mxu0 0.0
    %2926 = vmatpush1.xpose.msra.mxu0 0.0
    %2927 = vmatprep.subr.mxu0 0.0
    %2928 = vmatpush1.xpose.msra.mxu0 0.0
    %2929 = vmatprep.subr.mxu0 0.0
    %2930 = vmatpush1.xpose.msra.mxu0 0.0
    %2931 = vmatprep.subr.mxu0 0.0
    %2932 = vmatpush1.xpose.msra.mxu0 0.0
    %2933 = vmatprep.subr.mxu0 0.0
    %2934 = vmatpush1.xpose.msra.mxu0 0.0
    %2935 = vmatprep.mubr.f32.mxu0 0.0
    %2936 = vmatmul.mubr.f32.gmra.mrb[0].mxu0 %v2867
    %v2937 = vpop.f32.mrb[0].mxu0
    %v2938 = vadd.f32 %v367, %v2937
    %v2939 = vpop.f32.mrb[0].mxu0
    %2940 = vdwg.mxu0
    %2941 = vrot.lane.b32.xlu0 %v2202, 112
    %v2942 = vpop.permute.xlu0 %2941
    %2943 = vrot.lane.b32.xlu0 %v2202, 80
    %v2944 = vpop.permute.xlu0 %2943
    %v2945 = vsel %vm377, %v2942, 0
    %v2947 = vsel %vm377, %v2944, 0
    %2949 = vmatprep.subr.mxu0 0.0
    %2950 = vmatpush1.xpose.msra.mxu0 %v2947
    %2951 = vmatprep.subr.mxu0 0.0
    %2952 = vmatpush1.xpose.msra.mxu0 0.0
    %2953 = vmatprep.subr.mxu0 0.0
    %2954 = vmatpush1.xpose.msra.mxu0 0.0
    %2955 = vmatprep.subr.mxu0 0.0
    %2956 = vmatpush1.xpose.msra.mxu0 0.0
    %2957 = vmatprep.subr.mxu0 0.0
    %2958 = vmatpush1.xpose.msra.mxu0 0.0
    %2959 = vmatprep.subr.mxu0 0.0
    %2960 = vmatpush1.xpose.msra.mxu0 0.0
    %2961 = vmatprep.subr.mxu0 0.0
    %2962 = vmatpush1.xpose.msra.mxu0 0.0
    %2963 = vmatprep.subr.mxu0 0.0
    %2964 = vmatpush1.xpose.msra.mxu0 0.0
    %2965 = vmatprep.subr.mxu0 0.0
    %2966 = vmatpush1.xpose.msra.mxu0 0.0
    %2967 = vmatprep.subr.mxu0 0.0
    %2968 = vmatpush1.xpose.msra.mxu0 0.0
    %2969 = vmatprep.subr.mxu0 0.0
    %2970 = vmatpush1.xpose.msra.mxu0 0.0
    %2971 = vmatprep.subr.mxu0 0.0
    %2972 = vmatpush1.xpose.msra.mxu0 0.0
    %2973 = vmatprep.subr.mxu0 0.0
    %2974 = vmatpush1.xpose.msra.mxu0 0.0
    %2975 = vmatprep.subr.mxu0 0.0
    %2976 = vmatpush1.xpose.msra.mxu0 0.0
    %2977 = vmatprep.subr.mxu0 0.0
    %2978 = vmatpush1.xpose.msra.mxu0 0.0
    %2979 = vmatprep.subr.mxu0 0.0
    %2980 = vmatpush1.xpose.msra.mxu0 0.0
    %2981 = vmatprep.subr.mxu0 0.0
    %2982 = vmatpush1.xpose.msra.mxu0 0.0
    %2983 = vmatprep.subr.mxu0 0.0
    %2984 = vmatpush1.xpose.msra.mxu0 0.0
    %2985 = vmatprep.subr.mxu0 0.0
    %2986 = vmatpush1.xpose.msra.mxu0 0.0
    %2987 = vmatprep.subr.mxu0 0.0
    %2988 = vmatpush1.xpose.msra.mxu0 0.0
    %2989 = vmatprep.subr.mxu0 0.0
    %2990 = vmatpush1.xpose.msra.mxu0 0.0
    %2991 = vmatprep.subr.mxu0 0.0
    %2992 = vmatpush1.xpose.msra.mxu0 0.0
    %2993 = vmatprep.subr.mxu0 0.0
    %2994 = vmatpush1.xpose.msra.mxu0 0.0
    %2995 = vmatprep.subr.mxu0 0.0
    %2996 = vmatpush1.xpose.msra.mxu0 0.0
    %2997 = vmatprep.subr.mxu0 0.0
    %2998 = vmatpush1.xpose.msra.mxu0 0.0
    %2999 = vmatprep.subr.mxu0 0.0
    %3000 = vmatpush1.xpose.msra.mxu0 0.0
    %3001 = vmatprep.subr.mxu0 0.0
    %3002 = vmatpush1.xpose.msra.mxu0 0.0
    %3003 = vmatprep.subr.mxu0 0.0
    %3004 = vmatpush1.xpose.msra.mxu0 0.0
    %3005 = vmatprep.subr.mxu0 0.0
    %3006 = vmatpush1.xpose.msra.mxu0 0.0
    %3007 = vmatprep.subr.mxu0 0.0
    %3008 = vmatpush1.xpose.msra.mxu0 0.0
    %3009 = vmatprep.subr.mxu0 0.0
    %3010 = vmatpush1.xpose.msra.mxu0 0.0
    %3011 = vmatprep.subr.mxu0 0.0
    %3012 = vmatpush1.xpose.msra.mxu0 0.0
    %3013 = vmatprep.mubr.f32.mxu0 0.0
    %3014 = vmatmul.mubr.f32.gmra.mrb[0].mxu0 %v2945
    %v3015 = vpop.f32.mrb[0].mxu0
    %v3016 = vadd.f32 %v371, %v3015
    %v3017 = vpop.f32.mrb[0].mxu0
    %3018 = vdwg.mxu0
    %v3019 = vsel %vm377, %v2938, -inf
    %3020 = vmax.xlane.f32.xlu0 %v3019
    %v3021 = vpop.xlane.xlu0 %3020
    %v3022 = vsel %vm377, %v3016, -inf
    %3023 = vmax.xlane.f32.xlu0 %v3022
    %v3024 = vpop.xlane.xlu0 %3023
    %v3025 = vsub.f32 %v2938, %v3021
    %v3026 = vsub.f32 %v3016, %v3024
    %v3027 = vmul.f32 %v3025, 1.442695
    %v3028 = vpow.pop %v3027
    %v3029 = vmul.f32 %v3026, 1.442695
    %v3030 = vpow.pop %v3029
    %v3031 = vsel %vm377, %v3028, 0.0
    %3032 = vadd.xlane.f32.xlu0 %v3031
    %v3033 = vpop.xlane.xlu0 %3032
    %v3034 = vsel %vm377, %v3030, 0.0
    %3035 = vadd.xlane.f32.xlu0 %v3034
    %v3036 = vpop.xlane.xlu0 %3035
    %v3037 = vrcp.pop %v3033
    %v3038 = vrcp.pop %v3036
    %v3039 = vmul.f32 %v3028, %v3037
    %v3040 = vmul.f32 %v3030, %v3038
    %3041 = vrot.lane.b32.xlu0 %v2197, 48
    %v3042 = vpop.permute.xlu0 %3041
    %v3045 = vsel %vm377, %v3039, 0
    %3047 = vmatprep.subr.mxu0 0.0
    %3048 = vmatpush1.msra.mxu0 %v3042
    %3049 = vmatprep.subr.mxu0 0.0
    %3050 = vmatpush1.msra.mxu0 0.0
    %3051 = vmatprep.subr.mxu0 0.0
    %3052 = vmatpush1.msra.mxu0 0.0
    %3053 = vmatprep.subr.mxu0 0.0
    %3054 = vmatpush1.msra.mxu0 0.0
    %3055 = vmatprep.subr.mxu0 0.0
    %3056 = vmatpush1.msra.mxu0 0.0
    %3057 = vmatprep.subr.mxu0 0.0
    %3058 = vmatpush1.msra.mxu0 0.0
    %3059 = vmatprep.subr.mxu0 0.0
    %3060 = vmatpush1.msra.mxu0 0.0
    %3061 = vmatprep.subr.mxu0 0.0
    %3062 = vmatpush1.msra.mxu0 0.0
    %3063 = vmatprep.subr.mxu0 0.0
    %3064 = vmatpush1.msra.mxu0 0.0
    %3065 = vmatprep.subr.mxu0 0.0
    %3066 = vmatpush1.msra.mxu0 0.0
    %3067 = vmatprep.subr.mxu0 0.0
    %3068 = vmatpush1.msra.mxu0 0.0
    %3069 = vmatprep.subr.mxu0 0.0
    %3070 = vmatpush1.msra.mxu0 0.0
    %3071 = vmatprep.subr.mxu0 0.0
    %3072 = vmatpush1.msra.mxu0 0.0
    %3073 = vmatprep.subr.mxu0 0.0
    %3074 = vmatpush1.msra.mxu0 0.0
    %3075 = vmatprep.subr.mxu0 0.0
    %3076 = vmatpush1.msra.mxu0 0.0
    %3077 = vmatprep.subr.mxu0 0.0
    %3078 = vmatpush1.msra.mxu0 0.0
    %3079 = vmatprep.subr.mxu0 0.0
    %3080 = vmatpush1.msra.mxu0 0.0
    %3081 = vmatprep.subr.mxu0 0.0
    %3082 = vmatpush1.msra.mxu0 0.0
    %3083 = vmatprep.subr.mxu0 0.0
    %3084 = vmatpush1.msra.mxu0 0.0
    %3085 = vmatprep.subr.mxu0 0.0
    %3086 = vmatpush1.msra.mxu0 0.0
    %3087 = vmatprep.subr.mxu0 0.0
    %3088 = vmatpush1.msra.mxu0 0.0
    %3089 = vmatprep.subr.mxu0 0.0
    %3090 = vmatpush1.msra.mxu0 0.0
    %3091 = vmatprep.subr.mxu0 0.0
    %3092 = vmatpush1.msra.mxu0 0.0
    %3093 = vmatprep.subr.mxu0 0.0
    %3094 = vmatpush1.msra.mxu0 0.0
    %3095 = vmatprep.subr.mxu0 0.0
    %3096 = vmatpush1.msra.mxu0 0.0
    %3097 = vmatprep.subr.mxu0 0.0
    %3098 = vmatpush1.msra.mxu0 0.0
    %3099 = vmatprep.subr.mxu0 0.0
    %3100 = vmatpush1.msra.mxu0 0.0
    %3101 = vmatprep.subr.mxu0 0.0
    %3102 = vmatpush1.msra.mxu0 0.0
    %3103 = vmatprep.subr.mxu0 0.0
    %3104 = vmatpush1.msra.mxu0 0.0
    %3105 = vmatprep.subr.mxu0 0.0
    %3106 = vmatpush1.msra.mxu0 0.0
    %3107 = vmatprep.subr.mxu0 0.0
    %3108 = vmatpush1.msra.mxu0 0.0
    %3109 = vmatprep.subr.mxu0 0.0
    %3110 = vmatpush1.msra.mxu0 0.0
    %3111 = vmatprep.mubr.f32.mxu0 0.0
    %3112 = vmatmul.mubr.f32.gmra.mrb[0].mxu0 %v3045
    %v3113 = vpop.f32.mrb[0].mxu0
    %v3114 = vadd.f32 0.0, %v3113
    %v3115 = vpop.f32.mrb[0].mxu0
    %3116 = vdwg.mxu0
    %3117 = vrot.lane.b32.xlu0 %v2202, 48
    %v3118 = vpop.permute.xlu0 %3117
    %v3121 = vsel %vm377, %v3040, 0
    %3123 = vmatprep.subr.mxu0 0.0
    %3124 = vmatpush1.msra.mxu0 %v3118
    %3125 = vmatprep.subr.mxu0 0.0
    %3126 = vmatpush1.msra.mxu0 0.0
    %3127 = vmatprep.subr.mxu0 0.0
    %3128 = vmatpush1.msra.mxu0 0.0
    %3129 = vmatprep.subr.mxu0 0.0
    %3130 = vmatpush1.msra.mxu0 0.0
    %3131 = vmatprep.subr.mxu0 0.0
    %3132 = vmatpush1.msra.mxu0 0.0
    %3133 = vmatprep.subr.mxu0 0.0
    %3134 = vmatpush1.msra.mxu0 0.0
    %3135 = vmatprep.subr.mxu0 0.0
    %3136 = vmatpush1.msra.mxu0 0.0
    %3137 = vmatprep.subr.mxu0 0.0
    %3138 = vmatpush1.msra.mxu0 0.0
    %3139 = vmatprep.subr.mxu0 0.0
    %3140 = vmatpush1.msra.mxu0 0.0
    %3141 = vmatprep.subr.mxu0 0.0
    %3142 = vmatpush1.msra.mxu0 0.0
    %3143 = vmatprep.subr.mxu0 0.0
    %3144 = vmatpush1.msra.mxu0 0.0
    %3145 = vmatprep.subr.mxu0 0.0
    %3146 = vmatpush1.msra.mxu0 0.0
    %3147 = vmatprep.subr.mxu0 0.0
    %3148 = vmatpush1.msra.mxu0 0.0
    %3149 = vmatprep.subr.mxu0 0.0
    %3150 = vmatpush1.msra.mxu0 0.0
    %3151 = vmatprep.subr.mxu0 0.0
    %3152 = vmatpush1.msra.mxu0 0.0
    %3153 = vmatprep.subr.mxu0 0.0
    %3154 = vmatpush1.msra.mxu0 0.0
    %3155 = vmatprep.subr.mxu0 0.0
    %3156 = vmatpush1.msra.mxu0 0.0
    %3157 = vmatprep.subr.mxu0 0.0
    %3158 = vmatpush1.msra.mxu0 0.0
    %3159 = vmatprep.subr.mxu0 0.0
    %3160 = vmatpush1.msra.mxu0 0.0
    %3161 = vmatprep.subr.mxu0 0.0
    %3162 = vmatpush1.msra.mxu0 0.0
    %3163 = vmatprep.subr.mxu0 0.0
    %3164 = vmatpush1.msra.mxu0 0.0
    %3165 = vmatprep.subr.mxu0 0.0
    %3166 = vmatpush1.msra.mxu0 0.0
    %3167 = vmatprep.subr.mxu0 0.0
    %3168 = vmatpush1.msra.mxu0 0.0
    %3169 = vmatprep.subr.mxu0 0.0
    %3170 = vmatpush1.msra.mxu0 0.0
    %3171 = vmatprep.subr.mxu0 0.0
    %3172 = vmatpush1.msra.mxu0 0.0
    %3173 = vmatprep.subr.mxu0 0.0
    %3174 = vmatpush1.msra.mxu0 0.0
    %3175 = vmatprep.subr.mxu0 0.0
    %3176 = vmatpush1.msra.mxu0 0.0
    %3177 = vmatprep.subr.mxu0 0.0
    %3178 = vmatpush1.msra.mxu0 0.0
    %3179 = vmatprep.subr.mxu0 0.0
    %3180 = vmatpush1.msra.mxu0 0.0
    %3181 = vmatprep.subr.mxu0 0.0
    %3182 = vmatpush1.msra.mxu0 0.0
    %3183 = vmatprep.subr.mxu0 0.0
    %3184 = vmatpush1.msra.mxu0 0.0
    %3185 = vmatprep.subr.mxu0 0.0
    %3186 = vmatpush1.msra.mxu0 0.0
    %3187 = vmatprep.mubr.f32.mxu0 0.0
    %3188 = vmatmul.mubr.f32.gmra.mrb[0].mxu0 %v3121
    %v3189 = vpop.f32.mrb[0].mxu0
    %v3190 = vadd.f32 0.0, %v3189
    %v3191 = vpop.f32.mrb[0].mxu0
    %3192 = vdwg.mxu0
    %3193 = vrot.lane.b32.xlu0 %v2197, 104
    %v3194 = vpop.permute.xlu0 %3193
    %3195 = vrot.lane.b32.xlu0 %v2197, 72
    %v3196 = vpop.permute.xlu0 %3195
    %v3197 = vsel %vm377, %v3194, 0
    %v3199 = vsel %vm377, %v3196, 0
    %3201 = vmatprep.subr.mxu0 0.0
    %3202 = vmatpush1.xpose.msra.mxu0 %v3199
    %3203 = vmatprep.subr.mxu0 0.0
    %3204 = vmatpush1.xpose.msra.mxu0 0.0
    %3205 = vmatprep.subr.mxu0 0.0
    %3206 = vmatpush1.xpose.msra.mxu0 0.0
    %3207 = vmatprep.subr.mxu0 0.0
    %3208 = vmatpush1.xpose.msra.mxu0 0.0
    %3209 = vmatprep.subr.mxu0 0.0
    %3210 = vmatpush1.xpose.msra.mxu0 0.0
    %3211 = vmatprep.subr.mxu0 0.0
    %3212 = vmatpush1.xpose.msra.mxu0 0.0
    %3213 = vmatprep.subr.mxu0 0.0
    %3214 = vmatpush1.xpose.msra.mxu0 0.0
    %3215 = vmatprep.subr.mxu0 0.0
    %3216 = vmatpush1.xpose.msra.mxu0 0.0
    %3217 = vmatprep.subr.mxu0 0.0
    %3218 = vmatpush1.xpose.msra.mxu0 0.0
    %3219 = vmatprep.subr.mxu0 0.0
    %3220 = vmatpush1.xpose.msra.mxu0 0.0
    %3221 = vmatprep.subr.mxu0 0.0
    %3222 = vmatpush1.xpose.msra.mxu0 0.0
    %3223 = vmatprep.subr.mxu0 0.0
    %3224 = vmatpush1.xpose.msra.mxu0 0.0
    %3225 = vmatprep.subr.mxu0 0.0
    %3226 = vmatpush1.xpose.msra.mxu0 0.0
    %3227 = vmatprep.subr.mxu0 0.0
    %3228 = vmatpush1.xpose.msra.mxu0 0.0
    %3229 = vmatprep.subr.mxu0 0.0
    %3230 = vmatpush1.xpose.msra.mxu0 0.0
    %3231 = vmatprep.subr.mxu0 0.0
    %3232 = vmatpush1.xpose.msra.mxu0 0.0
    %3233 = vmatprep.subr.mxu0 0.0
    %3234 = vmatpush1.xpose.msra.mxu0 0.0
    %3235 = vmatprep.subr.mxu0 0.0
    %3236 = vmatpush1.xpose.msra.mxu0 0.0
    %3237 = vmatprep.subr.mxu0 0.0
    %3238 = vmatpush1.xpose.msra.mxu0 0.0
    %3239 = vmatprep.subr.mxu0 0.0
    %3240 = vmatpush1.xpose.msra.mxu0 0.0
    %3241 = vmatprep.subr.mxu0 0.0
    %3242 = vmatpush1.xpose.msra.mxu0 0.0
    %3243 = vmatprep.subr.mxu0 0.0
    %3244 = vmatpush1.xpose.msra.mxu0 0.0
    %3245 = vmatprep.subr.mxu0 0.0
    %3246 = vmatpush1.xpose.msra.mxu0 0.0
    %3247 = vmatprep.subr.mxu0 0.0
    %3248 = vmatpush1.xpose.msra.mxu0 0.0
    %3249 = vmatprep.subr.mxu0 0.0
    %3250 = vmatpush1.xpose.msra.mxu0 0.0
    %3251 = vmatprep.subr.mxu0 0.0
    %3252 = vmatpush1.xpose.msra.mxu0 0.0
    %3253 = vmatprep.subr.mxu0 0.0
    %3254 = vmatpush1.xpose.msra.mxu0 0.0
    %3255 = vmatprep.subr.mxu0 0.0
    %3256 = vmatpush1.xpose.msra.mxu0 0.0
    %3257 = vmatprep.subr.mxu0 0.0
    %3258 = vmatpush1.xpose.msra.mxu0 0.0
    %3259 = vmatprep.subr.mxu0 0.0
    %3260 = vmatpush1.xpose.msra.mxu0 0.0
    %3261 = vmatprep.subr.mxu0 0.0
    %3262 = vmatpush1.xpose.msra.mxu0 0.0
    %3263 = vmatprep.subr.mxu0 0.0
    %3264 = vmatpush1.xpose.msra.mxu0 0.0
    %3265 = vmatprep.mubr.f32.mxu0 0.0
    %3266 = vmatmul.mubr.f32.gmra.mrb[0].mxu0 %v3197
    %v3267 = vpop.f32.mrb[0].mxu0
    %v3268 = vadd.f32 %v367, %v3267
    %v3269 = vpop.f32.mrb[0].mxu0
    %3270 = vdwg.mxu0
    %3271 = vrot.lane.b32.xlu0 %v2202, 104
    %v3272 = vpop.permute.xlu0 %3271
    %3273 = vrot.lane.b32.xlu0 %v2202, 72
    %v3274 = vpop.permute.xlu0 %3273
    %v3275 = vsel %vm377, %v3272, 0
    %v3277 = vsel %vm377, %v3274, 0
    %3279 = vmatprep.subr.mxu0 0.0
    %3280 = vmatpush1.xpose.msra.mxu0 %v3277
    %3281 = vmatprep.subr.mxu0 0.0
    %3282 = vmatpush1.xpose.msra.mxu0 0.0
    %3283 = vmatprep.subr.mxu0 0.0
    %3284 = vmatpush1.xpose.msra.mxu0 0.0
    %3285 = vmatprep.subr.mxu0 0.0
    %3286 = vmatpush1.xpose.msra.mxu0 0.0
    %3287 = vmatprep.subr.mxu0 0.0
    %3288 = vmatpush1.xpose.msra.mxu0 0.0
    %3289 = vmatprep.subr.mxu0 0.0
    %3290 = vmatpush1.xpose.msra.mxu0 0.0
    %3291 = vmatprep.subr.mxu0 0.0
    %3292 = vmatpush1.xpose.msra.mxu0 0.0
    %3293 = vmatprep.subr.mxu0 0.0
    %3294 = vmatpush1.xpose.msra.mxu0 0.0
    %3295 = vmatprep.subr.mxu0 0.0
    %3296 = vmatpush1.xpose.msra.mxu0 0.0
    %3297 = vmatprep.subr.mxu0 0.0
    %3298 = vmatpush1.xpose.msra.mxu0 0.0
    %3299 = vmatprep.subr.mxu0 0.0
    %3300 = vmatpush1.xpose.msra.mxu0 0.0
    %3301 = vmatprep.subr.mxu0 0.0
    %3302 = vmatpush1.xpose.msra.mxu0 0.0
    %3303 = vmatprep.subr.mxu0 0.0
    %3304 = vmatpush1.xpose.msra.mxu0 0.0
    %3305 = vmatprep.subr.mxu0 0.0
    %3306 = vmatpush1.xpose.msra.mxu0 0.0
    %3307 = vmatprep.subr.mxu0 0.0
    %3308 = vmatpush1.xpose.msra.mxu0 0.0
    %3309 = vmatprep.subr.mxu0 0.0
    %3310 = vmatpush1.xpose.msra.mxu0 0.0
    %3311 = vmatprep.subr.mxu0 0.0
    %3312 = vmatpush1.xpose.msra.mxu0 0.0
    %3313 = vmatprep.subr.mxu0 0.0
    %3314 = vmatpush1.xpose.msra.mxu0 0.0
    %3315 = vmatprep.subr.mxu0 0.0
    %3316 = vmatpush1.xpose.msra.mxu0 0.0
    %3317 = vmatprep.subr.mxu0 0.0
    %3318 = vmatpush1.xpose.msra.mxu0 0.0
    %3319 = vmatprep.subr.mxu0 0.0
    %3320 = vmatpush1.xpose.msra.mxu0 0.0
    %3321 = vmatprep.subr.mxu0 0.0
    %3322 = vmatpush1.xpose.msra.mxu0 0.0
    %3323 = vmatprep.subr.mxu0 0.0
    %3324 = vmatpush1.xpose.msra.mxu0 0.0
    %3325 = vmatprep.subr.mxu0 0.0
    %3326 = vmatpush1.xpose.msra.mxu0 0.0
    %3327 = vmatprep.subr.mxu0 0.0
    %3328 = vmatpush1.xpose.msra.mxu0 0.0
    %3329 = vmatprep.subr.mxu0 0.0
    %3330 = vmatpush1.xpose.msra.mxu0 0.0
    %3331 = vmatprep.subr.mxu0 0.0
    %3332 = vmatpush1.xpose.msra.mxu0 0.0
    %3333 = vmatprep.subr.mxu0 0.0
    %3334 = vmatpush1.xpose.msra.mxu0 0.0
    %3335 = vmatprep.subr.mxu0 0.0
    %3336 = vmatpush1.xpose.msra.mxu0 0.0
    %3337 = vmatprep.subr.mxu0 0.0
    %3338 = vmatpush1.xpose.msra.mxu0 0.0
    %3339 = vmatprep.subr.mxu0 0.0
    %3340 = vmatpush1.xpose.msra.mxu0 0.0
    %3341 = vmatprep.subr.mxu0 0.0
    %3342 = vmatpush1.xpose.msra.mxu0 0.0
    %3343 = vmatprep.mubr.f32.mxu0 0.0
    %3344 = vmatmul.mubr.f32.gmra.mrb[0].mxu0 %v3275
    %v3345 = vpop.f32.mrb[0].mxu0
    %v3346 = vadd.f32 %v371, %v3345
    %v3347 = vpop.f32.mrb[0].mxu0
    %3348 = vdwg.mxu0
    %v3349 = vsel %vm377, %v3268, -inf
    %3350 = vmax.xlane.f32.xlu0 %v3349
    %v3351 = vpop.xlane.xlu0 %3350
    %v3352 = vsel %vm377, %v3346, -inf
    %3353 = vmax.xlane.f32.xlu0 %v3352
    %v3354 = vpop.xlane.xlu0 %3353
    %v3355 = vsub.f32 %v3268, %v3351
    %v3356 = vsub.f32 %v3346, %v3354
    %v3357 = vmul.f32 %v3355, 1.442695
    %v3358 = vpow.pop %v3357
    %v3359 = vmul.f32 %v3356, 1.442695
    %v3360 = vpow.pop %v3359
    %v3361 = vsel %vm377, %v3358, 0.0
    %3362 = vadd.xlane.f32.xlu0 %v3361
    %v3363 = vpop.xlane.xlu0 %3362
    %v3364 = vsel %vm377, %v3360, 0.0
    %3365 = vadd.xlane.f32.xlu0 %v3364
    %v3366 = vpop.xlane.xlu0 %3365
    %v3367 = vrcp.pop %v3363
    %v3368 = vrcp.pop %v3366
    %v3369 = vmul.f32 %v3358, %v3367
    %v3370 = vmul.f32 %v3360, %v3368
    %3371 = vrot.lane.b32.xlu0 %v2197, 40
    %v3372 = vpop.permute.xlu0 %3371
    %v3375 = vsel %vm377, %v3369, 0
    %3377 = vmatprep.subr.mxu0 0.0
    %3378 = vmatpush1.msra.mxu0 %v3372
    %3379 = vmatprep.subr.mxu0 0.0
    %3380 = vmatpush1.msra.mxu0 0.0
    %3381 = vmatprep.subr.mxu0 0.0
    %3382 = vmatpush1.msra.mxu0 0.0
    %3383 = vmatprep.subr.mxu0 0.0
    %3384 = vmatpush1.msra.mxu0 0.0
    %3385 = vmatprep.subr.mxu0 0.0
    %3386 = vmatpush1.msra.mxu0 0.0
    %3387 = vmatprep.subr.mxu0 0.0
    %3388 = vmatpush1.msra.mxu0 0.0
    %3389 = vmatprep.subr.mxu0 0.0
    %3390 = vmatpush1.msra.mxu0 0.0
    %3391 = vmatprep.subr.mxu0 0.0
    %3392 = vmatpush1.msra.mxu0 0.0
    %3393 = vmatprep.subr.mxu0 0.0
    %3394 = vmatpush1.msra.mxu0 0.0
    %3395 = vmatprep.subr.mxu0 0.0
    %3396 = vmatpush1.msra.mxu0 0.0
    %3397 = vmatprep.subr.mxu0 0.0
    %3398 = vmatpush1.msra.mxu0 0.0
    %3399 = vmatprep.subr.mxu0 0.0
    %3400 = vmatpush1.msra.mxu0 0.0
    %3401 = vmatprep.subr.mxu0 0.0
    %3402 = vmatpush1.msra.mxu0 0.0
    %3403 = vmatprep.subr.mxu0 0.0
    %3404 = vmatpush1.msra.mxu0 0.0
    %3405 = vmatprep.subr.mxu0 0.0
    %3406 = vmatpush1.msra.mxu0 0.0
    %3407 = vmatprep.subr.mxu0 0.0
    %3408 = vmatpush1.msra.mxu0 0.0
    %3409 = vmatprep.subr.mxu0 0.0
    %3410 = vmatpush1.msra.mxu0 0.0
    %3411 = vmatprep.subr.mxu0 0.0
    %3412 = vmatpush1.msra.mxu0 0.0
    %3413 = vmatprep.subr.mxu0 0.0
    %3414 = vmatpush1.msra.mxu0 0.0
    %3415 = vmatprep.subr.mxu0 0.0
    %3416 = vmatpush1.msra.mxu0 0.0
    %3417 = vmatprep.subr.mxu0 0.0
    %3418 = vmatpush1.msra.mxu0 0.0
    %3419 = vmatprep.subr.mxu0 0.0
    %3420 = vmatpush1.msra.mxu0 0.0
    %3421 = vmatprep.subr.mxu0 0.0
    %3422 = vmatpush1.msra.mxu0 0.0
    %3423 = vmatprep.subr.mxu0 0.0
    %3424 = vmatpush1.msra.mxu0 0.0
    %3425 = vmatprep.subr.mxu0 0.0
    %3426 = vmatpush1.msra.mxu0 0.0
    %3427 = vmatprep.subr.mxu0 0.0
    %3428 = vmatpush1.msra.mxu0 0.0
    %3429 = vmatprep.subr.mxu0 0.0
    %3430 = vmatpush1.msra.mxu0 0.0
    %3431 = vmatprep.subr.mxu0 0.0
    %3432 = vmatpush1.msra.mxu0 0.0
    %3433 = vmatprep.subr.mxu0 0.0
    %3434 = vmatpush1.msra.mxu0 0.0
    %3435 = vmatprep.subr.mxu0 0.0
    %3436 = vmatpush1.msra.mxu0 0.0
    %3437 = vmatprep.subr.mxu0 0.0
    %3438 = vmatpush1.msra.mxu0 0.0
    %3439 = vmatprep.subr.mxu0 0.0
    %3440 = vmatpush1.msra.mxu0 0.0
    %3441 = vmatprep.mubr.f32.mxu0 0.0
    %3442 = vmatmul.mubr.f32.gmra.mrb[0].mxu0 %v3375
    %v3443 = vpop.f32.mrb[0].mxu0
    %v3444 = vadd.f32 0.0, %v3443
    %v3445 = vpop.f32.mrb[0].mxu0
    %3446 = vdwg.mxu0
    %3447 = vrot.lane.b32.xlu0 %v2202, 40
    %v3448 = vpop.permute.xlu0 %3447
    %v3451 = vsel %vm377, %v3370, 0
    %3453 = vmatprep.subr.mxu0 0.0
    %3454 = vmatpush1.msra.mxu0 %v3448
    %3455 = vmatprep.subr.mxu0 0.0
    %3456 = vmatpush1.msra.mxu0 0.0
    %3457 = vmatprep.subr.mxu0 0.0
    %3458 = vmatpush1.msra.mxu0 0.0
    %3459 = vmatprep.subr.mxu0 0.0
    %3460 = vmatpush1.msra.mxu0 0.0
    %3461 = vmatprep.subr.mxu0 0.0
    %3462 = vmatpush1.msra.mxu0 0.0
    %3463 = vmatprep.subr.mxu0 0.0
    %3464 = vmatpush1.msra.mxu0 0.0
    %3465 = vmatprep.subr.mxu0 0.0
    %3466 = vmatpush1.msra.mxu0 0.0
    %3467 = vmatprep.subr.mxu0 0.0
    %3468 = vmatpush1.msra.mxu0 0.0
    %3469 = vmatprep.subr.mxu0 0.0
    %3470 = vmatpush1.msra.mxu0 0.0
    %3471 = vmatprep.subr.mxu0 0.0
    %3472 = vmatpush1.msra.mxu0 0.0
    %3473 = vmatprep.subr.mxu0 0.0
    %3474 = vmatpush1.msra.mxu0 0.0
    %3475 = vmatprep.subr.mxu0 0.0
    %3476 = vmatpush1.msra.mxu0 0.0
    %3477 = vmatprep.subr.mxu0 0.0
    %3478 = vmatpush1.msra.mxu0 0.0
    %3479 = vmatprep.subr.mxu0 0.0
    %3480 = vmatpush1.msra.mxu0 0.0
    %3481 = vmatprep.subr.mxu0 0.0
    %3482 = vmatpush1.msra.mxu0 0.0
    %3483 = vmatprep.subr.mxu0 0.0
    %3484 = vmatpush1.msra.mxu0 0.0
    %3485 = vmatprep.subr.mxu0 0.0
    %3486 = vmatpush1.msra.mxu0 0.0
    %3487 = vmatprep.subr.mxu0 0.0
    %3488 = vmatpush1.msra.mxu0 0.0
    %3489 = vmatprep.subr.mxu0 0.0
    %3490 = vmatpush1.msra.mxu0 0.0
    %3491 = vmatprep.subr.mxu0 0.0
    %3492 = vmatpush1.msra.mxu0 0.0
    %3493 = vmatprep.subr.mxu0 0.0
    %3494 = vmatpush1.msra.mxu0 0.0
    %3495 = vmatprep.subr.mxu0 0.0
    %3496 = vmatpush1.msra.mxu0 0.0
    %3497 = vmatprep.subr.mxu0 0.0
    %3498 = vmatpush1.msra.mxu0 0.0
    %3499 = vmatprep.subr.mxu0 0.0
    %3500 = vmatpush1.msra.mxu0 0.0
    %3501 = vmatprep.subr.mxu0 0.0
    %3502 = vmatpush1.msra.mxu0 0.0
    %3503 = vmatprep.subr.mxu0 0.0
    %3504 = vmatpush1.msra.mxu0 0.0
    %3505 = vmatprep.subr.mxu0 0.0
    %3506 = vmatpush1.msra.mxu0 0.0
    %3507 = vmatprep.subr.mxu0 0.0
    %3508 = vmatpush1.msra.mxu0 0.0
    %3509 = vmatprep.subr.mxu0 0.0
    %3510 = vmatpush1.msra.mxu0 0.0
    %3511 = vmatprep.subr.mxu0 0.0
    %3512 = vmatpush1.msra.mxu0 0.0
    %3513 = vmatprep.subr.mxu0 0.0
    %3514 = vmatpush1.msra.mxu0 0.0
    %3515 = vmatprep.subr.mxu0 0.0
    %3516 = vmatpush1.msra.mxu0 0.0
    %3517 = vmatprep.mubr.f32.mxu0 0.0
    %3518 = vmatmul.mubr.f32.gmra.mrb[0].mxu0 %v3451
    %v3519 = vpop.f32.mrb[0].mxu0
    %v3520 = vadd.f32 0.0, %v3519
    %v3521 = vpop.f32.mrb[0].mxu0
    %3522 = vdwg.mxu0
    %3525 = vrot.lane.b32.xlu0 %v2784, 8
    %v3526 = vpop.permute.xlu0 %3525
    %3527 = vrot.lane.b32.xlu0 %v2860, 8
    %v3528 = vpop.permute.xlu0 %3527
    %3533 = vrot.lane.b32.xlu0 %v3114, 16
    %v3534 = vpop.permute.xlu0 %3533
    %3535 = vrot.lane.b32.xlu0 %v3190, 16
    %v3536 = vpop.permute.xlu0 %3535
    %3541 = vrot.lane.b32.xlu0 %v3444, 24
    %v3542 = vpop.permute.xlu0 %3541
    %3543 = vrot.lane.b32.xlu0 %v3520, 24
    %v3544 = vpop.permute.xlu0 %3543
    %v3547 = vsel %vm377, %v2454, %v3526
    %v3548 = vsel %vm377, %v2530, %v3528
    %v3549 = vsel %vm1719, %v3547, %v3534
    %v3550 = vsel %vm1719, %v3548, %v3536
    %v3551 = vsel %vm1722, %v3549, %v3542
    %v3552 = vsel %vm1722, %v3550, %v3544
    %v3553 = vld [vmem:[#allocation4 + $0x11] sm:$0x1]
    %v3554 = vlaneseq
    %v3555 = vshrl.u32 %v3554, 7
    %v3556 = vsub.s32 0, %v3555
    %v3557 = vrot.slane %v3553, %v3556
    %v3559 = vsel %vm185, %v3551, 0
    %v3562 = vsel %vm185, %v3552, 0
    %3564 = vmatprep.subr.mxu0 0.0
    %3565 = vmatpush1.msra.mxu0 %v2103
    %3566 = vmatprep.subr.mxu0 0.0
    %3567 = vmatpush1.msra.mxu0 %v2104
    %3568 = vmatprep.subr.mxu0 0.0
    %3569 = vmatpush1.msra.mxu0 %v2105
    %3570 = vmatprep.subr.mxu0 0.0
    %3571 = vmatpush1.msra.mxu0 %v2106
    %3572 = vmatprep.subr.mxu0 0.0
    %3573 = vmatpush1.msra.mxu0 0.0
    %3574 = vmatprep.subr.mxu0 0.0
    %3575 = vmatpush1.msra.mxu0 0.0
    %3576 = vmatprep.subr.mxu0 0.0
    %3577 = vmatpush1.msra.mxu0 0.0
    %3578 = vmatprep.subr.mxu0 0.0
    %3579 = vmatpush1.msra.mxu0 0.0
    %3580 = vmatprep.subr.mxu0 0.0
    %3581 = vmatpush1.msra.mxu0 0.0
    %3582 = vmatprep.subr.mxu0 0.0
    %3583 = vmatpush1.msra.mxu0 0.0
    %3584 = vmatprep.subr.mxu0 0.0
    %3585 = vmatpush1.msra.mxu0 0.0
    %3586 = vmatprep.subr.mxu0 0.0
    %3587 = vmatpush1.msra.mxu0 0.0
    %3588 = vmatprep.subr.mxu0 0.0
    %3589 = vmatpush1.msra.mxu0 0.0
    %3590 = vmatprep.subr.mxu0 0.0
    %3591 = vmatpush1.msra.mxu0 0.0
    %3592 = vmatprep.subr.mxu0 0.0
    %3593 = vmatpush1.msra.mxu0 0.0
    %3594 = vmatprep.subr.mxu0 0.0
    %3595 = vmatpush1.msra.mxu0 0.0
    %3596 = vmatprep.subr.mxu0 0.0
    %3597 = vmatpush1.msra.mxu0 0.0
    %3598 = vmatprep.subr.mxu0 0.0
    %3599 = vmatpush1.msra.mxu0 0.0
    %3600 = vmatprep.subr.mxu0 0.0
    %3601 = vmatpush1.msra.mxu0 0.0
    %3602 = vmatprep.subr.mxu0 0.0
    %3603 = vmatpush1.msra.mxu0 0.0
    %3604 = vmatprep.subr.mxu0 0.0
    %3605 = vmatpush1.msra.mxu0 0.0
    %3606 = vmatprep.subr.mxu0 0.0
    %3607 = vmatpush1.msra.mxu0 0.0
    %3608 = vmatprep.subr.mxu0 0.0
    %3609 = vmatpush1.msra.mxu0 0.0
    %3610 = vmatprep.subr.mxu0 0.0
    %3611 = vmatpush1.msra.mxu0 0.0
    %3612 = vmatprep.subr.mxu0 0.0
    %3613 = vmatpush1.msra.mxu0 0.0
    %3614 = vmatprep.subr.mxu0 0.0
    %3615 = vmatpush1.msra.mxu0 0.0
    %3616 = vmatprep.subr.mxu0 0.0
    %3617 = vmatpush1.msra.mxu0 0.0
    %3618 = vmatprep.subr.mxu0 0.0
    %3619 = vmatpush1.msra.mxu0 0.0
    %3620 = vmatprep.subr.mxu0 0.0
    %3621 = vmatpush1.msra.mxu0 0.0
    %3622 = vmatprep.subr.mxu0 0.0
    %3623 = vmatpush1.msra.mxu0 0.0
    %3624 = vmatprep.subr.mxu0 0.0
    %3625 = vmatpush1.msra.mxu0 0.0
    %3626 = vmatprep.subr.mxu0 0.0
    %3627 = vmatpush1.msra.mxu0 0.0
    %3628 = vmatprep.mubr.f32.mxu0 0.0
    %3629 = vmatmul.mubr.f32.gmra.mrb[0].mxu0 %v3559
    %v3630 = vpop.f32.mrb[0].mxu0
    %v3631 = vadd.f32 %v3557, %v3630
    %v3632 = vpop.f32.mrb[0].mxu0
    %3633 = vmatprep.mubr.f32.mxu0 0.0
    %3634 = vmatmul.mubr.f32.gmra.mrb[0].mxu0 %v3562
    %v3635 = vpop.f32.mrb[0].mxu0
    %v3636 = vadd.f32 %v3557, %v3635
    %v3637 = vpop.f32.mrb[0].mxu0
    %3638 = vdwg.mxu0
    %v3639 = vadd.f32 %v2096, %v3631
    %v3640 = vadd.f32 %v2097, %v3636
    %v3641 = vld [vmem:[#allocation4 + $0x12] sm:$0x1]
    %v3642 = vld [vmem:[#allocation4 + $0x13] sm:$0x1]
    %v3643 = vsel %vm185, %v3639, 0.0
    %3644 = vadd.xlane.f32.xlu0 %v3643
    %v3645 = vpop.xlane.xlu0 %3644
    %v3646 = vsel %vm185, %v3640, 0.0
    %3647 = vadd.xlane.f32.xlu0 %v3646
    %v3648 = vpop.xlane.xlu0 %3647
    %v3649 = vmul.f32 %v3645, %v192
    %v3650 = vmul.f32 %v3648, %v192
    %v3651 = vmul.f32 %v3639, %v3639
    %v3652 = vmul.f32 %v3640, %v3640
    %v3653 = vsel %vm185, %v3651, 0.0
    %3654 = vadd.xlane.f32.xlu0 %v3653
    %v3655 = vpop.xlane.xlu0 %3654
    %v3656 = vsel %vm185, %v3652, 0.0
    %3657 = vadd.xlane.f32.xlu0 %v3656
    %v3658 = vpop.xlane.xlu0 %3657
    %v3659 = vmul.f32 %v3655, %v192
    %v3660 = vmul.f32 %v3658, %v192
    %v3661 = vmul.f32 %v3649, %v3649
    %v3662 = vmul.f32 %v3650, %v3650
    %v3663 = vsub.f32 %v3659, %v3661
    %v3664 = vsub.f32 %v3660, %v3662
    %v3665 = vmax.f32 %v3663, 0.0
    %v3666 = vmax.f32 %v3664, 0.0
    %v3667 = vsub.f32 %v3639, %v3649
    %v3668 = vsub.f32 %v3640, %v3650
    %v3669 = vadd.f32 %v3665, 1e-12
    %v3670 = vadd.f32 %v3666, 1e-12
    %v3671 = vrsqrt.pop %v3669
    %v3672 = vrsqrt.pop %v3670
    %v3673 = vmul.f32 %v3667, %v3671
    %v3674 = vmul.f32 %v3668, %v3672
    %v3675 = vlaneseq
    %v3676 = vshrl.u32 %v3675, 7
    %v3677 = vsub.s32 0, %v3676
    %v3678 = vrot.slane %v3641, %v3677
    %v3679 = vmul.f32 %v3673, %v3678
    %v3680 = vmul.f32 %v3674, %v3678
    %v3681 = vlaneseq
    %v3682 = vshrl.u32 %v3681, 7
    %v3683 = vsub.s32 0, %v3682
    %v3684 = vrot.slane %v3642, %v3683
    %v3685 = vadd.f32 %v3679, %v3684
    %v3686 = vadd.f32 %v3680, %v3684
    %v3687 = vld [vmem:[#allocation4 + $0x14] sm:$0x1]
    %v3688 = vlaneseq
    %v3689 = vshrl.u32 %v3688, 7
    %v3690 = vsub.s32 0, %v3689
    %v3691 = vrot.slane %v3687, %v3690
    %v3693 = vsel %vm185, %v3685, 0
    %v3696 = vsel %vm185, %v3686, 0
    %3698 = vmatprep.subr.mxu0 0.0
    %3699 = vmatpush1.msra.mxu0 %v2107
    %3700 = vmatprep.subr.mxu0 0.0
    %3701 = vmatpush1.msra.mxu0 %v2108
    %3702 = vmatprep.subr.mxu0 0.0
    %3703 = vmatpush1.msra.mxu0 %v2109
    %3704 = vmatprep.subr.mxu0 0.0
    %3705 = vmatpush1.msra.mxu0 %v2110
    %3706 = vmatprep.subr.mxu0 0.0
    %3707 = vmatpush1.msra.mxu0 0.0
    %3708 = vmatprep.subr.mxu0 0.0
    %3709 = vmatpush1.msra.mxu0 0.0
    %3710 = vmatprep.subr.mxu0 0.0
    %3711 = vmatpush1.msra.mxu0 0.0
    %3712 = vmatprep.subr.mxu0 0.0
    %3713 = vmatpush1.msra.mxu0 0.0
    %3714 = vmatprep.subr.mxu0 0.0
    %3715 = vmatpush1.msra.mxu0 0.0
    %3716 = vmatprep.subr.mxu0 0.0
    %3717 = vmatpush1.msra.mxu0 0.0
    %3718 = vmatprep.subr.mxu0 0.0
    %3719 = vmatpush1.msra.mxu0 0.0
    %3720 = vmatprep.subr.mxu0 0.0
    %3721 = vmatpush1.msra.mxu0 0.0
    %3722 = vmatprep.subr.mxu0 0.0
    %3723 = vmatpush1.msra.mxu0 0.0
    %3724 = vmatprep.subr.mxu0 0.0
    %3725 = vmatpush1.msra.mxu0 0.0
    %3726 = vmatprep.subr.mxu0 0.0
    %3727 = vmatpush1.msra.mxu0 0.0
    %3728 = vmatprep.subr.mxu0 0.0
    %3729 = vmatpush1.msra.mxu0 0.0
    %3730 = vmatprep.subr.mxu0 0.0
    %3731 = vmatpush1.msra.mxu0 0.0
    %3732 = vmatprep.subr.mxu0 0.0
    %3733 = vmatpush1.msra.mxu0 0.0
    %3734 = vmatprep.subr.mxu0 0.0
    %3735 = vmatpush1.msra.mxu0 0.0
    %3736 = vmatprep.subr.mxu0 0.0
    %3737 = vmatpush1.msra.mxu0 0.0
    %3738 = vmatprep.subr.mxu0 0.0
    %3739 = vmatpush1.msra.mxu0 0.0
    %3740 = vmatprep.subr.mxu0 0.0
    %3741 = vmatpush1.msra.mxu0 0.0
    %3742 = vmatprep.subr.mxu0 0.0
    %3743 = vmatpush1.msra.mxu0 0.0
    %3744 = vmatprep.subr.mxu0 0.0
    %3745 = vmatpush1.msra.mxu0 0.0
    %3746 = vmatprep.subr.mxu0 0.0
    %3747 = vmatpush1.msra.mxu0 0.0
    %3748 = vmatprep.subr.mxu0 0.0
    %3749 = vmatpush1.msra.mxu0 0.0
    %3750 = vmatprep.subr.mxu0 0.0
    %3751 = vmatpush1.msra.mxu0 0.0
    %3752 = vmatprep.subr.mxu0 0.0
    %3753 = vmatpush1.msra.mxu0 0.0
    %3754 = vmatprep.subr.mxu0 0.0
    %3755 = vmatpush1.msra.mxu0 0.0
    %3756 = vmatprep.subr.mxu0 0.0
    %3757 = vmatpush1.msra.mxu0 0.0
    %3758 = vmatprep.subr.mxu0 0.0
    %3759 = vmatpush1.msra.mxu0 0.0
    %3760 = vmatprep.subr.mxu0 0.0
    %3761 = vmatpush1.msra.mxu0 0.0
    %3762 = vmatprep.mubr.f32.mxu0 0.0
    %3763 = vmatmul.mubr.f32.gmra.mrb[0].mxu0 %v3693
    %v3764 = vpop.f32.mrb[0].mxu0
    %v3765 = vadd.f32 %v3691, %v3764
    %v3766 = vpop.f32.mrb[0].mxu0
    %3767 = vmatprep.mubr.f32.mxu0 0.0
    %3768 = vmatmul.mubr.f32.gmra.mrb[0].mxu0 %v3696
    %v3769 = vpop.f32.mrb[0].mxu0
    %v3770 = vadd.f32 %v3691, %v3769
    %v3771 = vpop.f32.mrb[0].mxu0
    %3772 = vdwg.mxu0
    %v3773 = vmul.f32 %v3765, %v3765
    %v3774 = vmul.f32 %v3770, %v3770
    %v3775 = vmul.f32 %v3765, %v3773
    %v3776 = vmul.f32 %v3770, %v3774
    %v3777 = vmul.f32 %v3775, 0.044715
    %v3778 = vmul.f32 %v3776, 0.044715
    %v3779 = vadd.f32 %v3765, %v3777
    %v3780 = vadd.f32 %v3770, %v3778
    %v3781 = vmul.f32 %v3779, 0.7978846
    %v3782 = vmul.f32 %v3780, 0.7978846
    %v3783 = vtanh.pop %v3781
    %v3784 = vtanh.pop %v3782
    %v3785 = vadd.f32 %v3783, 1.0
    %v3786 = vadd.f32 %v3784, 1.0
    %v3787 = vmul.f32 %v3785, 0.5
    %v3788 = vmul.f32 %v3786, 0.5
    %v3789 = vmul.f32 %v3765, %v3787
    %v3790 = vmul.f32 %v3770, %v3788
    %v3791 = vld [vmem:[#allocation4 + $0x15] sm:$0x1]
    %v3792 = vlaneseq
    %v3793 = vshrl.u32 %v3792, 7
    %v3794 = vsub.s32 0, %v3793
    %v3795 = vrot.slane %v3791, %v3794
    %v3797 = vsel %vm1968, %v3789, 0
    %v3800 = vsel %vm1968, %v3790, 0
    %3802 = vmatprep.subr.mxu0 0.0
    %3803 = vmatpush1.msra.mxu0 %v2111
    %3804 = vmatprep.subr.mxu0 0.0
    %3805 = vmatpush1.msra.mxu0 %v2112
    %3806 = vmatprep.subr.mxu0 0.0
    %3807 = vmatpush1.msra.mxu0 %v2113
    %3808 = vmatprep.subr.mxu0 0.0
    %3809 = vmatpush1.msra.mxu0 %v2114
    %3810 = vmatprep.subr.mxu0 0.0
    %3811 = vmatpush1.msra.mxu0 %v2115
    %3812 = vmatprep.subr.mxu0 0.0
    %3813 = vmatpush1.msra.mxu0 %v2116
    %3814 = vmatprep.subr.mxu0 0.0
    %3815 = vmatpush1.msra.mxu0 %v2117
    %3816 = vmatprep.subr.mxu0 0.0
    %3817 = vmatpush1.msra.mxu0 %v2118
    %3818 = vmatprep.subr.mxu0 0.0
    %3819 = vmatpush1.msra.mxu0 0.0
    %3820 = vmatprep.subr.mxu0 0.0
    %3821 = vmatpush1.msra.mxu0 0.0
    %3822 = vmatprep.subr.mxu0 0.0
    %3823 = vmatpush1.msra.mxu0 0.0
    %3824 = vmatprep.subr.mxu0 0.0
    %3825 = vmatpush1.msra.mxu0 0.0
    %3826 = vmatprep.subr.mxu0 0.0
    %3827 = vmatpush1.msra.mxu0 0.0
    %3828 = vmatprep.subr.mxu0 0.0
    %3829 = vmatpush1.msra.mxu0 0.0
    %3830 = vmatprep.subr.mxu0 0.0
    %3831 = vmatpush1.msra.mxu0 0.0
    %3832 = vmatprep.subr.mxu0 0.0
    %3833 = vmatpush1.msra.mxu0 0.0
    %3834 = vmatprep.subr.mxu0 0.0
    %3835 = vmatpush1.msra.mxu0 0.0
    %3836 = vmatprep.subr.mxu0 0.0
    %3837 = vmatpush1.msra.mxu0 0.0
    %3838 = vmatprep.subr.mxu0 0.0
    %3839 = vmatpush1.msra.mxu0 0.0
    %3840 = vmatprep.subr.mxu0 0.0
    %3841 = vmatpush1.msra.mxu0 0.0
    %3842 = vmatprep.subr.mxu0 0.0
    %3843 = vmatpush1.msra.mxu0 0.0
    %3844 = vmatprep.subr.mxu0 0.0
    %3845 = vmatpush1.msra.mxu0 0.0
    %3846 = vmatprep.subr.mxu0 0.0
    %3847 = vmatpush1.msra.mxu0 0.0
    %3848 = vmatprep.subr.mxu0 0.0
    %3849 = vmatpush1.msra.mxu0 0.0
    %3850 = vmatprep.subr.mxu0 0.0
    %3851 = vmatpush1.msra.mxu0 0.0
    %3852 = vmatprep.subr.mxu0 0.0
    %3853 = vmatpush1.msra.mxu0 0.0
    %3854 = vmatprep.subr.mxu0 0.0
    %3855 = vmatpush1.msra.mxu0 0.0
    %3856 = vmatprep.subr.mxu0 0.0
    %3857 = vmatpush1.msra.mxu0 0.0
    %3858 = vmatprep.subr.mxu0 0.0
    %3859 = vmatpush1.msra.mxu0 0.0
    %3860 = vmatprep.subr.mxu0 0.0
    %3861 = vmatpush1.msra.mxu0 0.0
    %3862 = vmatprep.subr.mxu0 0.0
    %3863 = vmatpush1.msra.mxu0 0.0
    %3864 = vmatprep.subr.mxu0 0.0
    %3865 = vmatpush1.msra.mxu0 0.0
    %3866 = vmatprep.mubr.f32.mxu0 0.0
    %3867 = vmatmul.mubr.f32.gmra.mrb[0].mxu0 %v3797
    %v3868 = vpop.f32.mrb[0].mxu0
    %v3869 = vadd.f32 %v3795, %v3868
    %v3870 = vpop.f32.mrb[0].mxu0
    %3871 = vmatprep.mubr.f32.mxu0 0.0
    %3872 = vmatmul.mubr.f32.gmra.mrb[0].mxu0 %v3800
    %v3873 = vpop.f32.mrb[0].mxu0
    %v3874 = vadd.f32 %v3795, %v3873
    %v3875 = vpop.f32.mrb[0].mxu0
    %3876 = vdwg.mxu0
    %v3877 = vadd.f32 %v3685, %v3869
    %v3878 = vadd.f32 %v3686, %v3874
    %v3879 = vld [vmem:[#allocation4 + $0x16] sm:$0x1]
    %v3880 = vld [vmem:[#allocation4 + $0x17] sm:$0x1]
    %v3881 = vsel %vm185, %v3877, 0.0
    %3882 = vadd.xlane.f32.xlu0 %v3881
    %v3883 = vpop.xlane.xlu0 %3882
    %v3884 = vsel %vm185, %v3878, 0.0
    %3885 = vadd.xlane.f32.xlu0 %v3884
    %v3886 = vpop.xlane.xlu0 %3885
    %v3887 = vmul.f32 %v3883, %v192
    %v3888 = vmul.f32 %v3886, %v192
    %v3889 = vmul.f32 %v3877, %v3877
    %v3890 = vmul.f32 %v3878, %v3878
    %v3891 = vsel %vm185, %v3889, 0.0
    %3892 = vadd.xlane.f32.xlu0 %v3891
    %v3893 = vpop.xlane.xlu0 %3892
    %v3894 = vsel %vm185, %v3890, 0.0
    %3895 = vadd.xlane.f32.xlu0 %v3894
    %v3896 = vpop.xlane.xlu0 %3895
    %v3897 = vmul.f32 %v3893, %v192
    %v3898 = vmul.f32 %v3896, %v192
    %v3899 = vmul.f32 %v3887, %v3887
    %v3900 = vmul.f32 %v3888, %v3888
    %v3901 = vsub.f32 %v3897, %v3899
    %v3902 = vsub.f32 %v3898, %v3900
    %v3903 = vmax.f32 %v3901, 0.0
    %v3904 = vmax.f32 %v3902, 0.0
    %v3905 = vsub.f32 %v3877, %v3887
    %v3906 = vsub.f32 %v3878, %v3888
    %v3907 = vadd.f32 %v3903, 1e-12
    %v3908 = vadd.f32 %v3904, 1e-12
    %v3909 = vrsqrt.pop %v3907
    %v3910 = vrsqrt.pop %v3908
    %v3911 = vmul.f32 %v3905, %v3909
    %v3912 = vmul.f32 %v3906, %v3910
    %v3913 = vlaneseq
    %v3914 = vshrl.u32 %v3913, 7
    %v3915 = vsub.s32 0, %v3914
    %v3916 = vrot.slane %v3879, %v3915
    %v3917 = vmul.f32 %v3911, %v3916
    %v3918 = vmul.f32 %v3912, %v3916
    %v3919 = vlaneseq
    %v3920 = vshrl.u32 %v3919, 7
    %v3921 = vsub.s32 0, %v3920
    %v3922 = vrot.slane %v3880, %v3921
    %v3923 = vadd.f32 %v3917, %v3922
    %v3924 = vadd.f32 %v3918, %v3922
    %v3925 = vld [vmem:[#allocation4 + $0x30] sm:$0xff]
    %v3926 = vld [vmem:[#allocation4 + $0x38] sm:$0xff]
    %v3927 = vld [vmem:[#allocation4 + $0x40] sm:$0xff]
    %v3928 = vld [vmem:[#allocation4 + $0x48] sm:$0xff]
    %v3929 = vld [vmem:[#allocation4 + $0x2] sm:$0x1]
    %v3930 = vlaneseq
    %v3931 = vshrl.u32 %v3930, 7
    %v3932 = vsub.s32 0, %v3931
    %v3933 = vrot.slane %v3929, %v3932
    %v3936 = vrot.slane %v3924, 7
    %vm3937 = vcmask 1041409
    %v3938 = vsel %vm3937, %v3936, %v3923
    %v3939 = vsel %vm185, %v3938, 0
    %3941 = vmatprep.subr.mxu0 0.0
    %3942 = vmatpush1.msra.mxu0 %v3925
    %3943 = vmatprep.subr.mxu0 0.0
    %3944 = vmatpush1.msra.mxu0 %v3926
    %3945 = vmatprep.subr.mxu0 0.0
    %3946 = vmatpush1.msra.mxu0 %v3927
    %3947 = vmatprep.subr.mxu0 0.0
    %3948 = vmatpush1.msra.mxu0 %v3928
    %3949 = vmatprep.subr.mxu0 0.0
    %3950 = vmatpush1.msra.mxu0 0.0
    %3951 = vmatprep.subr.mxu0 0.0
    %3952 = vmatpush1.msra.mxu0 0.0
    %3953 = vmatprep.subr.mxu0 0.0
    %3954 = vmatpush1.msra.mxu0 0.0
    %3955 = vmatprep.subr.mxu0 0.0
    %3956 = vmatpush1.msra.mxu0 0.0
    %3957 = vmatprep.subr.mxu0 0.0
    %3958 = vmatpush1.msra.mxu0 0.0
    %3959 = vmatprep.subr.mxu0 0.0
    %3960 = vmatpush1.msra.mxu0 0.0
    %3961 = vmatprep.subr.mxu0 0.0
    %3962 = vmatpush1.msra.mxu0 0.0
    %3963 = vmatprep.subr.mxu0 0.0
    %3964 = vmatpush1.msra.mxu0 0.0
    %3965 = vmatprep.subr.mxu0 0.0
    %3966 = vmatpush1.msra.mxu0 0.0
    %3967 = vmatprep.subr.mxu0 0.0
    %3968 = vmatpush1.msra.mxu0 0.0
    %3969 = vmatprep.subr.mxu0 0.0
    %3970 = vmatpush1.msra.mxu0 0.0
    %3971 = vmatprep.subr.mxu0 0.0
    %3972 = vmatpush1.msra.mxu0 0.0
    %3973 = vmatprep.subr.mxu0 0.0
    %3974 = vmatpush1.msra.mxu0 0.0
    %3975 = vmatprep.subr.mxu0 0.0
    %3976 = vmatpush1.msra.mxu0 0.0
    %3977 = vmatprep.subr.mxu0 0.0
    %3978 = vmatpush1.msra.mxu0 0.0
    %3979 = vmatprep.subr.mxu0 0.0
    %3980 = vmatpush1.msra.mxu0 0.0
    %3981 = vmatprep.subr.mxu0 0.0
    %3982 = vmatpush1.msra.mxu0 0.0
    %3983 = vmatprep.subr.mxu0 0.0
    %3984 = vmatpush1.msra.mxu0 0.0
    %3985 = vmatprep.subr.mxu0 0.0
    %3986 = vmatpush1.msra.mxu0 0.0
    %3987 = vmatprep.subr.mxu0 0.0
    %3988 = vmatpush1.msra.mxu0 0.0
    %3989 = vmatprep.subr.mxu0 0.0
    %3990 = vmatpush1.msra.mxu0 0.0
    %3991 = vmatprep.subr.mxu0 0.0
    %3992 = vmatpush1.msra.mxu0 0.0
    %3993 = vmatprep.subr.mxu0 0.0
    %3994 = vmatpush1.msra.mxu0 0.0
    %3995 = vmatprep.subr.mxu0 0.0
    %3996 = vmatpush1.msra.mxu0 0.0
    %3997 = vmatprep.subr.mxu0 0.0
    %3998 = vmatpush1.msra.mxu0 0.0
    %3999 = vmatprep.subr.mxu0 0.0
    %4000 = vmatpush1.msra.mxu0 0.0
    %4001 = vmatprep.subr.mxu0 0.0
    %4002 = vmatpush1.msra.mxu0 0.0
    %4003 = vmatprep.subr.mxu0 0.0
    %4004 = vmatpush1.msra.mxu0 0.0
    %4005 = vmatprep.mubr.f32.mxu0 0.0
    %4006 = vmatmul.mubr.f32.gmra.mrb[0].mxu0 %v3939
    %v4007 = vpop.f32.mrb[0].mxu0
    %v4008 = vadd.f32 %v3933, %v4007
    %v4009 = vpop.f32.mrb[0].mxu0
    %4010 = vdwg.mxu0
    %v4011 = vtanh.pop %v4008
    %v4012 = vld [vmem:[#allocation4 + $0x3] sm:$0x1]
    %v4013 = vlaneseq
    %v4014 = vshrl.u32 %v4013, 7
    %v4015 = vsub.s32 0, %v4014
    %v4016 = vrot.slane %v4012, %v4015
    %4021 = vrot.lane.b32.xlu0 %v3925, 96
    %v4022 = vpop.permute.xlu0 %4021
    %4023 = vrot.lane.b32.xlu0 %v3926, 96
    %v4024 = vpop.permute.xlu0 %4023
    %4025 = vrot.lane.b32.xlu0 %v3927, 96
    %v4026 = vpop.permute.xlu0 %4025
    %4027 = vrot.lane.b32.xlu0 %v3928, 96
    %v4028 = vpop.permute.xlu0 %4027
    %v4034 = vsel %vm185, %v4011, 0
    %4036 = vmatprep.subr.mxu0 0.0
    %4037 = vmatpush1.msra.mxu0 %v4022
    %4038 = vmatprep.subr.mxu0 0.0
    %4039 = vmatpush1.msra.mxu0 %v4024
    %4040 = vmatprep.subr.mxu0 0.0
    %4041 = vmatpush1.msra.mxu0 %v4026
    %4042 = vmatprep.subr.mxu0 0.0
    %4043 = vmatpush1.msra.mxu0 %v4028
    %4044 = vmatprep.subr.mxu0 0.0
    %4045 = vmatpush1.msra.mxu0 0.0
    %4046 = vmatprep.subr.mxu0 0.0
    %4047 = vmatpush1.msra.mxu0 0.0
    %4048 = vmatprep.subr.mxu0 0.0
    %4049 = vmatpush1.msra.mxu0 0.0
    %4050 = vmatprep.subr.mxu0 0.0
    %4051 = vmatpush1.msra.mxu0 0.0
    %4052 = vmatprep.subr.mxu0 0.0
    %4053 = vmatpush1.msra.mxu0 0.0
    %4054 = vmatprep.subr.mxu0 0.0
    %4055 = vmatpush1.msra.mxu0 0.0
    %4056 = vmatprep.subr.mxu0 0.0
    %4057 = vmatpush1.msra.mxu0 0.0
    %4058 = vmatprep.subr.mxu0 0.0
    %4059 = vmatpush1.msra.mxu0 0.0
    %4060 = vmatprep.subr.mxu0 0.0
    %4061 = vmatpush1.msra.mxu0 0.0
    %4062 = vmatprep.subr.mxu0 0.0
    %4063 = vmatpush1.msra.mxu0 0.0
    %4064 = vmatprep.subr.mxu0 0.0
    %4065 = vmatpush1.msra.mxu0 0.0
    %4066 = vmatprep.subr.mxu0 0.0
    %4067 = vmatpush1.msra.mxu0 0.0
    %4068 = vmatprep.subr.mxu0 0.0
    %4069 = vmatpush1.msra.mxu0 0.0
    %4070 = vmatprep.subr.mxu0 0.0
    %4071 = vmatpush1.msra.mxu0 0.0
    %4072 = vmatprep.subr.mxu0 0.0
    %4073 = vmatpush1.msra.mxu0 0.0
    %4074 = vmatprep.subr.mxu0 0.0
    %4075 = vmatpush1.msra.mxu0 0.0
    %4076 = vmatprep.subr.mxu0 0.0
    %4077 = vmatpush1.msra.mxu0 0.0
    %4078 = vmatprep.subr.mxu0 0.0
    %4079 = vmatpush1.msra.mxu0 0.0
    %4080 = vmatprep.subr.mxu0 0.0
    %4081 = vmatpush1.msra.mxu0 0.0
    %4082 = vmatprep.subr.mxu0 0.0
    %4083 = vmatpush1.msra.mxu0 0.0
    %4084 = vmatprep.subr.mxu0 0.0
    %4085 = vmatpush1.msra.mxu0 0.0
    %4086 = vmatprep.subr.mxu0 0.0
    %4087 = vmatpush1.msra.mxu0 0.0
    %4088 = vmatprep.subr.mxu0 0.0
    %4089 = vmatpush1.msra.mxu0 0.0
    %4090 = vmatprep.subr.mxu0 0.0
    %4091 = vmatpush1.msra.mxu0 0.0
    %4092 = vmatprep.subr.mxu0 0.0
    %4093 = vmatpush1.msra.mxu0 0.0
    %4094 = vmatprep.subr.mxu0 0.0
    %4095 = vmatpush1.msra.mxu0 0.0
    %4096 = vmatprep.subr.mxu0 0.0
    %4097 = vmatpush1.msra.mxu0 0.0
    %4098 = vmatprep.subr.mxu0 0.0
    %4099 = vmatpush1.msra.mxu0 0.0
    %4100 = vmatprep.mubr.f32.mxu0 0.0
    %4101 = vmatmul.mubr.f32.gmra.mrb[0].mxu0 %v4034
    %v4102 = vpop.f32.mrb[0].mxu0
    %v4103 = vadd.f32 %v4016, %v4102
    %v4104 = vpop.f32.mrb[0].mxu0
    %4105 = vdwg.mxu0
    %4107 = vrot.lane.b32.xlu0 %v4103, 32
    %v4108 = vpop.permute.xlu0 %4107
    %v4110 = vsel %vm185, %v4011, %v4108
    %vm4111 = vcmask 443392
    %4112 = vst.msk [vmem:[%s4] sm:$0x3] %vm4111, %v4110
    // Predicated region
    $region26: #{style_encoder_forward.1} parent=1 // pred_check
      _
    $region27: #{style_encoder_forward.1} parent=1 // pred_check_branch
      %4114 = sbr.rel (0) target = $region29
    $region28: #{style_encoder_forward.1} parent=1 // pred_region
      _
    $region29: #{style_encoder_forward.1} parent=1 // pred_fallthru
      _
    // Predicated region
    $region30: #{style_encoder_forward.1} parent=1 // pred_check
      _
    $region31: #{style_encoder_forward.1} parent=1 // pred_check_branch
      %4116 = sbr.rel (0) target = $region33
    $region32: #{style_encoder_forward.1} parent=1 // pred_region
      _
    $region33: #{style_encoder_forward.1} parent=1 // pred_fallthru
      _
    %4117 = vsyncpa [#allocation3], 1
    %4118 = vsyncpa [#allocation5], 1

</llo_original>
